<compile_context>
chip_gen: v6e
topology: v6e:2x2x1
jax: 0.10.0
libtpu: 0.0.40
codegen_flags: <defaults>
</compile_context>

<pallas_src>
import functools
import random

import numpy as np
import jax
import jax.numpy as jnp
from jax import lax
from jax.experimental import pallas as pl
from jax.experimental.pallas import tpu as pltpu

_HIGHEST = lax.Precision.HIGHEST


def _fcm_decompose_kernel(x_ref, sel_ref, u_ref, v_ref, *, m, eps, num_iters):
    """One batch element per grid step; x stays resident in VMEM for the whole chain.

    Internal (lane-dense, transposed) layout:
      x : (M, N)    sel : (R, M) one-hot    u_t : (R, M)    v_t : (R, N)
    """
    x = x_ref[0].astype(jnp.float32)                                 # (M, N)
    sel = sel_ref[...].astype(jnp.float32)                           # (R, M)

    # ---- init: gather the R seeded centroid rows of x via one MXU selection matmul.
    v_t = lax.dot_general(sel, x, (((1,), (0,)), ((), ())),          # (R, M)@(M, N)
                          precision=_HIGHEST,
                          preferred_element_type=jnp.float32)        # (R, N)
    # (The reference also computes init memberships, but the first solver step
    #  recomputes them from the same v0, so that redundant work is skipped —
    #  the returned (u, v) are identical.)

    # ---- hoisted row norms |x_m|^2 as a lane-dense (1, M) row (ones-row matmul). ----
    ones_row = jnp.ones((1, x.shape[1]), jnp.float32)
    x2 = lax.dot_general(ones_row, x * x, (((1,), (1,)), ((), ())),
                         precision=_HIGHEST,
                         preferred_element_type=jnp.float32)         # (1, M)

    p = 1.0 / (1.0 - m)

    for _ in range(num_iters):                    # static unroll (num_iters is tiny)
        # -------- memberships: u[r, m] ∝ (d[r, m] + eps)^(1/(1-m)) --------
        xv = lax.dot_general(v_t, x, (((1,), (1,)), ((), ())),       # contract N <-> N
                             precision=_HIGHEST,
                             preferred_element_type=jnp.float32)     # (R, M)
        v2 = jnp.sum(v_t * v_t, axis=1, keepdims=True)               # (R, 1)
        d = jnp.maximum(x2 - 2.0 * xv + v2, 0.0)                     # (R, M)
        if m == 2.0:
            u_raw = 1.0 / (d + eps)
        else:
            u_raw = jnp.exp(p * jnp.log(d + eps))
        u_t = (u_raw + eps) / (jnp.sum(u_raw, axis=0, keepdims=True) + eps)   # (R, M)

        # -------- centers: v = t(x) @ normalize_M(u^m)  (no transpose of x) --------
        w = u_t * u_t if m == 2.0 else jnp.exp(m * jnp.log(u_t))
        w = (w + eps) / (jnp.sum(w, axis=1, keepdims=True) + eps)    # (R, M)
        v_t = lax.dot_general(w, x, (((1,), (0,)), ((), ())),        # contract M <-> M
                              precision=_HIGHEST,
                              preferred_element_type=jnp.float32)    # (R, N)

    u_ref[0] = u_t.astype(u_ref.dtype)
    v_ref[0] = v_t.astype(v_ref.dtype)


def fcm_init_forward(x, rank, *, m=2.0, eps=1e-16, num_iters=1, seed=42, interpret=False):
    """FCMInit.forward: returns (u, v) with u (B, M, R) and v (B, N, R)."""
    B, M, N = x.shape
    R = int(rank)
    assert num_iters >= 1

    # Host-side centroid index draw — identical sequence to the module's
    # `random.seed(seed); random.sample(range(M), R)`.
    inds = tuple(random.Random(seed).sample(range(M), R))

    # One-hot selection matrix (R, M): row r picks x row inds[r]. Built on host,
    # passed as a tiny batch-independent input (4*R*M bytes).
    sel_np = np.zeros((R, M), np.float32)
    sel_np[np.arange(R), np.asarray(inds)] = 1.0
    sel = jnp.asarray(sel_np)

    kernel = functools.partial(_fcm_decompose_kernel, m=float(m),
                               eps=float(eps), num_iters=int(num_iters))

    bytes_x = 4 * M * N
    flops_per_b = (2 * R * M * N + 3 * M * N
                   + num_iters * (4 * M * N * R + 16 * M * R + 2 * N * R))
    cost = pl.CostEstimate(
        flops=int(B * flops_per_b),
        transcendentals=0 if m == 2.0 else int(B * num_iters * 2 * M * R),
        bytes_accessed=int(B * (bytes_x + 4 * R * (M + N)) + 4 * R * M))

    u_t, v_t = pl.pallas_call(
        kernel,
        out_shape=(jax.ShapeDtypeStruct((B, R, M), x.dtype),
                   jax.ShapeDtypeStruct((B, R, N), x.dtype)),
        grid=(B,),
        in_specs=[pl.BlockSpec((1, M, N), lambda b: (b, 0, 0)),
                  pl.BlockSpec((R, M), lambda b: (0, 0))],
        out_specs=(pl.BlockSpec((1, R, M), lambda b: (b, 0, 0)),
                   pl.BlockSpec((1, R, N), lambda b: (b, 0, 0))),
        compiler_params=pltpu.CompilerParams(
            dimension_semantics=("parallel",),
            vmem_limit_bytes=max(32 * 1024 * 1024,
                                 min(4 * bytes_x + (4 << 20), 48 * 1024 * 1024))),
        cost_estimate=cost,
        interpret=interpret,
    )(x, sel)

    # Kernel outputs are lane-dense (rank on sublanes); swap the tiny factor
    # matrices back to the module's (B, M, R) / (B, N, R) layout.
    return jnp.swapaxes(u_t, -1, -2), jnp.swapaxes(v_t, -1, -2)


def _reference_fcm_init(x, rank, *, m=2.0, eps=1e-16, num_iters=1, seed=42):
    """Pure-JAX mirror of the PyTorch FCM.decompose math (original layout)."""
    inds = jnp.asarray(random.Random(seed).sample(range(x.shape[1]), rank))
    v = jnp.swapaxes(x[:, inds, :], -1, -2)                          # (B, N, R)

    def memberships(x, v):
        x2 = jnp.sum(x * x, axis=2, keepdims=True)                   # (B, M, 1)
        xv = jnp.einsum("bmn,bnr->bmr", x, v, precision=_HIGHEST)
        v2 = jnp.sum(v * v, axis=1, keepdims=True)                   # (B, 1, R)
        d = jnp.maximum(x2 - 2.0 * xv + v2, 0.0)
        u = (d + eps) ** (1.0 / (1.0 - m))
        return (u + eps) / (jnp.sum(u, axis=2, keepdims=True) + eps)

    def centers(x, u):
        w = u ** m
        w = (w + eps) / (jnp.sum(w, axis=1, keepdims=True) + eps)
        return jnp.einsum("bmn,bmr->bnr", x, w, precision=_HIGHEST)  # t(x) @ w

    u = memberships(x, v)      # init memberships (discarded: solver recomputes from v0)
    for _ in range(num_iters):
        u = memberships(x, v)
        v = centers(x, u)
    return u, v


if __name__ == "__main__":
    B, M, N, R = 2, 128, 256, 8
    x = jax.random.normal(jax.random.PRNGKey(0), (B, M, N), dtype=jnp.float32)

    fwd = jax.jit(functools.partial(fcm_init_forward, rank=R))
    u, v = fwd(x)
    u = jax.block_until_ready(u)
    v = jax.block_until_ready(v)

    u_ref, v_ref = _reference_fcm_init(x, rank=R)
    assert u.shape == (B, M, R) and v.shape == (B, N, R)
    assert jnp.allclose(u, u_ref, rtol=2e-3, atol=2e-4), (
        "u mismatch: max abs err %e" % float(jnp.max(jnp.abs(u - u_ref))))
    assert jnp.allclose(v, v_ref, rtol=2e-3, atol=2e-4), (
        "v mismatch: max abs err %e" % float(jnp.max(jnp.abs(v - v_ref))))

    print("KERNEL_OK")
</pallas_src>

<mosaic_0001>
module attributes {stable_mosaic.version = 11 : i64} {
  func.func @_fcm_decompose_kernel(%arg0: i32, %arg1: memref<1x128x256xf32, #tpu.memory_space<vmem>>, %arg2: memref<8x128xf32, #tpu.memory_space<vmem>>, %arg3: memref<1x8x128xf32, #tpu.memory_space<vmem>>, %arg4: memref<1x8x256xf32, #tpu.memory_space<vmem>>) attributes {dimension_semantics = [#tpu.dimension_semantics<parallel>], iteration_bounds = array<i64: 2>, scalar_prefetch = 0 : i64, scratch_operands = 0 : i64, tpu.core_type = #tpu.core_type<tc>, window_params = [{transform_indices = @transform_0, window_bounds = array<i64: 1, 128, 256>}, {pipeline_mode = #tpu.pipeline_mode<synchronous>, transform_indices = @transform_1, window_bounds = array<i64: 8, 128>}, {transform_indices = @transform_2, window_bounds = array<i64: 1, 8, 128>}, {transform_indices = @transform_3, window_bounds = array<i64: 1, 8, 256>}]} {
    %c0 = arith.constant 0 : index
    %c0_0 = arith.constant 0 : index
    %c0_1 = arith.constant 0 : index
    %0 = vector.load %arg1[%c0, %c0_0, %c0_1] : memref<1x128x256xf32, #tpu.memory_space<vmem>>, vector<1x128x256xf32>
    %1 = vector.shape_cast %0 : vector<1x128x256xf32> to vector<128x256xf32>
    %c0_2 = arith.constant 0 : index
    %c0_3 = arith.constant 0 : index
    %2 = vector.load %arg2[%c0_2, %c0_3] : memref<8x128xf32, #tpu.memory_space<vmem>>, vector<8x128xf32>
    %cst = arith.constant dense<0.000000e+00> : vector<8x256xf32>
    %3 = tpu.matmul %2, %1, %cst {dimension_numbers = #tpu.dot_dimension_numbers<[1], [0], [0], [1], [0, 0, 1, 1], [], []>, precision = #tpu.contract_precision<fp32>} : vector<8x128xf32>, vector<128x256xf32>, vector<8x256xf32> -> vector<8x256xf32>
    %cst_4 = arith.constant 1.000000e+00 : f32
    %4 = vector.broadcast %cst_4 : f32 to vector<1x256xf32>
    %5 = arith.mulf %1, %1 : vector<128x256xf32>
    %cst_5 = arith.constant dense<0.000000e+00> : vector<1x128xf32>
    %6 = tpu.matmul %4, %5, %cst_5 {dimension_numbers = #tpu.dot_dimension_numbers<[1], [1], [0], [0], [0, 0, 1, 0], [], []>, precision = #tpu.contract_precision<fp32>} : vector<1x256xf32>, vector<128x256xf32>, vector<1x128xf32> -> vector<1x128xf32>
    %cst_6 = arith.constant dense<0.000000e+00> : vector<8x128xf32>
    %7 = tpu.matmul %3, %1, %cst_6 {dimension_numbers = #tpu.dot_dimension_numbers<[1], [1], [0], [0], [0, 0, 1, 0], [], []>, precision = #tpu.contract_precision<fp32>} : vector<8x256xf32>, vector<128x256xf32>, vector<8x128xf32> -> vector<8x128xf32>
    %8 = arith.mulf %3, %3 : vector<8x256xf32>
    %cst_7 = arith.constant dense<0.000000e+00> : vector<8xf32>
    %9 = vector.multi_reduction <add>, %8, %cst_7 [1] : vector<8x256xf32> to vector<8xf32>
    %10 = vector.shape_cast %9 : vector<8xf32> to vector<8x1xf32>
    %cst_8 = arith.constant 2.000000e+00 : f32
    %11 = vector.broadcast %cst_8 : f32 to vector<8x128xf32>
    %12 = arith.mulf %11, %7 : vector<8x128xf32>
    %13 = vector.broadcast %6 : vector<1x128xf32> to vector<8x128xf32>
    %14 = arith.subf %13, %12 : vector<8x128xf32>
    %15 = vector.broadcast %10 : vector<8x1xf32> to vector<8x128xf32>
    %16 = arith.addf %14, %15 : vector<8x128xf32>
    %cst_9 = arith.constant 0.000000e+00 : f32
    %17 = vector.broadcast %cst_9 : f32 to vector<8x128xf32>
    %18 = arith.maximumf %16, %17 : vector<8x128xf32>
    %cst_10 = arith.constant 1.000000e-16 : f32
    %19 = vector.broadcast %cst_10 : f32 to vector<8x128xf32>
    %20 = arith.addf %18, %19 : vector<8x128xf32>
    %cst_11 = arith.constant 1.000000e+00 : f32
    %21 = vector.broadcast %cst_11 : f32 to vector<8x128xf32>
    %22 = arith.divf %21, %20 : vector<8x128xf32>
    %cst_12 = arith.constant 1.000000e-16 : f32
    %23 = vector.broadcast %cst_12 : f32 to vector<8x128xf32>
    %24 = arith.addf %22, %23 : vector<8x128xf32>
    %cst_13 = arith.constant dense<0.000000e+00> : vector<128xf32>
    %25 = vector.multi_reduction <add>, %22, %cst_13 [0] : vector<8x128xf32> to vector<128xf32>
    %26 = vector.shape_cast %25 : vector<128xf32> to vector<1x128xf32>
    %cst_14 = arith.constant 1.000000e-16 : f32
    %27 = vector.broadcast %cst_14 : f32 to vector<1x128xf32>
    %28 = arith.addf %26, %27 : vector<1x128xf32>
    %29 = vector.broadcast %28 : vector<1x128xf32> to vector<8x128xf32>
    %30 = arith.divf %24, %29 : vector<8x128xf32>
    %31 = arith.mulf %30, %30 : vector<8x128xf32>
    %cst_15 = arith.constant 1.000000e-16 : f32
    %32 = vector.broadcast %cst_15 : f32 to vector<8x128xf32>
    %33 = arith.addf %31, %32 : vector<8x128xf32>
    %cst_16 = arith.constant dense<0.000000e+00> : vector<8xf32>
    %34 = vector.multi_reduction <add>, %31, %cst_16 [1] : vector<8x128xf32> to vector<8xf32>
    %35 = vector.shape_cast %34 : vector<8xf32> to vector<8x1xf32>
    %cst_17 = arith.constant 1.000000e-16 : f32
    %36 = vector.broadcast %cst_17 : f32 to vector<8x1xf32>
    %37 = arith.addf %35, %36 : vector<8x1xf32>
    %38 = vector.broadcast %37 : vector<8x1xf32> to vector<8x128xf32>
    %39 = arith.divf %33, %38 : vector<8x128xf32>
    %cst_18 = arith.constant dense<0.000000e+00> : vector<8x256xf32>
    %40 = tpu.matmul %39, %1, %cst_18 {dimension_numbers = #tpu.dot_dimension_numbers<[1], [0], [0], [1], [0, 0, 1, 1], [], []>, precision = #tpu.contract_precision<fp32>} : vector<8x128xf32>, vector<128x256xf32>, vector<8x256xf32> -> vector<8x256xf32>
    %c0_19 = arith.constant 0 : index
    %c0_20 = arith.constant 0 : index
    %c0_21 = arith.constant 0 : index
    %41 = vector.load %arg3[%c0_19, %c0_20, %c0_21] : memref<1x8x128xf32, #tpu.memory_space<vmem>>, vector<1x8x128xf32>
    %42 = vector.shape_cast %41 : vector<1x8x128xf32> to vector<8x128xf32>
    %43 = vector.shape_cast %30 : vector<8x128xf32> to vector<1x8x128xf32>
    tpu.vector_store %arg3[%c0_19, %c0_20, %c0_21], %43 {strides = array<i32>} : memref<1x8x128xf32, #tpu.memory_space<vmem>>, vector<1x8x128xf32>,
    %c0_22 = arith.constant 0 : index
    %c0_23 = arith.constant 0 : index
    %c0_24 = arith.constant 0 : index
    %44 = vector.load %arg4[%c0_22, %c0_23, %c0_24] : memref<1x8x256xf32, #tpu.memory_space<vmem>>, vector<1x8x256xf32>
    %45 = vector.shape_cast %44 : vector<1x8x256xf32> to vector<8x256xf32>
    %46 = vector.shape_cast %40 : vector<8x256xf32> to vector<1x8x256xf32>
    tpu.vector_store %arg4[%c0_22, %c0_23, %c0_24], %46 {strides = array<i32>} : memref<1x8x256xf32, #tpu.memory_space<vmem>>, vector<1x8x256xf32>,
    return
  }
  func.func @transform_0(%arg0: i32) -> (i32, i32, i32) {
    %c0_i32 = arith.constant 0 : i32
    %c0_i32_0 = arith.constant 0 : i32
    %c0_i32_1 = arith.constant 0 : i32
    return %arg0, %c0_i32, %c0_i32_0 : i32, i32, i32
  }
  func.func @transform_1(%arg0: i32) -> (i32, i32) {
    %c0_i32 = arith.constant 0 : i32
    %c0_i32_0 = arith.constant 0 : i32
    %c0_i32_1 = arith.constant 0 : i32
    return %c0_i32, %c0_i32_0 : i32, i32
  }
  func.func @transform_2(%arg0: i32) -> (i32, i32, i32) {
    %c0_i32 = arith.constant 0 : i32
    %c0_i32_0 = arith.constant 0 : i32
    %c0_i32_1 = arith.constant 0 : i32
    return %arg0, %c0_i32, %c0_i32_0 : i32, i32, i32
  }
  func.func @transform_3(%arg0: i32) -> (i32, i32, i32) {
    %c0_i32 = arith.constant 0 : i32
    %c0_i32_0 = arith.constant 0 : i32
    %c0_i32_1 = arith.constant 0 : i32
    return %arg0, %c0_i32, %c0_i32_0 : i32, i32, i32
  }
}

</mosaic_0001>

<llo_original>
// kernel: fcm_init_forward.1
$region0: #{fcm_init_forward.1}
  #allocation0 [shape = 'u32[]', space=smem, size = 0x4, offset = 0x4, fixed_abs, tag = 'smem constant byte address 0x4 - core index']
  #allocation1 [shape = 'u32[144,128]{1,0:T(1,128)}', space=vmem, size = 0x12000, scoped, tag = 'internal scratch']
  %s0 = inlined_call_operand.hbm [shape: f32[2,128,256], index: 0, kind: input, shape index: {}]
  %s1 = inlined_call_operand.hbm [shape: f32[8,128], index: 1, kind: input, shape index: {}]
  %s2 = inlined_call_operand.hbm [shape: f32[2,8,128], index: 2, kind: output, shape index: {0}]
  %s3 = inlined_call_operand.hbm [shape: f32[2,8,256], index: 3, kind: output, shape index: {1}]
  %4 = xla_tuple %s2, %s3
  %s5 = sld [smem:[#allocation0]]
  $region57: #{fcm_init_forward.1} parent=0
    _
  %s7 = ssub.s32 1, %s5
  %s8 = scalar_select 0, %s7, %s5
  $region1: #{fcm_init_forward.1} parent=0
    #allocation2 [shape = 'u8[262144]{0}', space=vmem, size = 0x40000, scoped, tag = 'input window, operand 0']
    #allocation3 [shape = 's32[2]{0}', space=sflag, size = 0x8, scoped, tag = 'scoped memory for fcm_init_forward.1']
    #allocation4 [shape = 's32[2]{0}', space=sflag, size = 0x8, scoped, tag = 'scoped memory for fcm_init_forward.1']
    #allocation5 [shape = 'u8[4096]{0}', space=vmem, size = 0x1000, scoped, tag = 'input window, operand 1, single buffered']
    #allocation6 [shape = 's32[1]{0}', space=sflag, size = 0x4, scoped, tag = 'scoped memory for fcm_init_forward.1']
    #allocation7 [shape = 'u8[8192]{0}', space=vmem, size = 0x2000, scoped, tag = 'output window, operand 0']
    #allocation8 [shape = 'u8[16384]{0}', space=vmem, size = 0x4000, scoped, tag = 'output window, operand 1']
    #allocation9 [shape = 's32[2]{0}', space=sflag, size = 0x8, scoped, tag = 'scoped memory for fcm_init_forward.1']
    %9 = vsyncpa [#allocation3], 0
    %s10 = scalar_lea.sflag [#allocation3], 1
    %11 = vsyncpa %s10, 0
    %12 = vsyncpa [#allocation6], 0
    %13 = vsyncpa [#allocation4], 0
    %s14 = scalar_lea.sflag [#allocation4], 1
    %15 = vsyncpa %s14, 0
    %16 = vsyncpa [#allocation9], 0
    %s17 = scalar_lea.sflag [#allocation9], 1
    %18 = vsyncpa %s17, 0
    loop: start=0, step=1, limit=4
    $region2: #{fcm_init_forward.1} parent=1 // loop_pre_header
      _
    $region3: #{fcm_init_forward.1} parent=1 // loop_header
      %s20 = sphi 0, %s24
      %p21 = scmp.ge.s32.totalorder %s20, 4
      %s30 = sphi 0, %s32
      %s33 = sphi 0, %s30
      %s34 = sphi 0, %s33
      %s50 = sphi 0, %s34
      %s54 = sphi 0, %s54
      %s56 = sphi 0, %s54
      %s57 = sphi 0, %s56
      %s71 = sphi 0, %s57
      %s77 = sphi 0, %s79
      %s80 = sphi 0, %s77
      %s81 = sphi 0, %s80
      %s97 = sphi 0, %s81
      %s103 = sphi 0, %s105
      %s106 = sphi 0, %s103
      %s107 = sphi 0, %s106
      %s123 = sphi 0, %s107
    $region4: #{fcm_init_forward.1} parent=1 // loop_header_branch
      %23 = sbr.rel (%p21) target = $region8
    $region5: #{fcm_init_forward.1} parent=1 // loop_body
      %s25 = ssub.s32 %s20, 1
      %s26 = ssub.s32 %s20, 2
      %s27 = sadd.s32 %s20, 1
      %s28 = ssub.s32 %s20, %s27
      %p29 = scmp.eq.s32.totalorder %s28, 0
      %s31 = sadd.s32 %s30, 1
      %s32 = scalar_select %p29, %s30, %s31
      %p35 = pneg %p29
      %p36 = scmp.eq.s32.totalorder %s20, 1
      %p37 = por %p35, %p36
      %p38 = scmp.ne.s32.totalorder %s30, %s33
      %p39 = scmp.eq.s32.totalorder %s20, 0
      %p40 = por %p38, %p39
      %p41 = scmp.ne.s32.totalorder %s30, %s33
      %p42 = scmp.eq.s32.totalorder %s25, 1
      %p43 = por %p41, %p42
      %p44 = scmp.ne.s32.totalorder %s33, %s34
      %p45 = scmp.eq.s32.totalorder %s25, 0
      %p46 = por %p44, %p45
      %p47 = scmp.ne.s32.totalorder %s33, %s34
      %p48 = scmp.eq.s32.totalorder %s26, 1
      %p49 = por %p47, %p48
      %p51 = scmp.ne.s32.totalorder %s34, %s50
      %p52 = scmp.eq.s32.totalorder %s26, 0
      %p53 = por %p51, %p52
      %s55 = sadd.s32 %s54, 1
      %p58 = scmp.eq.s32.totalorder %s20, 1
      %p59 = scmp.ne.s32.totalorder %s54, %s56
      %p60 = scmp.eq.s32.totalorder %s20, 0
      %p61 = por %p59, %p60
      %p62 = scmp.ne.s32.totalorder %s54, %s56
      %p63 = scmp.eq.s32.totalorder %s25, 1
      %p64 = por %p62, %p63
      %p65 = scmp.ne.s32.totalorder %s56, %s57
      %p66 = scmp.eq.s32.totalorder %s25, 0
      %p67 = por %p65, %p66
      %p68 = scmp.ne.s32.totalorder %s56, %s57
      %p69 = scmp.eq.s32.totalorder %s26, 1
      %p70 = por %p68, %p69
      %p72 = scmp.ne.s32.totalorder %s57, %s71
      %p73 = scmp.eq.s32.totalorder %s26, 0
      %p74 = por %p72, %p73
      %s75 = ssub.s32 %s20, %s27
      %p76 = scmp.eq.s32.totalorder %s75, 0
      %s78 = sadd.s32 %s77, 1
      %s79 = scalar_select %p76, %s77, %s78
      %p82 = pneg %p76
      %p83 = scmp.eq.s32.totalorder %s20, 1
      %p84 = por %p82, %p83
      %p85 = scmp.ne.s32.totalorder %s77, %s80
      %p86 = scmp.eq.s32.totalorder %s20, 0
      %p87 = por %p85, %p86
      %p88 = scmp.ne.s32.totalorder %s77, %s80
      %p89 = scmp.eq.s32.totalorder %s25, 1
      %p90 = por %p88, %p89
      %p91 = scmp.ne.s32.totalorder %s80, %s81
      %p92 = scmp.eq.s32.totalorder %s25, 0
      %p93 = por %p91, %p92
      %p94 = scmp.ne.s32.totalorder %s80, %s81
      %p95 = scmp.eq.s32.totalorder %s26, 1
      %p96 = por %p94, %p95
      %p98 = scmp.ne.s32.totalorder %s81, %s97
      %p99 = scmp.eq.s32.totalorder %s26, 0
      %p100 = por %p98, %p99
      %s101 = ssub.s32 %s20, %s27
      %p102 = scmp.eq.s32.totalorder %s101, 0
      %s104 = sadd.s32 %s103, 1
      %s105 = scalar_select %p102, %s103, %s104
      %p108 = pneg %p102
      %p109 = scmp.eq.s32.totalorder %s20, 1
      %p110 = por %p108, %p109
      %p111 = scmp.ne.s32.totalorder %s103, %s106
      %p112 = scmp.eq.s32.totalorder %s20, 0
      %p113 = por %p111, %p112
      %p114 = scmp.ne.s32.totalorder %s103, %s106
      %p115 = scmp.eq.s32.totalorder %s25, 1
      %p116 = por %p114, %p115
      %p117 = scmp.ne.s32.totalorder %s106, %s107
      %p118 = scmp.eq.s32.totalorder %s25, 0
      %p119 = por %p117, %p118
      %p120 = scmp.ne.s32.totalorder %s106, %s107
      %p121 = scmp.eq.s32.totalorder %s26, 1
      %p122 = por %p120, %p121
      %p124 = scmp.ne.s32.totalorder %s107, %s123
      %p125 = scmp.eq.s32.totalorder %s26, 0
      %p126 = por %p124, %p125
      %p127 = scmp.le.s32.totalorder 1, %s20
      %p128 = scmp.lt.s32.totalorder %s20, 3
      %p129 = pnand %p127, %p128
      %p130 = pneg %p129
      // Predicated region
      $region9: #{fcm_init_forward.1} parent=5 // pred_check
        _
      $region10: #{fcm_init_forward.1} parent=5 // pred_check_branch
        %132 = sbr.rel (%p129) target = $region12
      $region11: #{fcm_init_forward.1} parent=5 // pred_region
        %s133 = ssub.s32 %s20, 1
        // Predicated region
        $region13: #{fcm_init_forward.1} parent=11 // pred_check
          %p134 = pneg %p67
        $region14: #{fcm_init_forward.1} parent=11 // pred_check_branch
          %136 = sbr.rel (%p134) target = $region16
        $region15: #{fcm_init_forward.1} parent=11 // pred_region
          %s138 = ssub.s32 128, 128
          %139 = vsyncadd [#allocation6], %s138
          %s141 = sshll.u32 [#allocation5], 4
          %s142 = int_to_ptr.vmem [resolvable:$true] %s141
          %144 = dma.hbm_to_vmem [thread:$0]  %s1, 128, %s142, [#allocation6]
        $region16: #{fcm_init_forward.1} parent=11 // pred_fallthru
          _
      $region12: #{fcm_init_forward.1} parent=5 // pred_fallthru
        _
      %p145 = scmp.lt.s32.totalorder %s20, 2
      // Predicated region
      $region17: #{fcm_init_forward.1} parent=5 // pred_check
        %p146 = pneg %p145
      $region18: #{fcm_init_forward.1} parent=5 // pred_check_branch
        %148 = sbr.rel (%p146) target = $region20
      $region19: #{fcm_init_forward.1} parent=5 // pred_region
        // Predicated region
        $region21: #{fcm_init_forward.1} parent=19 // pred_check
          %p149 = pneg %p40
        $region22: #{fcm_init_forward.1} parent=19 // pred_check_branch
          %151 = sbr.rel (%p149) target = $region24
        $region23: #{fcm_init_forward.1} parent=19 // pred_region
          %s152 = sand.u32 %s30, 1
          %s153 = scalar_lea.sflag [#allocation3], %s152
          %s154 = sand.u32 %s30, 1
          %s155 = smul.addr %s154, 256
          %s156 = scalar_lea.vmem [#allocation2], %s155
          %s158 = ssub.s32 4096, 4096
          %159 = vsyncadd %s153, %s158
          %s160 = smul.addr %s20, 32
          %s161 = smul.addr %s160, 128
          %s162 = scalar_lea.hbm %s0, %s161
          %s163 = sshll.u32 %s156, 4
          %s164 = int_to_ptr.vmem [resolvable:$true] %s163
          %169 = dma.hbm_to_vmem [thread:$0]  %s162, 4096, %s164, %s153, 256, 256, 16
        $region24: #{fcm_init_forward.1} parent=19 // pred_fallthru
          _
      $region20: #{fcm_init_forward.1} parent=5 // pred_fallthru
        _
      %p170 = scmp.le.s32.totalorder 1, %s20
      %p171 = scmp.lt.s32.totalorder %s20, 3
      %p172 = pnand %p170, %p171
      %p173 = pneg %p172
      // Predicated region
      $region25: #{fcm_init_forward.1} parent=5 // pred_check
        _
      $region26: #{fcm_init_forward.1} parent=5 // pred_check_branch
        %175 = sbr.rel (%p172) target = $region28
      $region27: #{fcm_init_forward.1} parent=5 // pred_region
        %s176 = ssub.s32 %s20, 1
        %s177 = sand.u32 %s33, 1
        %s178 = scalar_lea.sflag [#allocation3], %s177
        %s179 = sand.u32 %s33, 1
        %s180 = smul.addr %s179, 256
        %s181 = scalar_lea.vmem [#allocation2], %s180
        // Predicated region
        $region29: #{fcm_init_forward.1} parent=27 // pred_check
          %p182 = pneg %p46
        $region30: #{fcm_init_forward.1} parent=27 // pred_check_branch
          %184 = sbr.rel (%p182) target = $region32
        $region31: #{fcm_init_forward.1} parent=27 // pred_region
          %185 = dma.done %s178, 4096
        $region32: #{fcm_init_forward.1} parent=27 // pred_fallthru
          _
        // Predicated region
        $region33: #{fcm_init_forward.1} parent=27 // pred_check
          %p186 = pneg %p67
        $region34: #{fcm_init_forward.1} parent=27 // pred_check_branch
          %188 = sbr.rel (%p186) target = $region36
        $region35: #{fcm_init_forward.1} parent=27 // pred_region
          %189 = dma.done [#allocation6], 128
        $region36: #{fcm_init_forward.1} parent=27 // pred_fallthru
          _
        %s190 = sand.u32 %s33, 1
        %s191 = scalar_lea.sflag [#allocation3], %s190
        %s192 = sand.u32 %s33, 1
        %s193 = smul.addr %s192, 256
        %s194 = scalar_lea.vmem [#allocation2], %s193
        %p195 = pneg %p46
        %p196 = pneg %p43
        %p197 = pneg %p67
        %p198 = pneg %p64
        %p199 = pneg %p93
        %p200 = pneg %p90
        %s201 = sand.u32 %s80, 1
        %s202 = scalar_lea.sflag [#allocation4], %s201
        %s203 = sand.u32 %s80, 1
        %s204 = smul.addr %s203, 8
        %s205 = scalar_lea.vmem [#allocation7], %s204
        %p206 = pneg %p119
        %p207 = pneg %p116
        %s208 = sand.u32 %s106, 1
        %s209 = scalar_lea.sflag [#allocation9], %s208
        %s210 = sand.u32 %s106, 1
        %s211 = smul.addr %s210, 16
        %s212 = scalar_lea.vmem [#allocation8], %s211
        %v213 = vld [vmem:[%s181] sm:$0xff]
        %v214 = vld [vmem:[%s181 + $0x8] sm:$0xff]
        %v215 = vld [vmem:[%s181 + $0x10] sm:$0xff]
        %v216 = vld [vmem:[%s181 + $0x18] sm:$0xff]
        %v217 = vld [vmem:[%s181 + $0x20] sm:$0xff]
        %v218 = vld [vmem:[%s181 + $0x28] sm:$0xff]
        %v219 = vld [vmem:[%s181 + $0x30] sm:$0xff]
        %v220 = vld [vmem:[%s181 + $0x38] sm:$0xff]
        %v221 = vld [vmem:[%s181 + $0x40] sm:$0xff]
        %v222 = vld [vmem:[%s181 + $0x48] sm:$0xff]
        %v223 = vld [vmem:[%s181 + $0x50] sm:$0xff]
        %v224 = vld [vmem:[%s181 + $0x58] sm:$0xff]
        %v225 = vld [vmem:[%s181 + $0x60] sm:$0xff]
        %v226 = vld [vmem:[%s181 + $0x68] sm:$0xff]
        %v227 = vld [vmem:[%s181 + $0x70] sm:$0xff]
        %v228 = vld [vmem:[%s181 + $0x78] sm:$0xff]
        %v229 = vld [vmem:[%s181 + $0x80] sm:$0xff]
        %v230 = vld [vmem:[%s181 + $0x88] sm:$0xff]
        %v231 = vld [vmem:[%s181 + $0x90] sm:$0xff]
        %v232 = vld [vmem:[%s181 + $0x98] sm:$0xff]
        %v233 = vld [vmem:[%s181 + $0xa0] sm:$0xff]
        %v234 = vld [vmem:[%s181 + $0xa8] sm:$0xff]
        %v235 = vld [vmem:[%s181 + $0xb0] sm:$0xff]
        %v236 = vld [vmem:[%s181 + $0xb8] sm:$0xff]
        %v237 = vld [vmem:[%s181 + $0xc0] sm:$0xff]
        %v238 = vld [vmem:[%s181 + $0xc8] sm:$0xff]
        %v239 = vld [vmem:[%s181 + $0xd0] sm:$0xff]
        %v240 = vld [vmem:[%s181 + $0xd8] sm:$0xff]
        %v241 = vld [vmem:[%s181 + $0xe0] sm:$0xff]
        %v242 = vld [vmem:[%s181 + $0xe8] sm:$0xff]
        %v243 = vld [vmem:[%s181 + $0xf0] sm:$0xff]
        %v244 = vld [vmem:[%s181 + $0xf8] sm:$0xff]
        %v245 = vld [vmem:[#allocation5] sm:$0xff]
        %v246 = vand.u32 %v244, 4294901760
        %247 = vmatprep.subr.mxu0 %v246
        %v248 = vand.u32 %v243, 4294901760
        %249 = vmatpush1.msra.mxu0 %v248
        %v250 = vand.u32 %v242, 4294901760
        %251 = vmatprep.subr.mxu0 %v250
        %v252 = vand.u32 %v241, 4294901760
        %253 = vmatpush1.msra.mxu0 %v252
        %v254 = vand.u32 %v240, 4294901760
        %255 = vmatprep.subr.mxu0 %v254
        %v256 = vand.u32 %v239, 4294901760
        %257 = vmatpush1.msra.mxu0 %v256
        %v258 = vand.u32 %v238, 4294901760
        %259 = vmatprep.subr.mxu0 %v258
        %v260 = vand.u32 %v237, 4294901760
        %261 = vmatpush1.msra.mxu0 %v260
        %v262 = vand.u32 %v236, 4294901760
        %263 = vmatprep.subr.mxu0 %v262
        %v264 = vand.u32 %v235, 4294901760
        %265 = vmatpush1.msra.mxu0 %v264
        %v266 = vand.u32 %v234, 4294901760
        %267 = vmatprep.subr.mxu0 %v266
        %v268 = vand.u32 %v233, 4294901760
        %269 = vmatpush1.msra.mxu0 %v268
        %v270 = vand.u32 %v232, 4294901760
        %271 = vmatprep.subr.mxu0 %v270
        %v272 = vand.u32 %v231, 4294901760
        %273 = vmatpush1.msra.mxu0 %v272
        %v274 = vand.u32 %v230, 4294901760
        %275 = vmatprep.subr.mxu0 %v274
        %v276 = vand.u32 %v229, 4294901760
        %277 = vmatpush1.msra.mxu0 %v276
        %v278 = vand.u32 %v228, 4294901760
        %279 = vmatprep.subr.mxu0 %v278
        %v280 = vand.u32 %v227, 4294901760
        %281 = vmatpush1.msra.mxu0 %v280
        %v282 = vand.u32 %v226, 4294901760
        %283 = vmatprep.subr.mxu0 %v282
        %v284 = vand.u32 %v225, 4294901760
        %285 = vmatpush1.msra.mxu0 %v284
        %v286 = vand.u32 %v224, 4294901760
        %287 = vmatprep.subr.mxu0 %v286
        %v288 = vand.u32 %v223, 4294901760
        %289 = vmatpush1.msra.mxu0 %v288
        %v290 = vand.u32 %v222, 4294901760
        %291 = vmatprep.subr.mxu0 %v290
        %v292 = vand.u32 %v221, 4294901760
        %293 = vmatpush1.msra.mxu0 %v292
        %v294 = vand.u32 %v220, 4294901760
        %295 = vmatprep.subr.mxu0 %v294
        %v296 = vand.u32 %v219, 4294901760
        %297 = vmatpush1.msra.mxu0 %v296
        %v298 = vand.u32 %v218, 4294901760
        %299 = vmatprep.subr.mxu0 %v298
        %v300 = vand.u32 %v217, 4294901760
        %301 = vmatpush1.msra.mxu0 %v300
        %v302 = vand.u32 %v216, 4294901760
        %303 = vmatprep.subr.mxu0 %v302
        %v304 = vand.u32 %v215, 4294901760
        %305 = vmatpush1.msra.mxu0 %v304
        %v306 = vand.u32 %v214, 4294901760
        %307 = vmatprep.subr.mxu0 %v306
        %v308 = vand.u32 %v213, 4294901760
        %309 = vmatpush1.msra.mxu0 %v308
        %310 = vmatprep.subr.mxu0 0.0
        %311 = vmatpush2.msra.mxu0 0.0
        %312 = vmatprep.subr.mxu0 0.0
        %313 = vmatpush2.msra.mxu0 0.0
        %314 = vmatprep.subr.mxu0 0.0
        %315 = vmatpush2.msra.mxu0 0.0
        %316 = vmatprep.subr.mxu0 0.0
        %317 = vmatpush2.msra.mxu0 0.0
        %318 = vmatprep.subr.mxu0 0.0
        %319 = vmatpush2.msra.mxu0 0.0
        %320 = vmatprep.subr.mxu0 0.0
        %321 = vmatpush2.msra.mxu0 0.0
        %322 = vmatprep.subr.mxu0 0.0
        %323 = vmatpush2.msra.mxu0 0.0
        %324 = vmatprep.subr.mxu0 0.0
        %325 = vmatpush2.msra.mxu0 0.0
        %326 = vmatprep.subr.mxu0 0.0
        %327 = vmatpush2.msra.mxu0 0.0
        %328 = vmatprep.subr.mxu0 0.0
        %329 = vmatpush2.msra.mxu0 0.0
        %330 = vmatprep.subr.mxu0 0.0
        %331 = vmatpush2.msra.mxu0 0.0
        %332 = vmatprep.subr.mxu0 0.0
        %333 = vmatpush2.msra.mxu0 0.0
        %334 = vmatprep.subr.mxu0 0.0
        %335 = vmatpush2.msra.mxu0 0.0
        %336 = vmatprep.subr.mxu0 0.0
        %337 = vmatpush2.msra.mxu0 0.0
        %338 = vmatprep.subr.mxu0 0.0
        %339 = vmatpush2.msra.mxu0 0.0
        %340 = vmatprep.subr.mxu0 0.0
        %341 = vmatpush2.msra.mxu0 0.0
        %342 = vmatprep.mubr.f32.mxu0 0.0
        %v343 = vand.u32 %v245, 4294901760
        %v344 = vsub.f32 %v245, %v343
        %v345 = vand.u32 %v344, 4294901760
        %v346 = vsub.f32 %v344, %v345
        %v347 = vand.u32 %v346, 4294901760
        %348 = vmatmul.mubr.f32.gmra.mxu0 %v347
        %v349 = vpop.f32.mrf.mxu0
        %v350 = vadd.f32 0.0, %v349
        %v351 = vpop.f32.mrf.mxu0
        %v352 = vadd.f32 0.0, %v351
        %353 = vdwg.mxu0
        %v354 = vand.u32 %v244, 4294901760
        %v355 = vsub.f32 %v244, %v354
        %v356 = vand.u32 %v355, 4294901760
        %v357 = vsub.f32 %v355, %v356
        %v358 = vand.u32 %v357, 4294901760
        %359 = vmatprep.subr.mxu0 %v358
        %v360 = vand.u32 %v243, 4294901760
        %v361 = vsub.f32 %v243, %v360
        %v362 = vand.u32 %v361, 4294901760
        %v363 = vsub.f32 %v361, %v362
        %v364 = vand.u32 %v363, 4294901760
        %365 = vmatpush1.msra.mxu0 %v364
        %v366 = vand.u32 %v242, 4294901760
        %v367 = vsub.f32 %v242, %v366
        %v368 = vand.u32 %v367, 4294901760
        %v369 = vsub.f32 %v367, %v368
        %v370 = vand.u32 %v369, 4294901760
        %371 = vmatprep.subr.mxu0 %v370
        %v372 = vand.u32 %v241, 4294901760
        %v373 = vsub.f32 %v241, %v372
        %v374 = vand.u32 %v373, 4294901760
        %v375 = vsub.f32 %v373, %v374
        %v376 = vand.u32 %v375, 4294901760
        %377 = vmatpush1.msra.mxu0 %v376
        %v378 = vand.u32 %v240, 4294901760
        %v379 = vsub.f32 %v240, %v378
        %v380 = vand.u32 %v379, 4294901760
        %v381 = vsub.f32 %v379, %v380
        %v382 = vand.u32 %v381, 4294901760
        %383 = vmatprep.subr.mxu0 %v382
        %v384 = vand.u32 %v239, 4294901760
        %v385 = vsub.f32 %v239, %v384
        %v386 = vand.u32 %v385, 4294901760
        %v387 = vsub.f32 %v385, %v386
        %v388 = vand.u32 %v387, 4294901760
        %389 = vmatpush1.msra.mxu0 %v388
        %v390 = vand.u32 %v238, 4294901760
        %v391 = vsub.f32 %v238, %v390
        %v392 = vand.u32 %v391, 4294901760
        %v393 = vsub.f32 %v391, %v392
        %v394 = vand.u32 %v393, 4294901760
        %395 = vmatprep.subr.mxu0 %v394
        %v396 = vand.u32 %v237, 4294901760
        %v397 = vsub.f32 %v237, %v396
        %v398 = vand.u32 %v397, 4294901760
        %v399 = vsub.f32 %v397, %v398
        %v400 = vand.u32 %v399, 4294901760
        %401 = vmatpush1.msra.mxu0 %v400
        %v402 = vand.u32 %v236, 4294901760
        %v403 = vsub.f32 %v236, %v402
        %v404 = vand.u32 %v403, 4294901760
        %v405 = vsub.f32 %v403, %v404
        %v406 = vand.u32 %v405, 4294901760
        %407 = vmatprep.subr.mxu0 %v406
        %v408 = vand.u32 %v235, 4294901760
        %v409 = vsub.f32 %v235, %v408
        %v410 = vand.u32 %v409, 4294901760
        %v411 = vsub.f32 %v409, %v410
        %v412 = vand.u32 %v411, 4294901760
        %413 = vmatpush1.msra.mxu0 %v412
        %v414 = vand.u32 %v234, 4294901760
        %v415 = vsub.f32 %v234, %v414
        %v416 = vand.u32 %v415, 4294901760
        %v417 = vsub.f32 %v415, %v416
        %v418 = vand.u32 %v417, 4294901760
        %419 = vmatprep.subr.mxu0 %v418
        %v420 = vand.u32 %v233, 4294901760
        %v421 = vsub.f32 %v233, %v420
        %v422 = vand.u32 %v421, 4294901760
        %v423 = vsub.f32 %v421, %v422
        %v424 = vand.u32 %v423, 4294901760
        %425 = vmatpush1.msra.mxu0 %v424
        %v426 = vand.u32 %v232, 4294901760
        %v427 = vsub.f32 %v232, %v426
        %v428 = vand.u32 %v427, 4294901760
        %v429 = vsub.f32 %v427, %v428
        %v430 = vand.u32 %v429, 4294901760
        %431 = vmatprep.subr.mxu0 %v430
        %v432 = vand.u32 %v231, 4294901760
        %v433 = vsub.f32 %v231, %v432
        %v434 = vand.u32 %v433, 4294901760
        %v435 = vsub.f32 %v433, %v434
        %v436 = vand.u32 %v435, 4294901760
        %437 = vmatpush1.msra.mxu0 %v436
        %v438 = vand.u32 %v230, 4294901760
        %v439 = vsub.f32 %v230, %v438
        %v440 = vand.u32 %v439, 4294901760
        %v441 = vsub.f32 %v439, %v440
        %v442 = vand.u32 %v441, 4294901760
        %443 = vmatprep.subr.mxu0 %v442
        %v444 = vand.u32 %v229, 4294901760
        %v445 = vsub.f32 %v229, %v444
        %v446 = vand.u32 %v445, 4294901760
        %v447 = vsub.f32 %v445, %v446
        %v448 = vand.u32 %v447, 4294901760
        %449 = vmatpush1.msra.mxu0 %v448
        %v450 = vand.u32 %v228, 4294901760
        %v451 = vsub.f32 %v228, %v450
        %v452 = vand.u32 %v451, 4294901760
        %v453 = vsub.f32 %v451, %v452
        %v454 = vand.u32 %v453, 4294901760
        %455 = vmatprep.subr.mxu0 %v454
        %v456 = vand.u32 %v227, 4294901760
        %v457 = vsub.f32 %v227, %v456
        %v458 = vand.u32 %v457, 4294901760
        %v459 = vsub.f32 %v457, %v458
        %v460 = vand.u32 %v459, 4294901760
        %461 = vmatpush1.msra.mxu0 %v460
        %v462 = vand.u32 %v226, 4294901760
        %v463 = vsub.f32 %v226, %v462
        %v464 = vand.u32 %v463, 4294901760
        %v465 = vsub.f32 %v463, %v464
        %v466 = vand.u32 %v465, 4294901760
        %467 = vmatprep.subr.mxu0 %v466
        %v468 = vand.u32 %v225, 4294901760
        %v469 = vsub.f32 %v225, %v468
        %v470 = vand.u32 %v469, 4294901760
        %v471 = vsub.f32 %v469, %v470
        %v472 = vand.u32 %v471, 4294901760
        %473 = vmatpush1.msra.mxu0 %v472
        %v474 = vand.u32 %v224, 4294901760
        %v475 = vsub.f32 %v224, %v474
        %v476 = vand.u32 %v475, 4294901760
        %v477 = vsub.f32 %v475, %v476
        %v478 = vand.u32 %v477, 4294901760
        %479 = vmatprep.subr.mxu0 %v478
        %v480 = vand.u32 %v223, 4294901760
        %v481 = vsub.f32 %v223, %v480
        %v482 = vand.u32 %v481, 4294901760
        %v483 = vsub.f32 %v481, %v482
        %v484 = vand.u32 %v483, 4294901760
        %485 = vmatpush1.msra.mxu0 %v484
        %v486 = vand.u32 %v222, 4294901760
        %v487 = vsub.f32 %v222, %v486
        %v488 = vand.u32 %v487, 4294901760
        %v489 = vsub.f32 %v487, %v488
        %v490 = vand.u32 %v489, 4294901760
        %491 = vmatprep.subr.mxu0 %v490
        %v492 = vand.u32 %v221, 4294901760
        %v493 = vsub.f32 %v221, %v492
        %v494 = vand.u32 %v493, 4294901760
        %v495 = vsub.f32 %v493, %v494
        %v496 = vand.u32 %v495, 4294901760
        %497 = vmatpush1.msra.mxu0 %v496
        %v498 = vand.u32 %v220, 4294901760
        %v499 = vsub.f32 %v220, %v498
        %v500 = vand.u32 %v499, 4294901760
        %v501 = vsub.f32 %v499, %v500
        %v502 = vand.u32 %v501, 4294901760
        %503 = vmatprep.subr.mxu0 %v502
        %v504 = vand.u32 %v219, 4294901760
        %v505 = vsub.f32 %v219, %v504
        %v506 = vand.u32 %v505, 4294901760
        %v507 = vsub.f32 %v505, %v506
        %v508 = vand.u32 %v507, 4294901760
        %509 = vmatpush1.msra.mxu0 %v508
        %v510 = vand.u32 %v218, 4294901760
        %v511 = vsub.f32 %v218, %v510
        %v512 = vand.u32 %v511, 4294901760
        %v513 = vsub.f32 %v511, %v512
        %v514 = vand.u32 %v513, 4294901760
        %515 = vmatprep.subr.mxu0 %v514
        %v516 = vand.u32 %v217, 4294901760
        %v517 = vsub.f32 %v217, %v516
        %v518 = vand.u32 %v517, 4294901760
        %v519 = vsub.f32 %v517, %v518
        %v520 = vand.u32 %v519, 4294901760
        %521 = vmatpush1.msra.mxu0 %v520
        %v522 = vand.u32 %v216, 4294901760
        %v523 = vsub.f32 %v216, %v522
        %v524 = vand.u32 %v523, 4294901760
        %v525 = vsub.f32 %v523, %v524
        %v526 = vand.u32 %v525, 4294901760
        %527 = vmatprep.subr.mxu0 %v526
        %v528 = vand.u32 %v215, 4294901760
        %v529 = vsub.f32 %v215, %v528
        %v530 = vand.u32 %v529, 4294901760
        %v531 = vsub.f32 %v529, %v530
        %v532 = vand.u32 %v531, 4294901760
        %533 = vmatpush1.msra.mxu0 %v532
        %v534 = vand.u32 %v214, 4294901760
        %v535 = vsub.f32 %v214, %v534
        %v536 = vand.u32 %v535, 4294901760
        %v537 = vsub.f32 %v535, %v536
        %v538 = vand.u32 %v537, 4294901760
        %539 = vmatprep.subr.mxu0 %v538
        %v540 = vand.u32 %v213, 4294901760
        %v541 = vsub.f32 %v213, %v540
        %v542 = vand.u32 %v541, 4294901760
        %v543 = vsub.f32 %v541, %v542
        %v544 = vand.u32 %v543, 4294901760
        %545 = vmatpush1.msra.mxu0 %v544
        %546 = vmatprep.subr.mxu0 0.0
        %547 = vmatpush2.msra.mxu0 0.0
        %548 = vmatprep.subr.mxu0 0.0
        %549 = vmatpush2.msra.mxu0 0.0
        %550 = vmatprep.subr.mxu0 0.0
        %551 = vmatpush2.msra.mxu0 0.0
        %552 = vmatprep.subr.mxu0 0.0
        %553 = vmatpush2.msra.mxu0 0.0
        %554 = vmatprep.subr.mxu0 0.0
        %555 = vmatpush2.msra.mxu0 0.0
        %556 = vmatprep.subr.mxu0 0.0
        %557 = vmatpush2.msra.mxu0 0.0
        %558 = vmatprep.subr.mxu0 0.0
        %559 = vmatpush2.msra.mxu0 0.0
        %560 = vmatprep.subr.mxu0 0.0
        %561 = vmatpush2.msra.mxu0 0.0
        %562 = vmatprep.subr.mxu0 0.0
        %563 = vmatpush2.msra.mxu0 0.0
        %564 = vmatprep.subr.mxu0 0.0
        %565 = vmatpush2.msra.mxu0 0.0
        %566 = vmatprep.subr.mxu0 0.0
        %567 = vmatpush2.msra.mxu0 0.0
        %568 = vmatprep.subr.mxu0 0.0
        %569 = vmatpush2.msra.mxu0 0.0
        %570 = vmatprep.subr.mxu0 0.0
        %571 = vmatpush2.msra.mxu0 0.0
        %572 = vmatprep.subr.mxu0 0.0
        %573 = vmatpush2.msra.mxu0 0.0
        %574 = vmatprep.subr.mxu0 0.0
        %575 = vmatpush2.msra.mxu0 0.0
        %576 = vmatprep.subr.mxu0 0.0
        %577 = vmatpush2.msra.mxu0 0.0
        %578 = vmatprep.mubr.f32.mxu0 0.0
        %v579 = vand.u32 %v245, 4294901760
        %580 = vmatmul.mubr.f32.gmra.mxu0 %v579
        %v581 = vpop.f32.mrf.mxu0
        %v582 = vadd.f32 %v350, %v581
        %v583 = vpop.f32.mrf.mxu0
        %v584 = vadd.f32 %v352, %v583
        %585 = vdwg.mxu0
        %v586 = vand.u32 %v244, 4294901760
        %v587 = vsub.f32 %v244, %v586
        %588 = vmatprep.subr.mxu0 %v587
        %v589 = vand.u32 %v243, 4294901760
        %v590 = vsub.f32 %v243, %v589
        %591 = vmatpush1.msra.mxu0 %v590
        %v592 = vand.u32 %v242, 4294901760
        %v593 = vsub.f32 %v242, %v592
        %594 = vmatprep.subr.mxu0 %v593
        %v595 = vand.u32 %v241, 4294901760
        %v596 = vsub.f32 %v241, %v595
        %597 = vmatpush1.msra.mxu0 %v596
        %v598 = vand.u32 %v240, 4294901760
        %v599 = vsub.f32 %v240, %v598
        %600 = vmatprep.subr.mxu0 %v599
        %v601 = vand.u32 %v239, 4294901760
        %v602 = vsub.f32 %v239, %v601
        %603 = vmatpush1.msra.mxu0 %v602
        %v604 = vand.u32 %v238, 4294901760
        %v605 = vsub.f32 %v238, %v604
        %606 = vmatprep.subr.mxu0 %v605
        %v607 = vand.u32 %v237, 4294901760
        %v608 = vsub.f32 %v237, %v607
        %609 = vmatpush1.msra.mxu0 %v608
        %v610 = vand.u32 %v236, 4294901760
        %v611 = vsub.f32 %v236, %v610
        %612 = vmatprep.subr.mxu0 %v611
        %v613 = vand.u32 %v235, 4294901760
        %v614 = vsub.f32 %v235, %v613
        %615 = vmatpush1.msra.mxu0 %v614
        %v616 = vand.u32 %v234, 4294901760
        %v617 = vsub.f32 %v234, %v616
        %618 = vmatprep.subr.mxu0 %v617
        %v619 = vand.u32 %v233, 4294901760
        %v620 = vsub.f32 %v233, %v619
        %621 = vmatpush1.msra.mxu0 %v620
        %v622 = vand.u32 %v232, 4294901760
        %v623 = vsub.f32 %v232, %v622
        %624 = vmatprep.subr.mxu0 %v623
        %v625 = vand.u32 %v231, 4294901760
        %v626 = vsub.f32 %v231, %v625
        %627 = vmatpush1.msra.mxu0 %v626
        %v628 = vand.u32 %v230, 4294901760
        %v629 = vsub.f32 %v230, %v628
        %630 = vmatprep.subr.mxu0 %v629
        %v631 = vand.u32 %v229, 4294901760
        %v632 = vsub.f32 %v229, %v631
        %633 = vmatpush1.msra.mxu0 %v632
        %v634 = vand.u32 %v228, 4294901760
        %v635 = vsub.f32 %v228, %v634
        %636 = vmatprep.subr.mxu0 %v635
        %v637 = vand.u32 %v227, 4294901760
        %v638 = vsub.f32 %v227, %v637
        %639 = vmatpush1.msra.mxu0 %v638
        %v640 = vand.u32 %v226, 4294901760
        %v641 = vsub.f32 %v226, %v640
        %642 = vmatprep.subr.mxu0 %v641
        %v643 = vand.u32 %v225, 4294901760
        %v644 = vsub.f32 %v225, %v643
        %645 = vmatpush1.msra.mxu0 %v644
        %v646 = vand.u32 %v224, 4294901760
        %v647 = vsub.f32 %v224, %v646
        %648 = vmatprep.subr.mxu0 %v647
        %v649 = vand.u32 %v223, 4294901760
        %v650 = vsub.f32 %v223, %v649
        %651 = vmatpush1.msra.mxu0 %v650
        %v652 = vand.u32 %v222, 4294901760
        %v653 = vsub.f32 %v222, %v652
        %654 = vmatprep.subr.mxu0 %v653
        %v655 = vand.u32 %v221, 4294901760
        %v656 = vsub.f32 %v221, %v655
        %657 = vmatpush1.msra.mxu0 %v656
        %v658 = vand.u32 %v220, 4294901760
        %v659 = vsub.f32 %v220, %v658
        %660 = vmatprep.subr.mxu0 %v659
        %v661 = vand.u32 %v219, 4294901760
        %v662 = vsub.f32 %v219, %v661
        %663 = vmatpush1.msra.mxu0 %v662
        %v664 = vand.u32 %v218, 4294901760
        %v665 = vsub.f32 %v218, %v664
        %666 = vmatprep.subr.mxu0 %v665
        %v667 = vand.u32 %v217, 4294901760
        %v668 = vsub.f32 %v217, %v667
        %669 = vmatpush1.msra.mxu0 %v668
        %v670 = vand.u32 %v216, 4294901760
        %v671 = vsub.f32 %v216, %v670
        %672 = vmatprep.subr.mxu0 %v671
        %v673 = vand.u32 %v215, 4294901760
        %v674 = vsub.f32 %v215, %v673
        %675 = vmatpush1.msra.mxu0 %v674
        %v676 = vand.u32 %v214, 4294901760
        %v677 = vsub.f32 %v214, %v676
        %678 = vmatprep.subr.mxu0 %v677
        %v679 = vand.u32 %v213, 4294901760
        %v680 = vsub.f32 %v213, %v679
        %681 = vmatpush1.msra.mxu0 %v680
        %682 = vmatprep.subr.mxu0 0.0
        %683 = vmatpush2.msra.mxu0 0.0
        %684 = vmatprep.subr.mxu0 0.0
        %685 = vmatpush2.msra.mxu0 0.0
        %686 = vmatprep.subr.mxu0 0.0
        %687 = vmatpush2.msra.mxu0 0.0
        %688 = vmatprep.subr.mxu0 0.0
        %689 = vmatpush2.msra.mxu0 0.0
        %690 = vmatprep.subr.mxu0 0.0
        %691 = vmatpush2.msra.mxu0 0.0
        %692 = vmatprep.subr.mxu0 0.0
        %693 = vmatpush2.msra.mxu0 0.0
        %694 = vmatprep.subr.mxu0 0.0
        %695 = vmatpush2.msra.mxu0 0.0
        %696 = vmatprep.subr.mxu0 0.0
        %697 = vmatpush2.msra.mxu0 0.0
        %698 = vmatprep.subr.mxu0 0.0
        %699 = vmatpush2.msra.mxu0 0.0
        %700 = vmatprep.subr.mxu0 0.0
        %701 = vmatpush2.msra.mxu0 0.0
        %702 = vmatprep.subr.mxu0 0.0
        %703 = vmatpush2.msra.mxu0 0.0
        %704 = vmatprep.subr.mxu0 0.0
        %705 = vmatpush2.msra.mxu0 0.0
        %706 = vmatprep.subr.mxu0 0.0
        %707 = vmatpush2.msra.mxu0 0.0
        %708 = vmatprep.subr.mxu0 0.0
        %709 = vmatpush2.msra.mxu0 0.0
        %710 = vmatprep.subr.mxu0 0.0
        %711 = vmatpush2.msra.mxu0 0.0
        %712 = vmatprep.subr.mxu0 0.0
        %713 = vmatpush2.msra.mxu0 0.0
        %714 = vmatprep.mubr.f32.mxu0 0.0
        %v715 = vand.u32 %v245, 4294901760
        %v716 = vsub.f32 %v245, %v715
        %717 = vmatmul.mubr.f32.gmra.mxu0 %v716
        %v718 = vpop.f32.mrf.mxu0
        %v719 = vadd.f32 %v582, %v718
        %v720 = vpop.f32.mrf.mxu0
        %v721 = vadd.f32 %v584, %v720
        %722 = vdwg.mxu0
        %v723 = vand.u32 %v244, 4294901760
        %724 = vmatprep.subr.mxu0 %v723
        %v725 = vand.u32 %v243, 4294901760
        %726 = vmatpush1.msra.mxu0 %v725
        %v727 = vand.u32 %v242, 4294901760
        %728 = vmatprep.subr.mxu0 %v727
        %v729 = vand.u32 %v241, 4294901760
        %730 = vmatpush1.msra.mxu0 %v729
        %v731 = vand.u32 %v240, 4294901760
        %732 = vmatprep.subr.mxu0 %v731
        %v733 = vand.u32 %v239, 4294901760
        %734 = vmatpush1.msra.mxu0 %v733
        %v735 = vand.u32 %v238, 4294901760
        %736 = vmatprep.subr.mxu0 %v735
        %v737 = vand.u32 %v237, 4294901760
        %738 = vmatpush1.msra.mxu0 %v737
        %v739 = vand.u32 %v236, 4294901760
        %740 = vmatprep.subr.mxu0 %v739
        %v741 = vand.u32 %v235, 4294901760
        %742 = vmatpush1.msra.mxu0 %v741
        %v743 = vand.u32 %v234, 4294901760
        %744 = vmatprep.subr.mxu0 %v743
        %v745 = vand.u32 %v233, 4294901760
        %746 = vmatpush1.msra.mxu0 %v745
        %v747 = vand.u32 %v232, 4294901760
        %748 = vmatprep.subr.mxu0 %v747
        %v749 = vand.u32 %v231, 4294901760
        %750 = vmatpush1.msra.mxu0 %v749
        %v751 = vand.u32 %v230, 4294901760
        %752 = vmatprep.subr.mxu0 %v751
        %v753 = vand.u32 %v229, 4294901760
        %754 = vmatpush1.msra.mxu0 %v753
        %v755 = vand.u32 %v228, 4294901760
        %756 = vmatprep.subr.mxu0 %v755
        %v757 = vand.u32 %v227, 4294901760
        %758 = vmatpush1.msra.mxu0 %v757
        %v759 = vand.u32 %v226, 4294901760
        %760 = vmatprep.subr.mxu0 %v759
        %v761 = vand.u32 %v225, 4294901760
        %762 = vmatpush1.msra.mxu0 %v761
        %v763 = vand.u32 %v224, 4294901760
        %764 = vmatprep.subr.mxu0 %v763
        %v765 = vand.u32 %v223, 4294901760
        %766 = vmatpush1.msra.mxu0 %v765
        %v767 = vand.u32 %v222, 4294901760
        %768 = vmatprep.subr.mxu0 %v767
        %v769 = vand.u32 %v221, 4294901760
        %770 = vmatpush1.msra.mxu0 %v769
        %v771 = vand.u32 %v220, 4294901760
        %772 = vmatprep.subr.mxu0 %v771
        %v773 = vand.u32 %v219, 4294901760
        %774 = vmatpush1.msra.mxu0 %v773
        %v775 = vand.u32 %v218, 4294901760
        %776 = vmatprep.subr.mxu0 %v775
        %v777 = vand.u32 %v217, 4294901760
        %778 = vmatpush1.msra.mxu0 %v777
        %v779 = vand.u32 %v216, 4294901760
        %780 = vmatprep.subr.mxu0 %v779
        %v781 = vand.u32 %v215, 4294901760
        %782 = vmatpush1.msra.mxu0 %v781
        %v783 = vand.u32 %v214, 4294901760
        %784 = vmatprep.subr.mxu0 %v783
        %v785 = vand.u32 %v213, 4294901760
        %786 = vmatpush1.msra.mxu0 %v785
        %787 = vmatprep.subr.mxu0 0.0
        %788 = vmatpush2.msra.mxu0 0.0
        %789 = vmatprep.subr.mxu0 0.0
        %790 = vmatpush2.msra.mxu0 0.0
        %791 = vmatprep.subr.mxu0 0.0
        %792 = vmatpush2.msra.mxu0 0.0
        %793 = vmatprep.subr.mxu0 0.0
        %794 = vmatpush2.msra.mxu0 0.0
        %795 = vmatprep.subr.mxu0 0.0
        %796 = vmatpush2.msra.mxu0 0.0
        %797 = vmatprep.subr.mxu0 0.0
        %798 = vmatpush2.msra.mxu0 0.0
        %799 = vmatprep.subr.mxu0 0.0
        %800 = vmatpush2.msra.mxu0 0.0
        %801 = vmatprep.subr.mxu0 0.0
        %802 = vmatpush2.msra.mxu0 0.0
        %803 = vmatprep.subr.mxu0 0.0
        %804 = vmatpush2.msra.mxu0 0.0
        %805 = vmatprep.subr.mxu0 0.0
        %806 = vmatpush2.msra.mxu0 0.0
        %807 = vmatprep.subr.mxu0 0.0
        %808 = vmatpush2.msra.mxu0 0.0
        %809 = vmatprep.subr.mxu0 0.0
        %810 = vmatpush2.msra.mxu0 0.0
        %811 = vmatprep.subr.mxu0 0.0
        %812 = vmatpush2.msra.mxu0 0.0
        %813 = vmatprep.subr.mxu0 0.0
        %814 = vmatpush2.msra.mxu0 0.0
        %815 = vmatprep.subr.mxu0 0.0
        %816 = vmatpush2.msra.mxu0 0.0
        %817 = vmatprep.subr.mxu0 0.0
        %818 = vmatpush2.msra.mxu0 0.0
        %819 = vmatprep.mubr.f32.mxu0 0.0
        %v820 = vand.u32 %v245, 4294901760
        %v821 = vsub.f32 %v245, %v820
        %v822 = vand.u32 %v821, 4294901760
        %823 = vmatmul.mubr.f32.gmra.mxu0 %v822
        %v824 = vpop.f32.mrf.mxu0
        %v825 = vadd.f32 %v719, %v824
        %v826 = vpop.f32.mrf.mxu0
        %v827 = vadd.f32 %v721, %v826
        %828 = vdwg.mxu0
        %v829 = vand.u32 %v244, 4294901760
        %v830 = vsub.f32 %v244, %v829
        %v831 = vand.u32 %v830, 4294901760
        %832 = vmatprep.subr.mxu0 %v831
        %v833 = vand.u32 %v243, 4294901760
        %v834 = vsub.f32 %v243, %v833
        %v835 = vand.u32 %v834, 4294901760
        %836 = vmatpush1.msra.mxu0 %v835
        %v837 = vand.u32 %v242, 4294901760
        %v838 = vsub.f32 %v242, %v837
        %v839 = vand.u32 %v838, 4294901760
        %840 = vmatprep.subr.mxu0 %v839
        %v841 = vand.u32 %v241, 4294901760
        %v842 = vsub.f32 %v241, %v841
        %v843 = vand.u32 %v842, 4294901760
        %844 = vmatpush1.msra.mxu0 %v843
        %v845 = vand.u32 %v240, 4294901760
        %v846 = vsub.f32 %v240, %v845
        %v847 = vand.u32 %v846, 4294901760
        %848 = vmatprep.subr.mxu0 %v847
        %v849 = vand.u32 %v239, 4294901760
        %v850 = vsub.f32 %v239, %v849
        %v851 = vand.u32 %v850, 4294901760
        %852 = vmatpush1.msra.mxu0 %v851
        %v853 = vand.u32 %v238, 4294901760
        %v854 = vsub.f32 %v238, %v853
        %v855 = vand.u32 %v854, 4294901760
        %856 = vmatprep.subr.mxu0 %v855
        %v857 = vand.u32 %v237, 4294901760
        %v858 = vsub.f32 %v237, %v857
        %v859 = vand.u32 %v858, 4294901760
        %860 = vmatpush1.msra.mxu0 %v859
        %v861 = vand.u32 %v236, 4294901760
        %v862 = vsub.f32 %v236, %v861
        %v863 = vand.u32 %v862, 4294901760
        %864 = vmatprep.subr.mxu0 %v863
        %v865 = vand.u32 %v235, 4294901760
        %v866 = vsub.f32 %v235, %v865
        %v867 = vand.u32 %v866, 4294901760
        %868 = vmatpush1.msra.mxu0 %v867
        %v869 = vand.u32 %v234, 4294901760
        %v870 = vsub.f32 %v234, %v869
        %v871 = vand.u32 %v870, 4294901760
        %872 = vmatprep.subr.mxu0 %v871
        %v873 = vand.u32 %v233, 4294901760
        %v874 = vsub.f32 %v233, %v873
        %v875 = vand.u32 %v874, 4294901760
        %876 = vmatpush1.msra.mxu0 %v875
        %v877 = vand.u32 %v232, 4294901760
        %v878 = vsub.f32 %v232, %v877
        %v879 = vand.u32 %v878, 4294901760
        %880 = vmatprep.subr.mxu0 %v879
        %v881 = vand.u32 %v231, 4294901760
        %v882 = vsub.f32 %v231, %v881
        %v883 = vand.u32 %v882, 4294901760
        %884 = vmatpush1.msra.mxu0 %v883
        %v885 = vand.u32 %v230, 4294901760
        %v886 = vsub.f32 %v230, %v885
        %v887 = vand.u32 %v886, 4294901760
        %888 = vmatprep.subr.mxu0 %v887
        %v889 = vand.u32 %v229, 4294901760
        %v890 = vsub.f32 %v229, %v889
        %v891 = vand.u32 %v890, 4294901760
        %892 = vmatpush1.msra.mxu0 %v891
        %v893 = vand.u32 %v228, 4294901760
        %v894 = vsub.f32 %v228, %v893
        %v895 = vand.u32 %v894, 4294901760
        %896 = vmatprep.subr.mxu0 %v895
        %v897 = vand.u32 %v227, 4294901760
        %v898 = vsub.f32 %v227, %v897
        %v899 = vand.u32 %v898, 4294901760
        %900 = vmatpush1.msra.mxu0 %v899
        %v901 = vand.u32 %v226, 4294901760
        %v902 = vsub.f32 %v226, %v901
        %v903 = vand.u32 %v902, 4294901760
        %904 = vmatprep.subr.mxu0 %v903
        %v905 = vand.u32 %v225, 4294901760
        %v906 = vsub.f32 %v225, %v905
        %v907 = vand.u32 %v906, 4294901760
        %908 = vmatpush1.msra.mxu0 %v907
        %v909 = vand.u32 %v224, 4294901760
        %v910 = vsub.f32 %v224, %v909
        %v911 = vand.u32 %v910, 4294901760
        %912 = vmatprep.subr.mxu0 %v911
        %v913 = vand.u32 %v223, 4294901760
        %v914 = vsub.f32 %v223, %v913
        %v915 = vand.u32 %v914, 4294901760
        %916 = vmatpush1.msra.mxu0 %v915
        %v917 = vand.u32 %v222, 4294901760
        %v918 = vsub.f32 %v222, %v917
        %v919 = vand.u32 %v918, 4294901760
        %920 = vmatprep.subr.mxu0 %v919
        %v921 = vand.u32 %v221, 4294901760
        %v922 = vsub.f32 %v221, %v921
        %v923 = vand.u32 %v922, 4294901760
        %924 = vmatpush1.msra.mxu0 %v923
        %v925 = vand.u32 %v220, 4294901760
        %v926 = vsub.f32 %v220, %v925
        %v927 = vand.u32 %v926, 4294901760
        %928 = vmatprep.subr.mxu0 %v927
        %v929 = vand.u32 %v219, 4294901760
        %v930 = vsub.f32 %v219, %v929
        %v931 = vand.u32 %v930, 4294901760
        %932 = vmatpush1.msra.mxu0 %v931
        %v933 = vand.u32 %v218, 4294901760
        %v934 = vsub.f32 %v218, %v933
        %v935 = vand.u32 %v934, 4294901760
        %936 = vmatprep.subr.mxu0 %v935
        %v937 = vand.u32 %v217, 4294901760
        %v938 = vsub.f32 %v217, %v937
        %v939 = vand.u32 %v938, 4294901760
        %940 = vmatpush1.msra.mxu0 %v939
        %v941 = vand.u32 %v216, 4294901760
        %v942 = vsub.f32 %v216, %v941
        %v943 = vand.u32 %v942, 4294901760
        %944 = vmatprep.subr.mxu0 %v943
        %v945 = vand.u32 %v215, 4294901760
        %v946 = vsub.f32 %v215, %v945
        %v947 = vand.u32 %v946, 4294901760
        %948 = vmatpush1.msra.mxu0 %v947
        %v949 = vand.u32 %v214, 4294901760
        %v950 = vsub.f32 %v214, %v949
        %v951 = vand.u32 %v950, 4294901760
        %952 = vmatprep.subr.mxu0 %v951
        %v953 = vand.u32 %v213, 4294901760
        %v954 = vsub.f32 %v213, %v953
        %v955 = vand.u32 %v954, 4294901760
        %956 = vmatpush1.msra.mxu0 %v955
        %957 = vmatprep.subr.mxu0 0.0
        %958 = vmatpush2.msra.mxu0 0.0
        %959 = vmatprep.subr.mxu0 0.0
        %960 = vmatpush2.msra.mxu0 0.0
        %961 = vmatprep.subr.mxu0 0.0
        %962 = vmatpush2.msra.mxu0 0.0
        %963 = vmatprep.subr.mxu0 0.0
        %964 = vmatpush2.msra.mxu0 0.0
        %965 = vmatprep.subr.mxu0 0.0
        %966 = vmatpush2.msra.mxu0 0.0
        %967 = vmatprep.subr.mxu0 0.0
        %968 = vmatpush2.msra.mxu0 0.0
        %969 = vmatprep.subr.mxu0 0.0
        %970 = vmatpush2.msra.mxu0 0.0
        %971 = vmatprep.subr.mxu0 0.0
        %972 = vmatpush2.msra.mxu0 0.0
        %973 = vmatprep.subr.mxu0 0.0
        %974 = vmatpush2.msra.mxu0 0.0
        %975 = vmatprep.subr.mxu0 0.0
        %976 = vmatpush2.msra.mxu0 0.0
        %977 = vmatprep.subr.mxu0 0.0
        %978 = vmatpush2.msra.mxu0 0.0
        %979 = vmatprep.subr.mxu0 0.0
        %980 = vmatpush2.msra.mxu0 0.0
        %981 = vmatprep.subr.mxu0 0.0
        %982 = vmatpush2.msra.mxu0 0.0
        %983 = vmatprep.subr.mxu0 0.0
        %984 = vmatpush2.msra.mxu0 0.0
        %985 = vmatprep.subr.mxu0 0.0
        %986 = vmatpush2.msra.mxu0 0.0
        %987 = vmatprep.subr.mxu0 0.0
        %988 = vmatpush2.msra.mxu0 0.0
        %989 = vmatprep.mubr.f32.mxu0 0.0
        %v990 = vand.u32 %v245, 4294901760
        %991 = vmatmul.mubr.f32.gmra.mxu0 %v990
        %v992 = vpop.f32.mrf.mxu0
        %v993 = vadd.f32 %v825, %v992
        %v994 = vpop.f32.mrf.mxu0
        %v995 = vadd.f32 %v827, %v994
        %996 = vdwg.mxu0
        %v997 = vand.u32 %v244, 4294901760
        %998 = vmatprep.subr.mxu0 %v997
        %v999 = vand.u32 %v243, 4294901760
        %1000 = vmatpush1.msra.mxu0 %v999
        %v1001 = vand.u32 %v242, 4294901760
        %1002 = vmatprep.subr.mxu0 %v1001
        %v1003 = vand.u32 %v241, 4294901760
        %1004 = vmatpush1.msra.mxu0 %v1003
        %v1005 = vand.u32 %v240, 4294901760
        %1006 = vmatprep.subr.mxu0 %v1005
        %v1007 = vand.u32 %v239, 4294901760
        %1008 = vmatpush1.msra.mxu0 %v1007
        %v1009 = vand.u32 %v238, 4294901760
        %1010 = vmatprep.subr.mxu0 %v1009
        %v1011 = vand.u32 %v237, 4294901760
        %1012 = vmatpush1.msra.mxu0 %v1011
        %v1013 = vand.u32 %v236, 4294901760
        %1014 = vmatprep.subr.mxu0 %v1013
        %v1015 = vand.u32 %v235, 4294901760
        %1016 = vmatpush1.msra.mxu0 %v1015
        %v1017 = vand.u32 %v234, 4294901760
        %1018 = vmatprep.subr.mxu0 %v1017
        %v1019 = vand.u32 %v233, 4294901760
        %1020 = vmatpush1.msra.mxu0 %v1019
        %v1021 = vand.u32 %v232, 4294901760
        %1022 = vmatprep.subr.mxu0 %v1021
        %v1023 = vand.u32 %v231, 4294901760
        %1024 = vmatpush1.msra.mxu0 %v1023
        %v1025 = vand.u32 %v230, 4294901760
        %1026 = vmatprep.subr.mxu0 %v1025
        %v1027 = vand.u32 %v229, 4294901760
        %1028 = vmatpush1.msra.mxu0 %v1027
        %v1029 = vand.u32 %v228, 4294901760
        %1030 = vmatprep.subr.mxu0 %v1029
        %v1031 = vand.u32 %v227, 4294901760
        %1032 = vmatpush1.msra.mxu0 %v1031
        %v1033 = vand.u32 %v226, 4294901760
        %1034 = vmatprep.subr.mxu0 %v1033
        %v1035 = vand.u32 %v225, 4294901760
        %1036 = vmatpush1.msra.mxu0 %v1035
        %v1037 = vand.u32 %v224, 4294901760
        %1038 = vmatprep.subr.mxu0 %v1037
        %v1039 = vand.u32 %v223, 4294901760
        %1040 = vmatpush1.msra.mxu0 %v1039
        %v1041 = vand.u32 %v222, 4294901760
        %1042 = vmatprep.subr.mxu0 %v1041
        %v1043 = vand.u32 %v221, 4294901760
        %1044 = vmatpush1.msra.mxu0 %v1043
        %v1045 = vand.u32 %v220, 4294901760
        %1046 = vmatprep.subr.mxu0 %v1045
        %v1047 = vand.u32 %v219, 4294901760
        %1048 = vmatpush1.msra.mxu0 %v1047
        %v1049 = vand.u32 %v218, 4294901760
        %1050 = vmatprep.subr.mxu0 %v1049
        %v1051 = vand.u32 %v217, 4294901760
        %1052 = vmatpush1.msra.mxu0 %v1051
        %v1053 = vand.u32 %v216, 4294901760
        %1054 = vmatprep.subr.mxu0 %v1053
        %v1055 = vand.u32 %v215, 4294901760
        %1056 = vmatpush1.msra.mxu0 %v1055
        %v1057 = vand.u32 %v214, 4294901760
        %1058 = vmatprep.subr.mxu0 %v1057
        %v1059 = vand.u32 %v213, 4294901760
        %1060 = vmatpush1.msra.mxu0 %v1059
        %1061 = vmatprep.subr.mxu0 0.0
        %1062 = vmatpush2.msra.mxu0 0.0
        %1063 = vmatprep.subr.mxu0 0.0
        %1064 = vmatpush2.msra.mxu0 0.0
        %1065 = vmatprep.subr.mxu0 0.0
        %1066 = vmatpush2.msra.mxu0 0.0
        %1067 = vmatprep.subr.mxu0 0.0
        %1068 = vmatpush2.msra.mxu0 0.0
        %1069 = vmatprep.subr.mxu0 0.0
        %1070 = vmatpush2.msra.mxu0 0.0
        %1071 = vmatprep.subr.mxu0 0.0
        %1072 = vmatpush2.msra.mxu0 0.0
        %1073 = vmatprep.subr.mxu0 0.0
        %1074 = vmatpush2.msra.mxu0 0.0
        %1075 = vmatprep.subr.mxu0 0.0
        %1076 = vmatpush2.msra.mxu0 0.0
        %1077 = vmatprep.subr.mxu0 0.0
        %1078 = vmatpush2.msra.mxu0 0.0
        %1079 = vmatprep.subr.mxu0 0.0
        %1080 = vmatpush2.msra.mxu0 0.0
        %1081 = vmatprep.subr.mxu0 0.0
        %1082 = vmatpush2.msra.mxu0 0.0
        %1083 = vmatprep.subr.mxu0 0.0
        %1084 = vmatpush2.msra.mxu0 0.0
        %1085 = vmatprep.subr.mxu0 0.0
        %1086 = vmatpush2.msra.mxu0 0.0
        %1087 = vmatprep.subr.mxu0 0.0
        %1088 = vmatpush2.msra.mxu0 0.0
        %1089 = vmatprep.subr.mxu0 0.0
        %1090 = vmatpush2.msra.mxu0 0.0
        %1091 = vmatprep.subr.mxu0 0.0
        %1092 = vmatpush2.msra.mxu0 0.0
        %1093 = vmatprep.mubr.f32.mxu0 0.0
        %v1094 = vand.u32 %v245, 4294901760
        %1095 = vmatmul.mubr.f32.gmra.mxu0 %v1094
        %v1096 = vpop.f32.mrf.mxu0
        %v1097 = vadd.f32 %v993, %v1096
        %v1098 = vpop.f32.mrf.mxu0
        %v1099 = vadd.f32 %v995, %v1098
        %1100 = vdwg.mxu0
        %v1101 = vmul.f32 %v213, %v213
        %v1102 = vmul.f32 %v214, %v214
        %v1103 = vmul.f32 %v215, %v215
        %v1104 = vmul.f32 %v216, %v216
        %v1105 = vmul.f32 %v217, %v217
        %v1106 = vmul.f32 %v218, %v218
        %v1107 = vmul.f32 %v219, %v219
        %v1108 = vmul.f32 %v220, %v220
        %v1109 = vmul.f32 %v221, %v221
        %v1110 = vmul.f32 %v222, %v222
        %v1111 = vmul.f32 %v223, %v223
        %v1112 = vmul.f32 %v224, %v224
        %v1113 = vmul.f32 %v225, %v225
        %v1114 = vmul.f32 %v226, %v226
        %v1115 = vmul.f32 %v227, %v227
        %v1116 = vmul.f32 %v228, %v228
        %v1117 = vmul.f32 %v229, %v229
        %v1118 = vmul.f32 %v230, %v230
        %v1119 = vmul.f32 %v231, %v231
        %v1120 = vmul.f32 %v232, %v232
        %v1121 = vmul.f32 %v233, %v233
        %v1122 = vmul.f32 %v234, %v234
        %v1123 = vmul.f32 %v235, %v235
        %v1124 = vmul.f32 %v236, %v236
        %v1125 = vmul.f32 %v237, %v237
        %v1126 = vmul.f32 %v238, %v238
        %v1127 = vmul.f32 %v239, %v239
        %v1128 = vmul.f32 %v240, %v240
        %v1129 = vmul.f32 %v241, %v241
        %v1130 = vmul.f32 %v242, %v242
        %v1131 = vmul.f32 %v243, %v243
        %v1132 = vmul.f32 %v244, %v244
        %v1133 = vand.u32 %v1132, 4294901760
        %1134 = vmatprep.subr.mxu0 %v1133
        %v1135 = vand.u32 %v1131, 4294901760
        %1136 = vmatpush1.xpose.msra.mxu0 %v1135
        %v1137 = vand.u32 %v1130, 4294901760
        %1138 = vmatprep.subr.mxu0 %v1137
        %v1139 = vand.u32 %v1129, 4294901760
        %1140 = vmatpush1.xpose.msra.mxu0 %v1139
        %v1141 = vand.u32 %v1128, 4294901760
        %1142 = vmatprep.subr.mxu0 %v1141
        %v1143 = vand.u32 %v1127, 4294901760
        %1144 = vmatpush1.xpose.msra.mxu0 %v1143
        %v1145 = vand.u32 %v1126, 4294901760
        %1146 = vmatprep.subr.mxu0 %v1145
        %v1147 = vand.u32 %v1125, 4294901760
        %1148 = vmatpush1.xpose.msra.mxu0 %v1147
        %v1149 = vand.u32 %v1124, 4294901760
        %1150 = vmatprep.subr.mxu0 %v1149
        %v1151 = vand.u32 %v1123, 4294901760
        %1152 = vmatpush1.xpose.msra.mxu0 %v1151
        %v1153 = vand.u32 %v1122, 4294901760
        %1154 = vmatprep.subr.mxu0 %v1153
        %v1155 = vand.u32 %v1121, 4294901760
        %1156 = vmatpush1.xpose.msra.mxu0 %v1155
        %v1157 = vand.u32 %v1120, 4294901760
        %1158 = vmatprep.subr.mxu0 %v1157
        %v1159 = vand.u32 %v1119, 4294901760
        %1160 = vmatpush1.xpose.msra.mxu0 %v1159
        %v1161 = vand.u32 %v1118, 4294901760
        %1162 = vmatprep.subr.mxu0 %v1161
        %v1163 = vand.u32 %v1117, 4294901760
        %1164 = vmatpush1.xpose.msra.mxu0 %v1163
        %v1165 = vand.u32 %v1116, 4294901760
        %1166 = vmatprep.subr.mxu0 %v1165
        %v1167 = vand.u32 %v1115, 4294901760
        %1168 = vmatpush1.xpose.msra.mxu0 %v1167
        %v1169 = vand.u32 %v1114, 4294901760
        %1170 = vmatprep.subr.mxu0 %v1169
        %v1171 = vand.u32 %v1113, 4294901760
        %1172 = vmatpush1.xpose.msra.mxu0 %v1171
        %v1173 = vand.u32 %v1112, 4294901760
        %1174 = vmatprep.subr.mxu0 %v1173
        %v1175 = vand.u32 %v1111, 4294901760
        %1176 = vmatpush1.xpose.msra.mxu0 %v1175
        %v1177 = vand.u32 %v1110, 4294901760
        %1178 = vmatprep.subr.mxu0 %v1177
        %v1179 = vand.u32 %v1109, 4294901760
        %1180 = vmatpush1.xpose.msra.mxu0 %v1179
        %v1181 = vand.u32 %v1108, 4294901760
        %1182 = vmatprep.subr.mxu0 %v1181
        %v1183 = vand.u32 %v1107, 4294901760
        %1184 = vmatpush1.xpose.msra.mxu0 %v1183
        %v1185 = vand.u32 %v1106, 4294901760
        %1186 = vmatprep.subr.mxu0 %v1185
        %v1187 = vand.u32 %v1105, 4294901760
        %1188 = vmatpush1.xpose.msra.mxu0 %v1187
        %v1189 = vand.u32 %v1104, 4294901760
        %1190 = vmatprep.subr.mxu0 %v1189
        %v1191 = vand.u32 %v1103, 4294901760
        %1192 = vmatpush1.xpose.msra.mxu0 %v1191
        %v1193 = vand.u32 %v1102, 4294901760
        %1194 = vmatprep.subr.mxu0 %v1193
        %v1195 = vand.u32 %v1101, 4294901760
        %1196 = vmatpush1.xpose.msra.mxu0 %v1195
        %1197 = vmatprep.subr.mxu0 0.0
        %1198 = vmatpush2.xpose.msra.mxu0 0.0
        %1199 = vmatprep.subr.mxu0 0.0
        %1200 = vmatpush2.xpose.msra.mxu0 0.0
        %1201 = vmatprep.subr.mxu0 0.0
        %1202 = vmatpush2.xpose.msra.mxu0 0.0
        %1203 = vmatprep.subr.mxu0 0.0
        %1204 = vmatpush2.xpose.msra.mxu0 0.0
        %1205 = vmatprep.subr.mxu0 0.0
        %1206 = vmatpush2.xpose.msra.mxu0 0.0
        %1207 = vmatprep.subr.mxu0 0.0
        %1208 = vmatpush2.xpose.msra.mxu0 0.0
        %1209 = vmatprep.subr.mxu0 0.0
        %1210 = vmatpush2.xpose.msra.mxu0 0.0
        %1211 = vmatprep.subr.mxu0 0.0
        %1212 = vmatpush2.xpose.msra.mxu0 0.0
        %1213 = vmatprep.subr.mxu0 0.0
        %1214 = vmatpush2.xpose.msra.mxu0 0.0
        %1215 = vmatprep.subr.mxu0 0.0
        %1216 = vmatpush2.xpose.msra.mxu0 0.0
        %1217 = vmatprep.subr.mxu0 0.0
        %1218 = vmatpush2.xpose.msra.mxu0 0.0
        %1219 = vmatprep.subr.mxu0 0.0
        %1220 = vmatpush2.xpose.msra.mxu0 0.0
        %1221 = vmatprep.subr.mxu0 0.0
        %1222 = vmatpush2.xpose.msra.mxu0 0.0
        %1223 = vmatprep.subr.mxu0 0.0
        %1224 = vmatpush2.xpose.msra.mxu0 0.0
        %1225 = vmatprep.subr.mxu0 0.0
        %1226 = vmatpush2.xpose.msra.mxu0 0.0
        %1227 = vmatprep.subr.mxu0 0.0
        %1228 = vmatpush2.xpose.msra.mxu0 0.0
        %1229 = vmatprep.mubr.f32.mxu0 0.0
        %1230 = vmatmul.mubr.f32.gmra.mxu0 0.0
        %v1231 = vpop.f32.mrf.mxu0
        %v1232 = vadd.f32 0.0, %v1231
        %v1233 = vpop.f32.mrf.mxu0
        %1234 = vdwg.mxu0
        %v1235 = vand.u32 %v1132, 4294901760
        %v1236 = vsub.f32 %v1132, %v1235
        %v1237 = vand.u32 %v1236, 4294901760
        %v1238 = vsub.f32 %v1236, %v1237
        %v1239 = vand.u32 %v1238, 4294901760
        %1240 = vmatprep.subr.mxu0 %v1239
        %v1241 = vand.u32 %v1131, 4294901760
        %v1242 = vsub.f32 %v1131, %v1241
        %v1243 = vand.u32 %v1242, 4294901760
        %v1244 = vsub.f32 %v1242, %v1243
        %v1245 = vand.u32 %v1244, 4294901760
        %1246 = vmatpush1.xpose.msra.mxu0 %v1245
        %v1247 = vand.u32 %v1130, 4294901760
        %v1248 = vsub.f32 %v1130, %v1247
        %v1249 = vand.u32 %v1248, 4294901760
        %v1250 = vsub.f32 %v1248, %v1249
        %v1251 = vand.u32 %v1250, 4294901760
        %1252 = vmatprep.subr.mxu0 %v1251
        %v1253 = vand.u32 %v1129, 4294901760
        %v1254 = vsub.f32 %v1129, %v1253
        %v1255 = vand.u32 %v1254, 4294901760
        %v1256 = vsub.f32 %v1254, %v1255
        %v1257 = vand.u32 %v1256, 4294901760
        %1258 = vmatpush1.xpose.msra.mxu0 %v1257
        %v1259 = vand.u32 %v1128, 4294901760
        %v1260 = vsub.f32 %v1128, %v1259
        %v1261 = vand.u32 %v1260, 4294901760
        %v1262 = vsub.f32 %v1260, %v1261
        %v1263 = vand.u32 %v1262, 4294901760
        %1264 = vmatprep.subr.mxu0 %v1263
        %v1265 = vand.u32 %v1127, 4294901760
        %v1266 = vsub.f32 %v1127, %v1265
        %v1267 = vand.u32 %v1266, 4294901760
        %v1268 = vsub.f32 %v1266, %v1267
        %v1269 = vand.u32 %v1268, 4294901760
        %1270 = vmatpush1.xpose.msra.mxu0 %v1269
        %v1271 = vand.u32 %v1126, 4294901760
        %v1272 = vsub.f32 %v1126, %v1271
        %v1273 = vand.u32 %v1272, 4294901760
        %v1274 = vsub.f32 %v1272, %v1273
        %v1275 = vand.u32 %v1274, 4294901760
        %1276 = vmatprep.subr.mxu0 %v1275
        %v1277 = vand.u32 %v1125, 4294901760
        %v1278 = vsub.f32 %v1125, %v1277
        %v1279 = vand.u32 %v1278, 4294901760
        %v1280 = vsub.f32 %v1278, %v1279
        %v1281 = vand.u32 %v1280, 4294901760
        %1282 = vmatpush1.xpose.msra.mxu0 %v1281
        %v1283 = vand.u32 %v1124, 4294901760
        %v1284 = vsub.f32 %v1124, %v1283
        %v1285 = vand.u32 %v1284, 4294901760
        %v1286 = vsub.f32 %v1284, %v1285
        %v1287 = vand.u32 %v1286, 4294901760
        %1288 = vmatprep.subr.mxu0 %v1287
        %v1289 = vand.u32 %v1123, 4294901760
        %v1290 = vsub.f32 %v1123, %v1289
        %v1291 = vand.u32 %v1290, 4294901760
        %v1292 = vsub.f32 %v1290, %v1291
        %v1293 = vand.u32 %v1292, 4294901760
        %1294 = vmatpush1.xpose.msra.mxu0 %v1293
        %v1295 = vand.u32 %v1122, 4294901760
        %v1296 = vsub.f32 %v1122, %v1295
        %v1297 = vand.u32 %v1296, 4294901760
        %v1298 = vsub.f32 %v1296, %v1297
        %v1299 = vand.u32 %v1298, 4294901760
        %1300 = vmatprep.subr.mxu0 %v1299
        %v1301 = vand.u32 %v1121, 4294901760
        %v1302 = vsub.f32 %v1121, %v1301
        %v1303 = vand.u32 %v1302, 4294901760
        %v1304 = vsub.f32 %v1302, %v1303
        %v1305 = vand.u32 %v1304, 4294901760
        %1306 = vmatpush1.xpose.msra.mxu0 %v1305
        %v1307 = vand.u32 %v1120, 4294901760
        %v1308 = vsub.f32 %v1120, %v1307
        %v1309 = vand.u32 %v1308, 4294901760
        %v1310 = vsub.f32 %v1308, %v1309
        %v1311 = vand.u32 %v1310, 4294901760
        %1312 = vmatprep.subr.mxu0 %v1311
        %v1313 = vand.u32 %v1119, 4294901760
        %v1314 = vsub.f32 %v1119, %v1313
        %v1315 = vand.u32 %v1314, 4294901760
        %v1316 = vsub.f32 %v1314, %v1315
        %v1317 = vand.u32 %v1316, 4294901760
        %1318 = vmatpush1.xpose.msra.mxu0 %v1317
        %v1319 = vand.u32 %v1118, 4294901760
        %v1320 = vsub.f32 %v1118, %v1319
        %v1321 = vand.u32 %v1320, 4294901760
        %v1322 = vsub.f32 %v1320, %v1321
        %v1323 = vand.u32 %v1322, 4294901760
        %1324 = vmatprep.subr.mxu0 %v1323
        %v1325 = vand.u32 %v1117, 4294901760
        %v1326 = vsub.f32 %v1117, %v1325
        %v1327 = vand.u32 %v1326, 4294901760
        %v1328 = vsub.f32 %v1326, %v1327
        %v1329 = vand.u32 %v1328, 4294901760
        %1330 = vmatpush1.xpose.msra.mxu0 %v1329
        %v1331 = vand.u32 %v1116, 4294901760
        %v1332 = vsub.f32 %v1116, %v1331
        %v1333 = vand.u32 %v1332, 4294901760
        %v1334 = vsub.f32 %v1332, %v1333
        %v1335 = vand.u32 %v1334, 4294901760
        %1336 = vmatprep.subr.mxu0 %v1335
        %v1337 = vand.u32 %v1115, 4294901760
        %v1338 = vsub.f32 %v1115, %v1337
        %v1339 = vand.u32 %v1338, 4294901760
        %v1340 = vsub.f32 %v1338, %v1339
        %v1341 = vand.u32 %v1340, 4294901760
        %1342 = vmatpush1.xpose.msra.mxu0 %v1341
        %v1343 = vand.u32 %v1114, 4294901760
        %v1344 = vsub.f32 %v1114, %v1343
        %v1345 = vand.u32 %v1344, 4294901760
        %v1346 = vsub.f32 %v1344, %v1345
        %v1347 = vand.u32 %v1346, 4294901760
        %1348 = vmatprep.subr.mxu0 %v1347
        %v1349 = vand.u32 %v1113, 4294901760
        %v1350 = vsub.f32 %v1113, %v1349
        %v1351 = vand.u32 %v1350, 4294901760
        %v1352 = vsub.f32 %v1350, %v1351
        %v1353 = vand.u32 %v1352, 4294901760
        %1354 = vmatpush1.xpose.msra.mxu0 %v1353
        %v1355 = vand.u32 %v1112, 4294901760
        %v1356 = vsub.f32 %v1112, %v1355
        %v1357 = vand.u32 %v1356, 4294901760
        %v1358 = vsub.f32 %v1356, %v1357
        %v1359 = vand.u32 %v1358, 4294901760
        %1360 = vmatprep.subr.mxu0 %v1359
        %v1361 = vand.u32 %v1111, 4294901760
        %v1362 = vsub.f32 %v1111, %v1361
        %v1363 = vand.u32 %v1362, 4294901760
        %v1364 = vsub.f32 %v1362, %v1363
        %v1365 = vand.u32 %v1364, 4294901760
        %1366 = vmatpush1.xpose.msra.mxu0 %v1365
        %v1367 = vand.u32 %v1110, 4294901760
        %v1368 = vsub.f32 %v1110, %v1367
        %v1369 = vand.u32 %v1368, 4294901760
        %v1370 = vsub.f32 %v1368, %v1369
        %v1371 = vand.u32 %v1370, 4294901760
        %1372 = vmatprep.subr.mxu0 %v1371
        %v1373 = vand.u32 %v1109, 4294901760
        %v1374 = vsub.f32 %v1109, %v1373
        %v1375 = vand.u32 %v1374, 4294901760
        %v1376 = vsub.f32 %v1374, %v1375
        %v1377 = vand.u32 %v1376, 4294901760
        %1378 = vmatpush1.xpose.msra.mxu0 %v1377
        %v1379 = vand.u32 %v1108, 4294901760
        %v1380 = vsub.f32 %v1108, %v1379
        %v1381 = vand.u32 %v1380, 4294901760
        %v1382 = vsub.f32 %v1380, %v1381
        %v1383 = vand.u32 %v1382, 4294901760
        %1384 = vmatprep.subr.mxu0 %v1383
        %v1385 = vand.u32 %v1107, 4294901760
        %v1386 = vsub.f32 %v1107, %v1385
        %v1387 = vand.u32 %v1386, 4294901760
        %v1388 = vsub.f32 %v1386, %v1387
        %v1389 = vand.u32 %v1388, 4294901760
        %1390 = vmatpush1.xpose.msra.mxu0 %v1389
        %v1391 = vand.u32 %v1106, 4294901760
        %v1392 = vsub.f32 %v1106, %v1391
        %v1393 = vand.u32 %v1392, 4294901760
        %v1394 = vsub.f32 %v1392, %v1393
        %v1395 = vand.u32 %v1394, 4294901760
        %1396 = vmatprep.subr.mxu0 %v1395
        %v1397 = vand.u32 %v1105, 4294901760
        %v1398 = vsub.f32 %v1105, %v1397
        %v1399 = vand.u32 %v1398, 4294901760
        %v1400 = vsub.f32 %v1398, %v1399
        %v1401 = vand.u32 %v1400, 4294901760
        %1402 = vmatpush1.xpose.msra.mxu0 %v1401
        %v1403 = vand.u32 %v1104, 4294901760
        %v1404 = vsub.f32 %v1104, %v1403
        %v1405 = vand.u32 %v1404, 4294901760
        %v1406 = vsub.f32 %v1404, %v1405
        %v1407 = vand.u32 %v1406, 4294901760
        %1408 = vmatprep.subr.mxu0 %v1407
        %v1409 = vand.u32 %v1103, 4294901760
        %v1410 = vsub.f32 %v1103, %v1409
        %v1411 = vand.u32 %v1410, 4294901760
        %v1412 = vsub.f32 %v1410, %v1411
        %v1413 = vand.u32 %v1412, 4294901760
        %1414 = vmatpush1.xpose.msra.mxu0 %v1413
        %v1415 = vand.u32 %v1102, 4294901760
        %v1416 = vsub.f32 %v1102, %v1415
        %v1417 = vand.u32 %v1416, 4294901760
        %v1418 = vsub.f32 %v1416, %v1417
        %v1419 = vand.u32 %v1418, 4294901760
        %1420 = vmatprep.subr.mxu0 %v1419
        %v1421 = vand.u32 %v1101, 4294901760
        %v1422 = vsub.f32 %v1101, %v1421
        %v1423 = vand.u32 %v1422, 4294901760
        %v1424 = vsub.f32 %v1422, %v1423
        %v1425 = vand.u32 %v1424, 4294901760
        %1426 = vmatpush1.xpose.msra.mxu0 %v1425
        %1427 = vmatprep.subr.mxu0 0.0
        %1428 = vmatpush2.xpose.msra.mxu0 0.0
        %1429 = vmatprep.subr.mxu0 0.0
        %1430 = vmatpush2.xpose.msra.mxu0 0.0
        %1431 = vmatprep.subr.mxu0 0.0
        %1432 = vmatpush2.xpose.msra.mxu0 0.0
        %1433 = vmatprep.subr.mxu0 0.0
        %1434 = vmatpush2.xpose.msra.mxu0 0.0
        %1435 = vmatprep.subr.mxu0 0.0
        %1436 = vmatpush2.xpose.msra.mxu0 0.0
        %1437 = vmatprep.subr.mxu0 0.0
        %1438 = vmatpush2.xpose.msra.mxu0 0.0
        %1439 = vmatprep.subr.mxu0 0.0
        %1440 = vmatpush2.xpose.msra.mxu0 0.0
        %1441 = vmatprep.subr.mxu0 0.0
        %1442 = vmatpush2.xpose.msra.mxu0 0.0
        %1443 = vmatprep.subr.mxu0 0.0
        %1444 = vmatpush2.xpose.msra.mxu0 0.0
        %1445 = vmatprep.subr.mxu0 0.0
        %1446 = vmatpush2.xpose.msra.mxu0 0.0
        %1447 = vmatprep.subr.mxu0 0.0
        %1448 = vmatpush2.xpose.msra.mxu0 0.0
        %1449 = vmatprep.subr.mxu0 0.0
        %1450 = vmatpush2.xpose.msra.mxu0 0.0
        %1451 = vmatprep.subr.mxu0 0.0
        %1452 = vmatpush2.xpose.msra.mxu0 0.0
        %1453 = vmatprep.subr.mxu0 0.0
        %1454 = vmatpush2.xpose.msra.mxu0 0.0
        %1455 = vmatprep.subr.mxu0 0.0
        %1456 = vmatpush2.xpose.msra.mxu0 0.0
        %1457 = vmatprep.subr.mxu0 0.0
        %1458 = vmatpush2.xpose.msra.mxu0 0.0
        %1459 = vmatprep.mubr.f32.mxu0 1.0
        %1460 = vmatmul.mubr.f32.gmra.mxu0 1.0
        %v1461 = vpop.f32.mrf.mxu0
        %v1462 = vadd.f32 %v1232, %v1461
        %v1463 = vpop.f32.mrf.mxu0
        %1464 = vdwg.mxu0
        %v1465 = vand.u32 %v1132, 4294901760
        %v1466 = vsub.f32 %v1132, %v1465
        %1467 = vmatprep.subr.mxu0 %v1466
        %v1468 = vand.u32 %v1131, 4294901760
        %v1469 = vsub.f32 %v1131, %v1468
        %1470 = vmatpush1.xpose.msra.mxu0 %v1469
        %v1471 = vand.u32 %v1130, 4294901760
        %v1472 = vsub.f32 %v1130, %v1471
        %1473 = vmatprep.subr.mxu0 %v1472
        %v1474 = vand.u32 %v1129, 4294901760
        %v1475 = vsub.f32 %v1129, %v1474
        %1476 = vmatpush1.xpose.msra.mxu0 %v1475
        %v1477 = vand.u32 %v1128, 4294901760
        %v1478 = vsub.f32 %v1128, %v1477
        %1479 = vmatprep.subr.mxu0 %v1478
        %v1480 = vand.u32 %v1127, 4294901760
        %v1481 = vsub.f32 %v1127, %v1480
        %1482 = vmatpush1.xpose.msra.mxu0 %v1481
        %v1483 = vand.u32 %v1126, 4294901760
        %v1484 = vsub.f32 %v1126, %v1483
        %1485 = vmatprep.subr.mxu0 %v1484
        %v1486 = vand.u32 %v1125, 4294901760
        %v1487 = vsub.f32 %v1125, %v1486
        %1488 = vmatpush1.xpose.msra.mxu0 %v1487
        %v1489 = vand.u32 %v1124, 4294901760
        %v1490 = vsub.f32 %v1124, %v1489
        %1491 = vmatprep.subr.mxu0 %v1490
        %v1492 = vand.u32 %v1123, 4294901760
        %v1493 = vsub.f32 %v1123, %v1492
        %1494 = vmatpush1.xpose.msra.mxu0 %v1493
        %v1495 = vand.u32 %v1122, 4294901760
        %v1496 = vsub.f32 %v1122, %v1495
        %1497 = vmatprep.subr.mxu0 %v1496
        %v1498 = vand.u32 %v1121, 4294901760
        %v1499 = vsub.f32 %v1121, %v1498
        %1500 = vmatpush1.xpose.msra.mxu0 %v1499
        %v1501 = vand.u32 %v1120, 4294901760
        %v1502 = vsub.f32 %v1120, %v1501
        %1503 = vmatprep.subr.mxu0 %v1502
        %v1504 = vand.u32 %v1119, 4294901760
        %v1505 = vsub.f32 %v1119, %v1504
        %1506 = vmatpush1.xpose.msra.mxu0 %v1505
        %v1507 = vand.u32 %v1118, 4294901760
        %v1508 = vsub.f32 %v1118, %v1507
        %1509 = vmatprep.subr.mxu0 %v1508
        %v1510 = vand.u32 %v1117, 4294901760
        %v1511 = vsub.f32 %v1117, %v1510
        %1512 = vmatpush1.xpose.msra.mxu0 %v1511
        %v1513 = vand.u32 %v1116, 4294901760
        %v1514 = vsub.f32 %v1116, %v1513
        %1515 = vmatprep.subr.mxu0 %v1514
        %v1516 = vand.u32 %v1115, 4294901760
        %v1517 = vsub.f32 %v1115, %v1516
        %1518 = vmatpush1.xpose.msra.mxu0 %v1517
        %v1519 = vand.u32 %v1114, 4294901760
        %v1520 = vsub.f32 %v1114, %v1519
        %1521 = vmatprep.subr.mxu0 %v1520
        %v1522 = vand.u32 %v1113, 4294901760
        %v1523 = vsub.f32 %v1113, %v1522
        %1524 = vmatpush1.xpose.msra.mxu0 %v1523
        %v1525 = vand.u32 %v1112, 4294901760
        %v1526 = vsub.f32 %v1112, %v1525
        %1527 = vmatprep.subr.mxu0 %v1526
        %v1528 = vand.u32 %v1111, 4294901760
        %v1529 = vsub.f32 %v1111, %v1528
        %1530 = vmatpush1.xpose.msra.mxu0 %v1529
        %v1531 = vand.u32 %v1110, 4294901760
        %v1532 = vsub.f32 %v1110, %v1531
        %1533 = vmatprep.subr.mxu0 %v1532
        %v1534 = vand.u32 %v1109, 4294901760
        %v1535 = vsub.f32 %v1109, %v1534
        %1536 = vmatpush1.xpose.msra.mxu0 %v1535
        %v1537 = vand.u32 %v1108, 4294901760
        %v1538 = vsub.f32 %v1108, %v1537
        %1539 = vmatprep.subr.mxu0 %v1538
        %v1540 = vand.u32 %v1107, 4294901760
        %v1541 = vsub.f32 %v1107, %v1540
        %1542 = vmatpush1.xpose.msra.mxu0 %v1541
        %v1543 = vand.u32 %v1106, 4294901760
        %v1544 = vsub.f32 %v1106, %v1543
        %1545 = vmatprep.subr.mxu0 %v1544
        %v1546 = vand.u32 %v1105, 4294901760
        %v1547 = vsub.f32 %v1105, %v1546
        %1548 = vmatpush1.xpose.msra.mxu0 %v1547
        %v1549 = vand.u32 %v1104, 4294901760
        %v1550 = vsub.f32 %v1104, %v1549
        %1551 = vmatprep.subr.mxu0 %v1550
        %v1552 = vand.u32 %v1103, 4294901760
        %v1553 = vsub.f32 %v1103, %v1552
        %1554 = vmatpush1.xpose.msra.mxu0 %v1553
        %v1555 = vand.u32 %v1102, 4294901760
        %v1556 = vsub.f32 %v1102, %v1555
        %1557 = vmatprep.subr.mxu0 %v1556
        %v1558 = vand.u32 %v1101, 4294901760
        %v1559 = vsub.f32 %v1101, %v1558
        %1560 = vmatpush1.xpose.msra.mxu0 %v1559
        %1561 = vmatprep.subr.mxu0 0.0
        %1562 = vmatpush2.xpose.msra.mxu0 0.0
        %1563 = vmatprep.subr.mxu0 0.0
        %1564 = vmatpush2.xpose.msra.mxu0 0.0
        %1565 = vmatprep.subr.mxu0 0.0
        %1566 = vmatpush2.xpose.msra.mxu0 0.0
        %1567 = vmatprep.subr.mxu0 0.0
        %1568 = vmatpush2.xpose.msra.mxu0 0.0
        %1569 = vmatprep.subr.mxu0 0.0
        %1570 = vmatpush2.xpose.msra.mxu0 0.0
        %1571 = vmatprep.subr.mxu0 0.0
        %1572 = vmatpush2.xpose.msra.mxu0 0.0
        %1573 = vmatprep.subr.mxu0 0.0
        %1574 = vmatpush2.xpose.msra.mxu0 0.0
        %1575 = vmatprep.subr.mxu0 0.0
        %1576 = vmatpush2.xpose.msra.mxu0 0.0
        %1577 = vmatprep.subr.mxu0 0.0
        %1578 = vmatpush2.xpose.msra.mxu0 0.0
        %1579 = vmatprep.subr.mxu0 0.0
        %1580 = vmatpush2.xpose.msra.mxu0 0.0
        %1581 = vmatprep.subr.mxu0 0.0
        %1582 = vmatpush2.xpose.msra.mxu0 0.0
        %1583 = vmatprep.subr.mxu0 0.0
        %1584 = vmatpush2.xpose.msra.mxu0 0.0
        %1585 = vmatprep.subr.mxu0 0.0
        %1586 = vmatpush2.xpose.msra.mxu0 0.0
        %1587 = vmatprep.subr.mxu0 0.0
        %1588 = vmatpush2.xpose.msra.mxu0 0.0
        %1589 = vmatprep.subr.mxu0 0.0
        %1590 = vmatpush2.xpose.msra.mxu0 0.0
        %1591 = vmatprep.subr.mxu0 0.0
        %1592 = vmatpush2.xpose.msra.mxu0 0.0
        %1593 = vmatprep.mubr.f32.mxu0 0.0
        %1594 = vmatmul.mubr.f32.gmra.mxu0 0.0
        %v1595 = vpop.f32.mrf.mxu0
        %v1596 = vadd.f32 %v1462, %v1595
        %v1597 = vpop.f32.mrf.mxu0
        %1598 = vdwg.mxu0
        %v1599 = vand.u32 %v1132, 4294901760
        %1600 = vmatprep.subr.mxu0 %v1599
        %v1601 = vand.u32 %v1131, 4294901760
        %1602 = vmatpush1.xpose.msra.mxu0 %v1601
        %v1603 = vand.u32 %v1130, 4294901760
        %1604 = vmatprep.subr.mxu0 %v1603
        %v1605 = vand.u32 %v1129, 4294901760
        %1606 = vmatpush1.xpose.msra.mxu0 %v1605
        %v1607 = vand.u32 %v1128, 4294901760
        %1608 = vmatprep.subr.mxu0 %v1607
        %v1609 = vand.u32 %v1127, 4294901760
        %1610 = vmatpush1.xpose.msra.mxu0 %v1609
        %v1611 = vand.u32 %v1126, 4294901760
        %1612 = vmatprep.subr.mxu0 %v1611
        %v1613 = vand.u32 %v1125, 4294901760
        %1614 = vmatpush1.xpose.msra.mxu0 %v1613
        %v1615 = vand.u32 %v1124, 4294901760
        %1616 = vmatprep.subr.mxu0 %v1615
        %v1617 = vand.u32 %v1123, 4294901760
        %1618 = vmatpush1.xpose.msra.mxu0 %v1617
        %v1619 = vand.u32 %v1122, 4294901760
        %1620 = vmatprep.subr.mxu0 %v1619
        %v1621 = vand.u32 %v1121, 4294901760
        %1622 = vmatpush1.xpose.msra.mxu0 %v1621
        %v1623 = vand.u32 %v1120, 4294901760
        %1624 = vmatprep.subr.mxu0 %v1623
        %v1625 = vand.u32 %v1119, 4294901760
        %1626 = vmatpush1.xpose.msra.mxu0 %v1625
        %v1627 = vand.u32 %v1118, 4294901760
        %1628 = vmatprep.subr.mxu0 %v1627
        %v1629 = vand.u32 %v1117, 4294901760
        %1630 = vmatpush1.xpose.msra.mxu0 %v1629
        %v1631 = vand.u32 %v1116, 4294901760
        %1632 = vmatprep.subr.mxu0 %v1631
        %v1633 = vand.u32 %v1115, 4294901760
        %1634 = vmatpush1.xpose.msra.mxu0 %v1633
        %v1635 = vand.u32 %v1114, 4294901760
        %1636 = vmatprep.subr.mxu0 %v1635
        %v1637 = vand.u32 %v1113, 4294901760
        %1638 = vmatpush1.xpose.msra.mxu0 %v1637
        %v1639 = vand.u32 %v1112, 4294901760
        %1640 = vmatprep.subr.mxu0 %v1639
        %v1641 = vand.u32 %v1111, 4294901760
        %1642 = vmatpush1.xpose.msra.mxu0 %v1641
        %v1643 = vand.u32 %v1110, 4294901760
        %1644 = vmatprep.subr.mxu0 %v1643
        %v1645 = vand.u32 %v1109, 4294901760
        %1646 = vmatpush1.xpose.msra.mxu0 %v1645
        %v1647 = vand.u32 %v1108, 4294901760
        %1648 = vmatprep.subr.mxu0 %v1647
        %v1649 = vand.u32 %v1107, 4294901760
        %1650 = vmatpush1.xpose.msra.mxu0 %v1649
        %v1651 = vand.u32 %v1106, 4294901760
        %1652 = vmatprep.subr.mxu0 %v1651
        %v1653 = vand.u32 %v1105, 4294901760
        %1654 = vmatpush1.xpose.msra.mxu0 %v1653
        %v1655 = vand.u32 %v1104, 4294901760
        %1656 = vmatprep.subr.mxu0 %v1655
        %v1657 = vand.u32 %v1103, 4294901760
        %1658 = vmatpush1.xpose.msra.mxu0 %v1657
        %v1659 = vand.u32 %v1102, 4294901760
        %1660 = vmatprep.subr.mxu0 %v1659
        %v1661 = vand.u32 %v1101, 4294901760
        %1662 = vmatpush1.xpose.msra.mxu0 %v1661
        %1663 = vmatprep.subr.mxu0 0.0
        %1664 = vmatpush2.xpose.msra.mxu0 0.0
        %1665 = vmatprep.subr.mxu0 0.0
        %1666 = vmatpush2.xpose.msra.mxu0 0.0
        %1667 = vmatprep.subr.mxu0 0.0
        %1668 = vmatpush2.xpose.msra.mxu0 0.0
        %1669 = vmatprep.subr.mxu0 0.0
        %1670 = vmatpush2.xpose.msra.mxu0 0.0
        %1671 = vmatprep.subr.mxu0 0.0
        %1672 = vmatpush2.xpose.msra.mxu0 0.0
        %1673 = vmatprep.subr.mxu0 0.0
        %1674 = vmatpush2.xpose.msra.mxu0 0.0
        %1675 = vmatprep.subr.mxu0 0.0
        %1676 = vmatpush2.xpose.msra.mxu0 0.0
        %1677 = vmatprep.subr.mxu0 0.0
        %1678 = vmatpush2.xpose.msra.mxu0 0.0
        %1679 = vmatprep.subr.mxu0 0.0
        %1680 = vmatpush2.xpose.msra.mxu0 0.0
        %1681 = vmatprep.subr.mxu0 0.0
        %1682 = vmatpush2.xpose.msra.mxu0 0.0
        %1683 = vmatprep.subr.mxu0 0.0
        %1684 = vmatpush2.xpose.msra.mxu0 0.0
        %1685 = vmatprep.subr.mxu0 0.0
        %1686 = vmatpush2.xpose.msra.mxu0 0.0
        %1687 = vmatprep.subr.mxu0 0.0
        %1688 = vmatpush2.xpose.msra.mxu0 0.0
        %1689 = vmatprep.subr.mxu0 0.0
        %1690 = vmatpush2.xpose.msra.mxu0 0.0
        %1691 = vmatprep.subr.mxu0 0.0
        %1692 = vmatpush2.xpose.msra.mxu0 0.0
        %1693 = vmatprep.subr.mxu0 0.0
        %1694 = vmatpush2.xpose.msra.mxu0 0.0
        %1695 = vmatprep.mubr.f32.mxu0 0.0
        %1696 = vmatmul.mubr.f32.gmra.mxu0 0.0
        %v1697 = vpop.f32.mrf.mxu0
        %v1698 = vadd.f32 %v1596, %v1697
        %v1699 = vpop.f32.mrf.mxu0
        %1700 = vdwg.mxu0
        %v1701 = vand.u32 %v1132, 4294901760
        %v1702 = vsub.f32 %v1132, %v1701
        %v1703 = vand.u32 %v1702, 4294901760
        %1704 = vmatprep.subr.mxu0 %v1703
        %v1705 = vand.u32 %v1131, 4294901760
        %v1706 = vsub.f32 %v1131, %v1705
        %v1707 = vand.u32 %v1706, 4294901760
        %1708 = vmatpush1.xpose.msra.mxu0 %v1707
        %v1709 = vand.u32 %v1130, 4294901760
        %v1710 = vsub.f32 %v1130, %v1709
        %v1711 = vand.u32 %v1710, 4294901760
        %1712 = vmatprep.subr.mxu0 %v1711
        %v1713 = vand.u32 %v1129, 4294901760
        %v1714 = vsub.f32 %v1129, %v1713
        %v1715 = vand.u32 %v1714, 4294901760
        %1716 = vmatpush1.xpose.msra.mxu0 %v1715
        %v1717 = vand.u32 %v1128, 4294901760
        %v1718 = vsub.f32 %v1128, %v1717
        %v1719 = vand.u32 %v1718, 4294901760
        %1720 = vmatprep.subr.mxu0 %v1719
        %v1721 = vand.u32 %v1127, 4294901760
        %v1722 = vsub.f32 %v1127, %v1721
        %v1723 = vand.u32 %v1722, 4294901760
        %1724 = vmatpush1.xpose.msra.mxu0 %v1723
        %v1725 = vand.u32 %v1126, 4294901760
        %v1726 = vsub.f32 %v1126, %v1725
        %v1727 = vand.u32 %v1726, 4294901760
        %1728 = vmatprep.subr.mxu0 %v1727
        %v1729 = vand.u32 %v1125, 4294901760
        %v1730 = vsub.f32 %v1125, %v1729
        %v1731 = vand.u32 %v1730, 4294901760
        %1732 = vmatpush1.xpose.msra.mxu0 %v1731
        %v1733 = vand.u32 %v1124, 4294901760
        %v1734 = vsub.f32 %v1124, %v1733
        %v1735 = vand.u32 %v1734, 4294901760
        %1736 = vmatprep.subr.mxu0 %v1735
        %v1737 = vand.u32 %v1123, 4294901760
        %v1738 = vsub.f32 %v1123, %v1737
        %v1739 = vand.u32 %v1738, 4294901760
        %1740 = vmatpush1.xpose.msra.mxu0 %v1739
        %v1741 = vand.u32 %v1122, 4294901760
        %v1742 = vsub.f32 %v1122, %v1741
        %v1743 = vand.u32 %v1742, 4294901760
        %1744 = vmatprep.subr.mxu0 %v1743
        %v1745 = vand.u32 %v1121, 4294901760
        %v1746 = vsub.f32 %v1121, %v1745
        %v1747 = vand.u32 %v1746, 4294901760
        %1748 = vmatpush1.xpose.msra.mxu0 %v1747
        %v1749 = vand.u32 %v1120, 4294901760
        %v1750 = vsub.f32 %v1120, %v1749
        %v1751 = vand.u32 %v1750, 4294901760
        %1752 = vmatprep.subr.mxu0 %v1751
        %v1753 = vand.u32 %v1119, 4294901760
        %v1754 = vsub.f32 %v1119, %v1753
        %v1755 = vand.u32 %v1754, 4294901760
        %1756 = vmatpush1.xpose.msra.mxu0 %v1755
        %v1757 = vand.u32 %v1118, 4294901760
        %v1758 = vsub.f32 %v1118, %v1757
        %v1759 = vand.u32 %v1758, 4294901760
        %1760 = vmatprep.subr.mxu0 %v1759
        %v1761 = vand.u32 %v1117, 4294901760
        %v1762 = vsub.f32 %v1117, %v1761
        %v1763 = vand.u32 %v1762, 4294901760
        %1764 = vmatpush1.xpose.msra.mxu0 %v1763
        %v1765 = vand.u32 %v1116, 4294901760
        %v1766 = vsub.f32 %v1116, %v1765
        %v1767 = vand.u32 %v1766, 4294901760
        %1768 = vmatprep.subr.mxu0 %v1767
        %v1769 = vand.u32 %v1115, 4294901760
        %v1770 = vsub.f32 %v1115, %v1769
        %v1771 = vand.u32 %v1770, 4294901760
        %1772 = vmatpush1.xpose.msra.mxu0 %v1771
        %v1773 = vand.u32 %v1114, 4294901760
        %v1774 = vsub.f32 %v1114, %v1773
        %v1775 = vand.u32 %v1774, 4294901760
        %1776 = vmatprep.subr.mxu0 %v1775
        %v1777 = vand.u32 %v1113, 4294901760
        %v1778 = vsub.f32 %v1113, %v1777
        %v1779 = vand.u32 %v1778, 4294901760
        %1780 = vmatpush1.xpose.msra.mxu0 %v1779
        %v1781 = vand.u32 %v1112, 4294901760
        %v1782 = vsub.f32 %v1112, %v1781
        %v1783 = vand.u32 %v1782, 4294901760
        %1784 = vmatprep.subr.mxu0 %v1783
        %v1785 = vand.u32 %v1111, 4294901760
        %v1786 = vsub.f32 %v1111, %v1785
        %v1787 = vand.u32 %v1786, 4294901760
        %1788 = vmatpush1.xpose.msra.mxu0 %v1787
        %v1789 = vand.u32 %v1110, 4294901760
        %v1790 = vsub.f32 %v1110, %v1789
        %v1791 = vand.u32 %v1790, 4294901760
        %1792 = vmatprep.subr.mxu0 %v1791
        %v1793 = vand.u32 %v1109, 4294901760
        %v1794 = vsub.f32 %v1109, %v1793
        %v1795 = vand.u32 %v1794, 4294901760
        %1796 = vmatpush1.xpose.msra.mxu0 %v1795
        %v1797 = vand.u32 %v1108, 4294901760
        %v1798 = vsub.f32 %v1108, %v1797
        %v1799 = vand.u32 %v1798, 4294901760
        %1800 = vmatprep.subr.mxu0 %v1799
        %v1801 = vand.u32 %v1107, 4294901760
        %v1802 = vsub.f32 %v1107, %v1801
        %v1803 = vand.u32 %v1802, 4294901760
        %1804 = vmatpush1.xpose.msra.mxu0 %v1803
        %v1805 = vand.u32 %v1106, 4294901760
        %v1806 = vsub.f32 %v1106, %v1805
        %v1807 = vand.u32 %v1806, 4294901760
        %1808 = vmatprep.subr.mxu0 %v1807
        %v1809 = vand.u32 %v1105, 4294901760
        %v1810 = vsub.f32 %v1105, %v1809
        %v1811 = vand.u32 %v1810, 4294901760
        %1812 = vmatpush1.xpose.msra.mxu0 %v1811
        %v1813 = vand.u32 %v1104, 4294901760
        %v1814 = vsub.f32 %v1104, %v1813
        %v1815 = vand.u32 %v1814, 4294901760
        %1816 = vmatprep.subr.mxu0 %v1815
        %v1817 = vand.u32 %v1103, 4294901760
        %v1818 = vsub.f32 %v1103, %v1817
        %v1819 = vand.u32 %v1818, 4294901760
        %1820 = vmatpush1.xpose.msra.mxu0 %v1819
        %v1821 = vand.u32 %v1102, 4294901760
        %v1822 = vsub.f32 %v1102, %v1821
        %v1823 = vand.u32 %v1822, 4294901760
        %1824 = vmatprep.subr.mxu0 %v1823
        %v1825 = vand.u32 %v1101, 4294901760
        %v1826 = vsub.f32 %v1101, %v1825
        %v1827 = vand.u32 %v1826, 4294901760
        %1828 = vmatpush1.xpose.msra.mxu0 %v1827
        %1829 = vmatprep.subr.mxu0 0.0
        %1830 = vmatpush2.xpose.msra.mxu0 0.0
        %1831 = vmatprep.subr.mxu0 0.0
        %1832 = vmatpush2.xpose.msra.mxu0 0.0
        %1833 = vmatprep.subr.mxu0 0.0
        %1834 = vmatpush2.xpose.msra.mxu0 0.0
        %1835 = vmatprep.subr.mxu0 0.0
        %1836 = vmatpush2.xpose.msra.mxu0 0.0
        %1837 = vmatprep.subr.mxu0 0.0
        %1838 = vmatpush2.xpose.msra.mxu0 0.0
        %1839 = vmatprep.subr.mxu0 0.0
        %1840 = vmatpush2.xpose.msra.mxu0 0.0
        %1841 = vmatprep.subr.mxu0 0.0
        %1842 = vmatpush2.xpose.msra.mxu0 0.0
        %1843 = vmatprep.subr.mxu0 0.0
        %1844 = vmatpush2.xpose.msra.mxu0 0.0
        %1845 = vmatprep.subr.mxu0 0.0
        %1846 = vmatpush2.xpose.msra.mxu0 0.0
        %1847 = vmatprep.subr.mxu0 0.0
        %1848 = vmatpush2.xpose.msra.mxu0 0.0
        %1849 = vmatprep.subr.mxu0 0.0
        %1850 = vmatpush2.xpose.msra.mxu0 0.0
        %1851 = vmatprep.subr.mxu0 0.0
        %1852 = vmatpush2.xpose.msra.mxu0 0.0
        %1853 = vmatprep.subr.mxu0 0.0
        %1854 = vmatpush2.xpose.msra.mxu0 0.0
        %1855 = vmatprep.subr.mxu0 0.0
        %1856 = vmatpush2.xpose.msra.mxu0 0.0
        %1857 = vmatprep.subr.mxu0 0.0
        %1858 = vmatpush2.xpose.msra.mxu0 0.0
        %1859 = vmatprep.subr.mxu0 0.0
        %1860 = vmatpush2.xpose.msra.mxu0 0.0
        %1861 = vmatprep.mubr.f32.mxu0 1.0
        %1862 = vmatmul.mubr.f32.gmra.mxu0 1.0
        %v1863 = vpop.f32.mrf.mxu0
        %v1864 = vadd.f32 %v1698, %v1863
        %v1865 = vpop.f32.mrf.mxu0
        %1866 = vdwg.mxu0
        %v1867 = vand.u32 %v1132, 4294901760
        %1868 = vmatprep.subr.mxu0 %v1867
        %v1869 = vand.u32 %v1131, 4294901760
        %1870 = vmatpush1.xpose.msra.mxu0 %v1869
        %v1871 = vand.u32 %v1130, 4294901760
        %1872 = vmatprep.subr.mxu0 %v1871
        %v1873 = vand.u32 %v1129, 4294901760
        %1874 = vmatpush1.xpose.msra.mxu0 %v1873
        %v1875 = vand.u32 %v1128, 4294901760
        %1876 = vmatprep.subr.mxu0 %v1875
        %v1877 = vand.u32 %v1127, 4294901760
        %1878 = vmatpush1.xpose.msra.mxu0 %v1877
        %v1879 = vand.u32 %v1126, 4294901760
        %1880 = vmatprep.subr.mxu0 %v1879
        %v1881 = vand.u32 %v1125, 4294901760
        %1882 = vmatpush1.xpose.msra.mxu0 %v1881
        %v1883 = vand.u32 %v1124, 4294901760
        %1884 = vmatprep.subr.mxu0 %v1883
        %v1885 = vand.u32 %v1123, 4294901760
        %1886 = vmatpush1.xpose.msra.mxu0 %v1885
        %v1887 = vand.u32 %v1122, 4294901760
        %1888 = vmatprep.subr.mxu0 %v1887
        %v1889 = vand.u32 %v1121, 4294901760
        %1890 = vmatpush1.xpose.msra.mxu0 %v1889
        %v1891 = vand.u32 %v1120, 4294901760
        %1892 = vmatprep.subr.mxu0 %v1891
        %v1893 = vand.u32 %v1119, 4294901760
        %1894 = vmatpush1.xpose.msra.mxu0 %v1893
        %v1895 = vand.u32 %v1118, 4294901760
        %1896 = vmatprep.subr.mxu0 %v1895
        %v1897 = vand.u32 %v1117, 4294901760
        %1898 = vmatpush1.xpose.msra.mxu0 %v1897
        %v1899 = vand.u32 %v1116, 4294901760
        %1900 = vmatprep.subr.mxu0 %v1899
        %v1901 = vand.u32 %v1115, 4294901760
        %1902 = vmatpush1.xpose.msra.mxu0 %v1901
        %v1903 = vand.u32 %v1114, 4294901760
        %1904 = vmatprep.subr.mxu0 %v1903
        %v1905 = vand.u32 %v1113, 4294901760
        %1906 = vmatpush1.xpose.msra.mxu0 %v1905
        %v1907 = vand.u32 %v1112, 4294901760
        %1908 = vmatprep.subr.mxu0 %v1907
        %v1909 = vand.u32 %v1111, 4294901760
        %1910 = vmatpush1.xpose.msra.mxu0 %v1909
        %v1911 = vand.u32 %v1110, 4294901760
        %1912 = vmatprep.subr.mxu0 %v1911
        %v1913 = vand.u32 %v1109, 4294901760
        %1914 = vmatpush1.xpose.msra.mxu0 %v1913
        %v1915 = vand.u32 %v1108, 4294901760
        %1916 = vmatprep.subr.mxu0 %v1915
        %v1917 = vand.u32 %v1107, 4294901760
        %1918 = vmatpush1.xpose.msra.mxu0 %v1917
        %v1919 = vand.u32 %v1106, 4294901760
        %1920 = vmatprep.subr.mxu0 %v1919
        %v1921 = vand.u32 %v1105, 4294901760
        %1922 = vmatpush1.xpose.msra.mxu0 %v1921
        %v1923 = vand.u32 %v1104, 4294901760
        %1924 = vmatprep.subr.mxu0 %v1923
        %v1925 = vand.u32 %v1103, 4294901760
        %1926 = vmatpush1.xpose.msra.mxu0 %v1925
        %v1927 = vand.u32 %v1102, 4294901760
        %1928 = vmatprep.subr.mxu0 %v1927
        %v1929 = vand.u32 %v1101, 4294901760
        %1930 = vmatpush1.xpose.msra.mxu0 %v1929
        %1931 = vmatprep.subr.mxu0 0.0
        %1932 = vmatpush2.xpose.msra.mxu0 0.0
        %1933 = vmatprep.subr.mxu0 0.0
        %1934 = vmatpush2.xpose.msra.mxu0 0.0
        %1935 = vmatprep.subr.mxu0 0.0
        %1936 = vmatpush2.xpose.msra.mxu0 0.0
        %1937 = vmatprep.subr.mxu0 0.0
        %1938 = vmatpush2.xpose.msra.mxu0 0.0
        %1939 = vmatprep.subr.mxu0 0.0
        %1940 = vmatpush2.xpose.msra.mxu0 0.0
        %1941 = vmatprep.subr.mxu0 0.0
        %1942 = vmatpush2.xpose.msra.mxu0 0.0
        %1943 = vmatprep.subr.mxu0 0.0
        %1944 = vmatpush2.xpose.msra.mxu0 0.0
        %1945 = vmatprep.subr.mxu0 0.0
        %1946 = vmatpush2.xpose.msra.mxu0 0.0
        %1947 = vmatprep.subr.mxu0 0.0
        %1948 = vmatpush2.xpose.msra.mxu0 0.0
        %1949 = vmatprep.subr.mxu0 0.0
        %1950 = vmatpush2.xpose.msra.mxu0 0.0
        %1951 = vmatprep.subr.mxu0 0.0
        %1952 = vmatpush2.xpose.msra.mxu0 0.0
        %1953 = vmatprep.subr.mxu0 0.0
        %1954 = vmatpush2.xpose.msra.mxu0 0.0
        %1955 = vmatprep.subr.mxu0 0.0
        %1956 = vmatpush2.xpose.msra.mxu0 0.0
        %1957 = vmatprep.subr.mxu0 0.0
        %1958 = vmatpush2.xpose.msra.mxu0 0.0
        %1959 = vmatprep.subr.mxu0 0.0
        %1960 = vmatpush2.xpose.msra.mxu0 0.0
        %1961 = vmatprep.subr.mxu0 0.0
        %1962 = vmatpush2.xpose.msra.mxu0 0.0
        %1963 = vmatprep.mubr.f32.mxu0 1.0
        %1964 = vmatmul.mubr.f32.gmra.mxu0 1.0
        %v1965 = vpop.f32.mrf.mxu0
        %v1966 = vadd.f32 %v1864, %v1965
        %v1967 = vpop.f32.mrf.mxu0
        %1968 = vdwg.mxu0
        %v1969 = vand.u32 %v244, 4294901760
        %1970 = vmatprep.subr.mxu0 %v1969
        %v1971 = vand.u32 %v243, 4294901760
        %1972 = vmatpush1.xpose.msra.mxu0 %v1971
        %v1973 = vand.u32 %v242, 4294901760
        %1974 = vmatprep.subr.mxu0 %v1973
        %v1975 = vand.u32 %v241, 4294901760
        %1976 = vmatpush1.xpose.msra.mxu0 %v1975
        %v1977 = vand.u32 %v240, 4294901760
        %1978 = vmatprep.subr.mxu0 %v1977
        %v1979 = vand.u32 %v239, 4294901760
        %1980 = vmatpush1.xpose.msra.mxu0 %v1979
        %v1981 = vand.u32 %v238, 4294901760
        %1982 = vmatprep.subr.mxu0 %v1981
        %v1983 = vand.u32 %v237, 4294901760
        %1984 = vmatpush1.xpose.msra.mxu0 %v1983
        %v1985 = vand.u32 %v236, 4294901760
        %1986 = vmatprep.subr.mxu0 %v1985
        %v1987 = vand.u32 %v235, 4294901760
        %1988 = vmatpush1.xpose.msra.mxu0 %v1987
        %v1989 = vand.u32 %v234, 4294901760
        %1990 = vmatprep.subr.mxu0 %v1989
        %v1991 = vand.u32 %v233, 4294901760
        %1992 = vmatpush1.xpose.msra.mxu0 %v1991
        %v1993 = vand.u32 %v232, 4294901760
        %1994 = vmatprep.subr.mxu0 %v1993
        %v1995 = vand.u32 %v231, 4294901760
        %1996 = vmatpush1.xpose.msra.mxu0 %v1995
        %v1997 = vand.u32 %v230, 4294901760
        %1998 = vmatprep.subr.mxu0 %v1997
        %v1999 = vand.u32 %v229, 4294901760
        %2000 = vmatpush1.xpose.msra.mxu0 %v1999
        %v2001 = vand.u32 %v228, 4294901760
        %2002 = vmatprep.subr.mxu0 %v2001
        %v2003 = vand.u32 %v227, 4294901760
        %2004 = vmatpush1.xpose.msra.mxu0 %v2003
        %v2005 = vand.u32 %v226, 4294901760
        %2006 = vmatprep.subr.mxu0 %v2005
        %v2007 = vand.u32 %v225, 4294901760
        %2008 = vmatpush1.xpose.msra.mxu0 %v2007
        %v2009 = vand.u32 %v224, 4294901760
        %2010 = vmatprep.subr.mxu0 %v2009
        %v2011 = vand.u32 %v223, 4294901760
        %2012 = vmatpush1.xpose.msra.mxu0 %v2011
        %v2013 = vand.u32 %v222, 4294901760
        %2014 = vmatprep.subr.mxu0 %v2013
        %v2015 = vand.u32 %v221, 4294901760
        %2016 = vmatpush1.xpose.msra.mxu0 %v2015
        %v2017 = vand.u32 %v220, 4294901760
        %2018 = vmatprep.subr.mxu0 %v2017
        %v2019 = vand.u32 %v219, 4294901760
        %2020 = vmatpush1.xpose.msra.mxu0 %v2019
        %v2021 = vand.u32 %v218, 4294901760
        %2022 = vmatprep.subr.mxu0 %v2021
        %v2023 = vand.u32 %v217, 4294901760
        %2024 = vmatpush1.xpose.msra.mxu0 %v2023
        %v2025 = vand.u32 %v216, 4294901760
        %2026 = vmatprep.subr.mxu0 %v2025
        %v2027 = vand.u32 %v215, 4294901760
        %2028 = vmatpush1.xpose.msra.mxu0 %v2027
        %v2029 = vand.u32 %v214, 4294901760
        %2030 = vmatprep.subr.mxu0 %v2029
        %v2031 = vand.u32 %v213, 4294901760
        %2032 = vmatpush1.xpose.msra.mxu0 %v2031
        %2033 = vmatprep.subr.mxu0 0.0
        %2034 = vmatpush2.xpose.msra.mxu0 0.0
        %2035 = vmatprep.subr.mxu0 0.0
        %2036 = vmatpush2.xpose.msra.mxu0 0.0
        %2037 = vmatprep.subr.mxu0 0.0
        %2038 = vmatpush2.xpose.msra.mxu0 0.0
        %2039 = vmatprep.subr.mxu0 0.0
        %2040 = vmatpush2.xpose.msra.mxu0 0.0
        %2041 = vmatprep.subr.mxu0 0.0
        %2042 = vmatpush2.xpose.msra.mxu0 0.0
        %2043 = vmatprep.subr.mxu0 0.0
        %2044 = vmatpush2.xpose.msra.mxu0 0.0
        %2045 = vmatprep.subr.mxu0 0.0
        %2046 = vmatpush2.xpose.msra.mxu0 0.0
        %2047 = vmatprep.subr.mxu0 0.0
        %2048 = vmatpush2.xpose.msra.mxu0 0.0
        %2049 = vmatprep.subr.mxu0 0.0
        %2050 = vmatpush2.xpose.msra.mxu0 0.0
        %2051 = vmatprep.subr.mxu0 0.0
        %2052 = vmatpush2.xpose.msra.mxu0 0.0
        %2053 = vmatprep.subr.mxu0 0.0
        %2054 = vmatpush2.xpose.msra.mxu0 0.0
        %2055 = vmatprep.subr.mxu0 0.0
        %2056 = vmatpush2.xpose.msra.mxu0 0.0
        %2057 = vmatprep.subr.mxu0 0.0
        %2058 = vmatpush2.xpose.msra.mxu0 0.0
        %2059 = vmatprep.subr.mxu0 0.0
        %2060 = vmatpush2.xpose.msra.mxu0 0.0
        %2061 = vmatprep.subr.mxu0 0.0
        %2062 = vmatpush2.xpose.msra.mxu0 0.0
        %2063 = vmatprep.subr.mxu0 0.0
        %2064 = vmatpush2.xpose.msra.mxu0 0.0
        %v2065 = vand.u32 %v1099, 4294901760
        %v2066 = vsub.f32 %v1099, %v2065
        %v2067 = vand.u32 %v2066, 4294901760
        %v2068 = vsub.f32 %v2066, %v2067
        %v2069 = vand.u32 %v2068, 4294901760
        %2070 = vmatprep.mubr.f32.mxu0 %v2069
        %v2071 = vand.u32 %v1097, 4294901760
        %v2072 = vsub.f32 %v1097, %v2071
        %v2073 = vand.u32 %v2072, 4294901760
        %v2074 = vsub.f32 %v2072, %v2073
        %v2075 = vand.u32 %v2074, 4294901760
        %2076 = vmatmul.mubr.f32.gmra.mxu0 %v2075
        %v2077 = vpop.f32.mrf.mxu0
        %v2078 = vadd.f32 0.0, %v2077
        %v2079 = vpop.f32.mrf.mxu0
        %2080 = vdwg.mxu0
        %v2081 = vand.u32 %v244, 4294901760
        %v2082 = vsub.f32 %v244, %v2081
        %v2083 = vand.u32 %v2082, 4294901760
        %v2084 = vsub.f32 %v2082, %v2083
        %v2085 = vand.u32 %v2084, 4294901760
        %2086 = vmatprep.subr.mxu0 %v2085
        %v2087 = vand.u32 %v243, 4294901760
        %v2088 = vsub.f32 %v243, %v2087
        %v2089 = vand.u32 %v2088, 4294901760
        %v2090 = vsub.f32 %v2088, %v2089
        %v2091 = vand.u32 %v2090, 4294901760
        %2092 = vmatpush1.xpose.msra.mxu0 %v2091
        %v2093 = vand.u32 %v242, 4294901760
        %v2094 = vsub.f32 %v242, %v2093
        %v2095 = vand.u32 %v2094, 4294901760
        %v2096 = vsub.f32 %v2094, %v2095
        %v2097 = vand.u32 %v2096, 4294901760
        %2098 = vmatprep.subr.mxu0 %v2097
        %v2099 = vand.u32 %v241, 4294901760
        %v2100 = vsub.f32 %v241, %v2099
        %v2101 = vand.u32 %v2100, 4294901760
        %v2102 = vsub.f32 %v2100, %v2101
        %v2103 = vand.u32 %v2102, 4294901760
        %2104 = vmatpush1.xpose.msra.mxu0 %v2103
        %v2105 = vand.u32 %v240, 4294901760
        %v2106 = vsub.f32 %v240, %v2105
        %v2107 = vand.u32 %v2106, 4294901760
        %v2108 = vsub.f32 %v2106, %v2107
        %v2109 = vand.u32 %v2108, 4294901760
        %2110 = vmatprep.subr.mxu0 %v2109
        %v2111 = vand.u32 %v239, 4294901760
        %v2112 = vsub.f32 %v239, %v2111
        %v2113 = vand.u32 %v2112, 4294901760
        %v2114 = vsub.f32 %v2112, %v2113
        %v2115 = vand.u32 %v2114, 4294901760
        %2116 = vmatpush1.xpose.msra.mxu0 %v2115
        %v2117 = vand.u32 %v238, 4294901760
        %v2118 = vsub.f32 %v238, %v2117
        %v2119 = vand.u32 %v2118, 4294901760
        %v2120 = vsub.f32 %v2118, %v2119
        %v2121 = vand.u32 %v2120, 4294901760
        %2122 = vmatprep.subr.mxu0 %v2121
        %v2123 = vand.u32 %v237, 4294901760
        %v2124 = vsub.f32 %v237, %v2123
        %v2125 = vand.u32 %v2124, 4294901760
        %v2126 = vsub.f32 %v2124, %v2125
        %v2127 = vand.u32 %v2126, 4294901760
        %2128 = vmatpush1.xpose.msra.mxu0 %v2127
        %v2129 = vand.u32 %v236, 4294901760
        %v2130 = vsub.f32 %v236, %v2129
        %v2131 = vand.u32 %v2130, 4294901760
        %v2132 = vsub.f32 %v2130, %v2131
        %v2133 = vand.u32 %v2132, 4294901760
        %2134 = vmatprep.subr.mxu0 %v2133
        %v2135 = vand.u32 %v235, 4294901760
        %v2136 = vsub.f32 %v235, %v2135
        %v2137 = vand.u32 %v2136, 4294901760
        %v2138 = vsub.f32 %v2136, %v2137
        %v2139 = vand.u32 %v2138, 4294901760
        %2140 = vmatpush1.xpose.msra.mxu0 %v2139
        %v2141 = vand.u32 %v234, 4294901760
        %v2142 = vsub.f32 %v234, %v2141
        %v2143 = vand.u32 %v2142, 4294901760
        %v2144 = vsub.f32 %v2142, %v2143
        %v2145 = vand.u32 %v2144, 4294901760
        %2146 = vmatprep.subr.mxu0 %v2145
        %v2147 = vand.u32 %v233, 4294901760
        %v2148 = vsub.f32 %v233, %v2147
        %v2149 = vand.u32 %v2148, 4294901760
        %v2150 = vsub.f32 %v2148, %v2149
        %v2151 = vand.u32 %v2150, 4294901760
        %2152 = vmatpush1.xpose.msra.mxu0 %v2151
        %v2153 = vand.u32 %v232, 4294901760
        %v2154 = vsub.f32 %v232, %v2153
        %v2155 = vand.u32 %v2154, 4294901760
        %v2156 = vsub.f32 %v2154, %v2155
        %v2157 = vand.u32 %v2156, 4294901760
        %2158 = vmatprep.subr.mxu0 %v2157
        %v2159 = vand.u32 %v231, 4294901760
        %v2160 = vsub.f32 %v231, %v2159
        %v2161 = vand.u32 %v2160, 4294901760
        %v2162 = vsub.f32 %v2160, %v2161
        %v2163 = vand.u32 %v2162, 4294901760
        %2164 = vmatpush1.xpose.msra.mxu0 %v2163
        %v2165 = vand.u32 %v230, 4294901760
        %v2166 = vsub.f32 %v230, %v2165
        %v2167 = vand.u32 %v2166, 4294901760
        %v2168 = vsub.f32 %v2166, %v2167
        %v2169 = vand.u32 %v2168, 4294901760
        %2170 = vmatprep.subr.mxu0 %v2169
        %v2171 = vand.u32 %v229, 4294901760
        %v2172 = vsub.f32 %v229, %v2171
        %v2173 = vand.u32 %v2172, 4294901760
        %v2174 = vsub.f32 %v2172, %v2173
        %v2175 = vand.u32 %v2174, 4294901760
        %2176 = vmatpush1.xpose.msra.mxu0 %v2175
        %v2177 = vand.u32 %v228, 4294901760
        %v2178 = vsub.f32 %v228, %v2177
        %v2179 = vand.u32 %v2178, 4294901760
        %v2180 = vsub.f32 %v2178, %v2179
        %v2181 = vand.u32 %v2180, 4294901760
        %2182 = vmatprep.subr.mxu0 %v2181
        %v2183 = vand.u32 %v227, 4294901760
        %v2184 = vsub.f32 %v227, %v2183
        %v2185 = vand.u32 %v2184, 4294901760
        %v2186 = vsub.f32 %v2184, %v2185
        %v2187 = vand.u32 %v2186, 4294901760
        %2188 = vmatpush1.xpose.msra.mxu0 %v2187
        %v2189 = vand.u32 %v226, 4294901760
        %v2190 = vsub.f32 %v226, %v2189
        %v2191 = vand.u32 %v2190, 4294901760
        %v2192 = vsub.f32 %v2190, %v2191
        %v2193 = vand.u32 %v2192, 4294901760
        %2194 = vmatprep.subr.mxu0 %v2193
        %v2195 = vand.u32 %v225, 4294901760
        %v2196 = vsub.f32 %v225, %v2195
        %v2197 = vand.u32 %v2196, 4294901760
        %v2198 = vsub.f32 %v2196, %v2197
        %v2199 = vand.u32 %v2198, 4294901760
        %2200 = vmatpush1.xpose.msra.mxu0 %v2199
        %v2201 = vand.u32 %v224, 4294901760
        %v2202 = vsub.f32 %v224, %v2201
        %v2203 = vand.u32 %v2202, 4294901760
        %v2204 = vsub.f32 %v2202, %v2203
        %v2205 = vand.u32 %v2204, 4294901760
        %2206 = vmatprep.subr.mxu0 %v2205
        %v2207 = vand.u32 %v223, 4294901760
        %v2208 = vsub.f32 %v223, %v2207
        %v2209 = vand.u32 %v2208, 4294901760
        %v2210 = vsub.f32 %v2208, %v2209
        %v2211 = vand.u32 %v2210, 4294901760
        %2212 = vmatpush1.xpose.msra.mxu0 %v2211
        %v2213 = vand.u32 %v222, 4294901760
        %v2214 = vsub.f32 %v222, %v2213
        %v2215 = vand.u32 %v2214, 4294901760
        %v2216 = vsub.f32 %v2214, %v2215
        %v2217 = vand.u32 %v2216, 4294901760
        %2218 = vmatprep.subr.mxu0 %v2217
        %v2219 = vand.u32 %v221, 4294901760
        %v2220 = vsub.f32 %v221, %v2219
        %v2221 = vand.u32 %v2220, 4294901760
        %v2222 = vsub.f32 %v2220, %v2221
        %v2223 = vand.u32 %v2222, 4294901760
        %2224 = vmatpush1.xpose.msra.mxu0 %v2223
        %v2225 = vand.u32 %v220, 4294901760
        %v2226 = vsub.f32 %v220, %v2225
        %v2227 = vand.u32 %v2226, 4294901760
        %v2228 = vsub.f32 %v2226, %v2227
        %v2229 = vand.u32 %v2228, 4294901760
        %2230 = vmatprep.subr.mxu0 %v2229
        %v2231 = vand.u32 %v219, 4294901760
        %v2232 = vsub.f32 %v219, %v2231
        %v2233 = vand.u32 %v2232, 4294901760
        %v2234 = vsub.f32 %v2232, %v2233
        %v2235 = vand.u32 %v2234, 4294901760
        %2236 = vmatpush1.xpose.msra.mxu0 %v2235
        %v2237 = vand.u32 %v218, 4294901760
        %v2238 = vsub.f32 %v218, %v2237
        %v2239 = vand.u32 %v2238, 4294901760
        %v2240 = vsub.f32 %v2238, %v2239
        %v2241 = vand.u32 %v2240, 4294901760
        %2242 = vmatprep.subr.mxu0 %v2241
        %v2243 = vand.u32 %v217, 4294901760
        %v2244 = vsub.f32 %v217, %v2243
        %v2245 = vand.u32 %v2244, 4294901760
        %v2246 = vsub.f32 %v2244, %v2245
        %v2247 = vand.u32 %v2246, 4294901760
        %2248 = vmatpush1.xpose.msra.mxu0 %v2247
        %v2249 = vand.u32 %v216, 4294901760
        %v2250 = vsub.f32 %v216, %v2249
        %v2251 = vand.u32 %v2250, 4294901760
        %v2252 = vsub.f32 %v2250, %v2251
        %v2253 = vand.u32 %v2252, 4294901760
        %2254 = vmatprep.subr.mxu0 %v2253
        %v2255 = vand.u32 %v215, 4294901760
        %v2256 = vsub.f32 %v215, %v2255
        %v2257 = vand.u32 %v2256, 4294901760
        %v2258 = vsub.f32 %v2256, %v2257
        %v2259 = vand.u32 %v2258, 4294901760
        %2260 = vmatpush1.xpose.msra.mxu0 %v2259
        %v2261 = vand.u32 %v214, 4294901760
        %v2262 = vsub.f32 %v214, %v2261
        %v2263 = vand.u32 %v2262, 4294901760
        %v2264 = vsub.f32 %v2262, %v2263
        %v2265 = vand.u32 %v2264, 4294901760
        %2266 = vmatprep.subr.mxu0 %v2265
        %v2267 = vand.u32 %v213, 4294901760
        %v2268 = vsub.f32 %v213, %v2267
        %v2269 = vand.u32 %v2268, 4294901760
        %v2270 = vsub.f32 %v2268, %v2269
        %v2271 = vand.u32 %v2270, 4294901760
        %2272 = vmatpush1.xpose.msra.mxu0 %v2271
        %2273 = vmatprep.subr.mxu0 0.0
        %2274 = vmatpush2.xpose.msra.mxu0 0.0
        %2275 = vmatprep.subr.mxu0 0.0
        %2276 = vmatpush2.xpose.msra.mxu0 0.0
        %2277 = vmatprep.subr.mxu0 0.0
        %2278 = vmatpush2.xpose.msra.mxu0 0.0
        %2279 = vmatprep.subr.mxu0 0.0
        %2280 = vmatpush2.xpose.msra.mxu0 0.0
        %2281 = vmatprep.subr.mxu0 0.0
        %2282 = vmatpush2.xpose.msra.mxu0 0.0
        %2283 = vmatprep.subr.mxu0 0.0
        %2284 = vmatpush2.xpose.msra.mxu0 0.0
        %2285 = vmatprep.subr.mxu0 0.0
        %2286 = vmatpush2.xpose.msra.mxu0 0.0
        %2287 = vmatprep.subr.mxu0 0.0
        %2288 = vmatpush2.xpose.msra.mxu0 0.0
        %2289 = vmatprep.subr.mxu0 0.0
        %2290 = vmatpush2.xpose.msra.mxu0 0.0
        %2291 = vmatprep.subr.mxu0 0.0
        %2292 = vmatpush2.xpose.msra.mxu0 0.0
        %2293 = vmatprep.subr.mxu0 0.0
        %2294 = vmatpush2.xpose.msra.mxu0 0.0
        %2295 = vmatprep.subr.mxu0 0.0
        %2296 = vmatpush2.xpose.msra.mxu0 0.0
        %2297 = vmatprep.subr.mxu0 0.0
        %2298 = vmatpush2.xpose.msra.mxu0 0.0
        %2299 = vmatprep.subr.mxu0 0.0
        %2300 = vmatpush2.xpose.msra.mxu0 0.0
        %2301 = vmatprep.subr.mxu0 0.0
        %2302 = vmatpush2.xpose.msra.mxu0 0.0
        %2303 = vmatprep.subr.mxu0 0.0
        %2304 = vmatpush2.xpose.msra.mxu0 0.0
        %v2305 = vand.u32 %v1099, 4294901760
        %2306 = vmatprep.mubr.f32.mxu0 %v2305
        %v2307 = vand.u32 %v1097, 4294901760
        %2308 = vmatmul.mubr.f32.gmra.mxu0 %v2307
        %v2309 = vpop.f32.mrf.mxu0
        %v2310 = vadd.f32 %v2078, %v2309
        %v2311 = vpop.f32.mrf.mxu0
        %2312 = vdwg.mxu0
        %v2313 = vand.u32 %v244, 4294901760
        %v2314 = vsub.f32 %v244, %v2313
        %2315 = vmatprep.subr.mxu0 %v2314
        %v2316 = vand.u32 %v243, 4294901760
        %v2317 = vsub.f32 %v243, %v2316
        %2318 = vmatpush1.xpose.msra.mxu0 %v2317
        %v2319 = vand.u32 %v242, 4294901760
        %v2320 = vsub.f32 %v242, %v2319
        %2321 = vmatprep.subr.mxu0 %v2320
        %v2322 = vand.u32 %v241, 4294901760
        %v2323 = vsub.f32 %v241, %v2322
        %2324 = vmatpush1.xpose.msra.mxu0 %v2323
        %v2325 = vand.u32 %v240, 4294901760
        %v2326 = vsub.f32 %v240, %v2325
        %2327 = vmatprep.subr.mxu0 %v2326
        %v2328 = vand.u32 %v239, 4294901760
        %v2329 = vsub.f32 %v239, %v2328
        %2330 = vmatpush1.xpose.msra.mxu0 %v2329
        %v2331 = vand.u32 %v238, 4294901760
        %v2332 = vsub.f32 %v238, %v2331
        %2333 = vmatprep.subr.mxu0 %v2332
        %v2334 = vand.u32 %v237, 4294901760
        %v2335 = vsub.f32 %v237, %v2334
        %2336 = vmatpush1.xpose.msra.mxu0 %v2335
        %v2337 = vand.u32 %v236, 4294901760
        %v2338 = vsub.f32 %v236, %v2337
        %2339 = vmatprep.subr.mxu0 %v2338
        %v2340 = vand.u32 %v235, 4294901760
        %v2341 = vsub.f32 %v235, %v2340
        %2342 = vmatpush1.xpose.msra.mxu0 %v2341
        %v2343 = vand.u32 %v234, 4294901760
        %v2344 = vsub.f32 %v234, %v2343
        %2345 = vmatprep.subr.mxu0 %v2344
        %v2346 = vand.u32 %v233, 4294901760
        %v2347 = vsub.f32 %v233, %v2346
        %2348 = vmatpush1.xpose.msra.mxu0 %v2347
        %v2349 = vand.u32 %v232, 4294901760
        %v2350 = vsub.f32 %v232, %v2349
        %2351 = vmatprep.subr.mxu0 %v2350
        %v2352 = vand.u32 %v231, 4294901760
        %v2353 = vsub.f32 %v231, %v2352
        %2354 = vmatpush1.xpose.msra.mxu0 %v2353
        %v2355 = vand.u32 %v230, 4294901760
        %v2356 = vsub.f32 %v230, %v2355
        %2357 = vmatprep.subr.mxu0 %v2356
        %v2358 = vand.u32 %v229, 4294901760
        %v2359 = vsub.f32 %v229, %v2358
        %2360 = vmatpush1.xpose.msra.mxu0 %v2359
        %v2361 = vand.u32 %v228, 4294901760
        %v2362 = vsub.f32 %v228, %v2361
        %2363 = vmatprep.subr.mxu0 %v2362
        %v2364 = vand.u32 %v227, 4294901760
        %v2365 = vsub.f32 %v227, %v2364
        %2366 = vmatpush1.xpose.msra.mxu0 %v2365
        %v2367 = vand.u32 %v226, 4294901760
        %v2368 = vsub.f32 %v226, %v2367
        %2369 = vmatprep.subr.mxu0 %v2368
        %v2370 = vand.u32 %v225, 4294901760
        %v2371 = vsub.f32 %v225, %v2370
        %2372 = vmatpush1.xpose.msra.mxu0 %v2371
        %v2373 = vand.u32 %v224, 4294901760
        %v2374 = vsub.f32 %v224, %v2373
        %2375 = vmatprep.subr.mxu0 %v2374
        %v2376 = vand.u32 %v223, 4294901760
        %v2377 = vsub.f32 %v223, %v2376
        %2378 = vmatpush1.xpose.msra.mxu0 %v2377
        %v2379 = vand.u32 %v222, 4294901760
        %v2380 = vsub.f32 %v222, %v2379
        %2381 = vmatprep.subr.mxu0 %v2380
        %v2382 = vand.u32 %v221, 4294901760
        %v2383 = vsub.f32 %v221, %v2382
        %2384 = vmatpush1.xpose.msra.mxu0 %v2383
        %v2385 = vand.u32 %v220, 4294901760
        %v2386 = vsub.f32 %v220, %v2385
        %2387 = vmatprep.subr.mxu0 %v2386
        %v2388 = vand.u32 %v219, 4294901760
        %v2389 = vsub.f32 %v219, %v2388
        %2390 = vmatpush1.xpose.msra.mxu0 %v2389
        %v2391 = vand.u32 %v218, 4294901760
        %v2392 = vsub.f32 %v218, %v2391
        %2393 = vmatprep.subr.mxu0 %v2392
        %v2394 = vand.u32 %v217, 4294901760
        %v2395 = vsub.f32 %v217, %v2394
        %2396 = vmatpush1.xpose.msra.mxu0 %v2395
        %v2397 = vand.u32 %v216, 4294901760
        %v2398 = vsub.f32 %v216, %v2397
        %2399 = vmatprep.subr.mxu0 %v2398
        %v2400 = vand.u32 %v215, 4294901760
        %v2401 = vsub.f32 %v215, %v2400
        %2402 = vmatpush1.xpose.msra.mxu0 %v2401
        %v2403 = vand.u32 %v214, 4294901760
        %v2404 = vsub.f32 %v214, %v2403
        %2405 = vmatprep.subr.mxu0 %v2404
        %v2406 = vand.u32 %v213, 4294901760
        %v2407 = vsub.f32 %v213, %v2406
        %2408 = vmatpush1.xpose.msra.mxu0 %v2407
        %2409 = vmatprep.subr.mxu0 0.0
        %2410 = vmatpush2.xpose.msra.mxu0 0.0
        %2411 = vmatprep.subr.mxu0 0.0
        %2412 = vmatpush2.xpose.msra.mxu0 0.0
        %2413 = vmatprep.subr.mxu0 0.0
        %2414 = vmatpush2.xpose.msra.mxu0 0.0
        %2415 = vmatprep.subr.mxu0 0.0
        %2416 = vmatpush2.xpose.msra.mxu0 0.0
        %2417 = vmatprep.subr.mxu0 0.0
        %2418 = vmatpush2.xpose.msra.mxu0 0.0
        %2419 = vmatprep.subr.mxu0 0.0
        %2420 = vmatpush2.xpose.msra.mxu0 0.0
        %2421 = vmatprep.subr.mxu0 0.0
        %2422 = vmatpush2.xpose.msra.mxu0 0.0
        %2423 = vmatprep.subr.mxu0 0.0
        %2424 = vmatpush2.xpose.msra.mxu0 0.0
        %2425 = vmatprep.subr.mxu0 0.0
        %2426 = vmatpush2.xpose.msra.mxu0 0.0
        %2427 = vmatprep.subr.mxu0 0.0
        %2428 = vmatpush2.xpose.msra.mxu0 0.0
        %2429 = vmatprep.subr.mxu0 0.0
        %2430 = vmatpush2.xpose.msra.mxu0 0.0
        %2431 = vmatprep.subr.mxu0 0.0
        %2432 = vmatpush2.xpose.msra.mxu0 0.0
        %2433 = vmatprep.subr.mxu0 0.0
        %2434 = vmatpush2.xpose.msra.mxu0 0.0
        %2435 = vmatprep.subr.mxu0 0.0
        %2436 = vmatpush2.xpose.msra.mxu0 0.0
        %2437 = vmatprep.subr.mxu0 0.0
        %2438 = vmatpush2.xpose.msra.mxu0 0.0
        %2439 = vmatprep.subr.mxu0 0.0
        %2440 = vmatpush2.xpose.msra.mxu0 0.0
        %v2441 = vand.u32 %v1099, 4294901760
        %v2442 = vsub.f32 %v1099, %v2441
        %2443 = vmatprep.mubr.f32.mxu0 %v2442
        %v2444 = vand.u32 %v1097, 4294901760
        %v2445 = vsub.f32 %v1097, %v2444
        %2446 = vmatmul.mubr.f32.gmra.mxu0 %v2445
        %v2447 = vpop.f32.mrf.mxu0
        %v2448 = vadd.f32 %v2310, %v2447
        %v2449 = vpop.f32.mrf.mxu0
        %2450 = vdwg.mxu0
        %v2451 = vand.u32 %v244, 4294901760
        %2452 = vmatprep.subr.mxu0 %v2451
        %v2453 = vand.u32 %v243, 4294901760
        %2454 = vmatpush1.xpose.msra.mxu0 %v2453
        %v2455 = vand.u32 %v242, 4294901760
        %2456 = vmatprep.subr.mxu0 %v2455
        %v2457 = vand.u32 %v241, 4294901760
        %2458 = vmatpush1.xpose.msra.mxu0 %v2457
        %v2459 = vand.u32 %v240, 4294901760
        %2460 = vmatprep.subr.mxu0 %v2459
        %v2461 = vand.u32 %v239, 4294901760
        %2462 = vmatpush1.xpose.msra.mxu0 %v2461
        %v2463 = vand.u32 %v238, 4294901760
        %2464 = vmatprep.subr.mxu0 %v2463
        %v2465 = vand.u32 %v237, 4294901760
        %2466 = vmatpush1.xpose.msra.mxu0 %v2465
        %v2467 = vand.u32 %v236, 4294901760
        %2468 = vmatprep.subr.mxu0 %v2467
        %v2469 = vand.u32 %v235, 4294901760
        %2470 = vmatpush1.xpose.msra.mxu0 %v2469
        %v2471 = vand.u32 %v234, 4294901760
        %2472 = vmatprep.subr.mxu0 %v2471
        %v2473 = vand.u32 %v233, 4294901760
        %2474 = vmatpush1.xpose.msra.mxu0 %v2473
        %v2475 = vand.u32 %v232, 4294901760
        %2476 = vmatprep.subr.mxu0 %v2475
        %v2477 = vand.u32 %v231, 4294901760
        %2478 = vmatpush1.xpose.msra.mxu0 %v2477
        %v2479 = vand.u32 %v230, 4294901760
        %2480 = vmatprep.subr.mxu0 %v2479
        %v2481 = vand.u32 %v229, 4294901760
        %2482 = vmatpush1.xpose.msra.mxu0 %v2481
        %v2483 = vand.u32 %v228, 4294901760
        %2484 = vmatprep.subr.mxu0 %v2483
        %v2485 = vand.u32 %v227, 4294901760
        %2486 = vmatpush1.xpose.msra.mxu0 %v2485
        %v2487 = vand.u32 %v226, 4294901760
        %2488 = vmatprep.subr.mxu0 %v2487
        %v2489 = vand.u32 %v225, 4294901760
        %2490 = vmatpush1.xpose.msra.mxu0 %v2489
        %v2491 = vand.u32 %v224, 4294901760
        %2492 = vmatprep.subr.mxu0 %v2491
        %v2493 = vand.u32 %v223, 4294901760
        %2494 = vmatpush1.xpose.msra.mxu0 %v2493
        %v2495 = vand.u32 %v222, 4294901760
        %2496 = vmatprep.subr.mxu0 %v2495
        %v2497 = vand.u32 %v221, 4294901760
        %2498 = vmatpush1.xpose.msra.mxu0 %v2497
        %v2499 = vand.u32 %v220, 4294901760
        %2500 = vmatprep.subr.mxu0 %v2499
        %v2501 = vand.u32 %v219, 4294901760
        %2502 = vmatpush1.xpose.msra.mxu0 %v2501
        %v2503 = vand.u32 %v218, 4294901760
        %2504 = vmatprep.subr.mxu0 %v2503
        %v2505 = vand.u32 %v217, 4294901760
        %2506 = vmatpush1.xpose.msra.mxu0 %v2505
        %v2507 = vand.u32 %v216, 4294901760
        %2508 = vmatprep.subr.mxu0 %v2507
        %v2509 = vand.u32 %v215, 4294901760
        %2510 = vmatpush1.xpose.msra.mxu0 %v2509
        %v2511 = vand.u32 %v214, 4294901760
        %2512 = vmatprep.subr.mxu0 %v2511
        %v2513 = vand.u32 %v213, 4294901760
        %2514 = vmatpush1.xpose.msra.mxu0 %v2513
        %2515 = vmatprep.subr.mxu0 0.0
        %2516 = vmatpush2.xpose.msra.mxu0 0.0
        %2517 = vmatprep.subr.mxu0 0.0
        %2518 = vmatpush2.xpose.msra.mxu0 0.0
        %2519 = vmatprep.subr.mxu0 0.0
        %2520 = vmatpush2.xpose.msra.mxu0 0.0
        %2521 = vmatprep.subr.mxu0 0.0
        %2522 = vmatpush2.xpose.msra.mxu0 0.0
        %2523 = vmatprep.subr.mxu0 0.0
        %2524 = vmatpush2.xpose.msra.mxu0 0.0
        %2525 = vmatprep.subr.mxu0 0.0
        %2526 = vmatpush2.xpose.msra.mxu0 0.0
        %2527 = vmatprep.subr.mxu0 0.0
        %2528 = vmatpush2.xpose.msra.mxu0 0.0
        %2529 = vmatprep.subr.mxu0 0.0
        %2530 = vmatpush2.xpose.msra.mxu0 0.0
        %2531 = vmatprep.subr.mxu0 0.0
        %2532 = vmatpush2.xpose.msra.mxu0 0.0
        %2533 = vmatprep.subr.mxu0 0.0
        %2534 = vmatpush2.xpose.msra.mxu0 0.0
        %2535 = vmatprep.subr.mxu0 0.0
        %2536 = vmatpush2.xpose.msra.mxu0 0.0
        %2537 = vmatprep.subr.mxu0 0.0
        %2538 = vmatpush2.xpose.msra.mxu0 0.0
        %2539 = vmatprep.subr.mxu0 0.0
        %2540 = vmatpush2.xpose.msra.mxu0 0.0
        %2541 = vmatprep.subr.mxu0 0.0
        %2542 = vmatpush2.xpose.msra.mxu0 0.0
        %2543 = vmatprep.subr.mxu0 0.0
        %2544 = vmatpush2.xpose.msra.mxu0 0.0
        %2545 = vmatprep.subr.mxu0 0.0
        %2546 = vmatpush2.xpose.msra.mxu0 0.0
        %v2547 = vand.u32 %v1099, 4294901760
        %v2548 = vsub.f32 %v1099, %v2547
        %v2549 = vand.u32 %v2548, 4294901760
        %2550 = vmatprep.mubr.f32.mxu0 %v2549
        %v2551 = vand.u32 %v1097, 4294901760
        %v2552 = vsub.f32 %v1097, %v2551
        %v2553 = vand.u32 %v2552, 4294901760
        %2554 = vmatmul.mubr.f32.gmra.mxu0 %v2553
        %v2555 = vpop.f32.mrf.mxu0
        %v2556 = vadd.f32 %v2448, %v2555
        %v2557 = vpop.f32.mrf.mxu0
        %2558 = vdwg.mxu0
        %v2559 = vand.u32 %v244, 4294901760
        %v2560 = vsub.f32 %v244, %v2559
        %v2561 = vand.u32 %v2560, 4294901760
        %2562 = vmatprep.subr.mxu0 %v2561
        %v2563 = vand.u32 %v243, 4294901760
        %v2564 = vsub.f32 %v243, %v2563
        %v2565 = vand.u32 %v2564, 4294901760
        %2566 = vmatpush1.xpose.msra.mxu0 %v2565
        %v2567 = vand.u32 %v242, 4294901760
        %v2568 = vsub.f32 %v242, %v2567
        %v2569 = vand.u32 %v2568, 4294901760
        %2570 = vmatprep.subr.mxu0 %v2569
        %v2571 = vand.u32 %v241, 4294901760
        %v2572 = vsub.f32 %v241, %v2571
        %v2573 = vand.u32 %v2572, 4294901760
        %2574 = vmatpush1.xpose.msra.mxu0 %v2573
        %v2575 = vand.u32 %v240, 4294901760
        %v2576 = vsub.f32 %v240, %v2575
        %v2577 = vand.u32 %v2576, 4294901760
        %2578 = vmatprep.subr.mxu0 %v2577
        %v2579 = vand.u32 %v239, 4294901760
        %v2580 = vsub.f32 %v239, %v2579
        %v2581 = vand.u32 %v2580, 4294901760
        %2582 = vmatpush1.xpose.msra.mxu0 %v2581
        %v2583 = vand.u32 %v238, 4294901760
        %v2584 = vsub.f32 %v238, %v2583
        %v2585 = vand.u32 %v2584, 4294901760
        %2586 = vmatprep.subr.mxu0 %v2585
        %v2587 = vand.u32 %v237, 4294901760
        %v2588 = vsub.f32 %v237, %v2587
        %v2589 = vand.u32 %v2588, 4294901760
        %2590 = vmatpush1.xpose.msra.mxu0 %v2589
        %v2591 = vand.u32 %v236, 4294901760
        %v2592 = vsub.f32 %v236, %v2591
        %v2593 = vand.u32 %v2592, 4294901760
        %2594 = vmatprep.subr.mxu0 %v2593
        %v2595 = vand.u32 %v235, 4294901760
        %v2596 = vsub.f32 %v235, %v2595
        %v2597 = vand.u32 %v2596, 4294901760
        %2598 = vmatpush1.xpose.msra.mxu0 %v2597
        %v2599 = vand.u32 %v234, 4294901760
        %v2600 = vsub.f32 %v234, %v2599
        %v2601 = vand.u32 %v2600, 4294901760
        %2602 = vmatprep.subr.mxu0 %v2601
        %v2603 = vand.u32 %v233, 4294901760
        %v2604 = vsub.f32 %v233, %v2603
        %v2605 = vand.u32 %v2604, 4294901760
        %2606 = vmatpush1.xpose.msra.mxu0 %v2605
        %v2607 = vand.u32 %v232, 4294901760
        %v2608 = vsub.f32 %v232, %v2607
        %v2609 = vand.u32 %v2608, 4294901760
        %2610 = vmatprep.subr.mxu0 %v2609
        %v2611 = vand.u32 %v231, 4294901760
        %v2612 = vsub.f32 %v231, %v2611
        %v2613 = vand.u32 %v2612, 4294901760
        %2614 = vmatpush1.xpose.msra.mxu0 %v2613
        %v2615 = vand.u32 %v230, 4294901760
        %v2616 = vsub.f32 %v230, %v2615
        %v2617 = vand.u32 %v2616, 4294901760
        %2618 = vmatprep.subr.mxu0 %v2617
        %v2619 = vand.u32 %v229, 4294901760
        %v2620 = vsub.f32 %v229, %v2619
        %v2621 = vand.u32 %v2620, 4294901760
        %2622 = vmatpush1.xpose.msra.mxu0 %v2621
        %v2623 = vand.u32 %v228, 4294901760
        %v2624 = vsub.f32 %v228, %v2623
        %v2625 = vand.u32 %v2624, 4294901760
        %2626 = vmatprep.subr.mxu0 %v2625
        %v2627 = vand.u32 %v227, 4294901760
        %v2628 = vsub.f32 %v227, %v2627
        %v2629 = vand.u32 %v2628, 4294901760
        %2630 = vmatpush1.xpose.msra.mxu0 %v2629
        %v2631 = vand.u32 %v226, 4294901760
        %v2632 = vsub.f32 %v226, %v2631
        %v2633 = vand.u32 %v2632, 4294901760
        %2634 = vmatprep.subr.mxu0 %v2633
        %v2635 = vand.u32 %v225, 4294901760
        %v2636 = vsub.f32 %v225, %v2635
        %v2637 = vand.u32 %v2636, 4294901760
        %2638 = vmatpush1.xpose.msra.mxu0 %v2637
        %v2639 = vand.u32 %v224, 4294901760
        %v2640 = vsub.f32 %v224, %v2639
        %v2641 = vand.u32 %v2640, 4294901760
        %2642 = vmatprep.subr.mxu0 %v2641
        %v2643 = vand.u32 %v223, 4294901760
        %v2644 = vsub.f32 %v223, %v2643
        %v2645 = vand.u32 %v2644, 4294901760
        %2646 = vmatpush1.xpose.msra.mxu0 %v2645
        %v2647 = vand.u32 %v222, 4294901760
        %v2648 = vsub.f32 %v222, %v2647
        %v2649 = vand.u32 %v2648, 4294901760
        %2650 = vmatprep.subr.mxu0 %v2649
        %v2651 = vand.u32 %v221, 4294901760
        %v2652 = vsub.f32 %v221, %v2651
        %v2653 = vand.u32 %v2652, 4294901760
        %2654 = vmatpush1.xpose.msra.mxu0 %v2653
        %v2655 = vand.u32 %v220, 4294901760
        %v2656 = vsub.f32 %v220, %v2655
        %v2657 = vand.u32 %v2656, 4294901760
        %2658 = vmatprep.subr.mxu0 %v2657
        %v2659 = vand.u32 %v219, 4294901760
        %v2660 = vsub.f32 %v219, %v2659
        %v2661 = vand.u32 %v2660, 4294901760
        %2662 = vmatpush1.xpose.msra.mxu0 %v2661
        %v2663 = vand.u32 %v218, 4294901760
        %v2664 = vsub.f32 %v218, %v2663
        %v2665 = vand.u32 %v2664, 4294901760
        %2666 = vmatprep.subr.mxu0 %v2665
        %v2667 = vand.u32 %v217, 4294901760
        %v2668 = vsub.f32 %v217, %v2667
        %v2669 = vand.u32 %v2668, 4294901760
        %2670 = vmatpush1.xpose.msra.mxu0 %v2669
        %v2671 = vand.u32 %v216, 4294901760
        %v2672 = vsub.f32 %v216, %v2671
        %v2673 = vand.u32 %v2672, 4294901760
        %2674 = vmatprep.subr.mxu0 %v2673
        %v2675 = vand.u32 %v215, 4294901760
        %v2676 = vsub.f32 %v215, %v2675
        %v2677 = vand.u32 %v2676, 4294901760
        %2678 = vmatpush1.xpose.msra.mxu0 %v2677
        %v2679 = vand.u32 %v214, 4294901760
        %v2680 = vsub.f32 %v214, %v2679
        %v2681 = vand.u32 %v2680, 4294901760
        %2682 = vmatprep.subr.mxu0 %v2681
        %v2683 = vand.u32 %v213, 4294901760
        %v2684 = vsub.f32 %v213, %v2683
        %v2685 = vand.u32 %v2684, 4294901760
        %2686 = vmatpush1.xpose.msra.mxu0 %v2685
        %2687 = vmatprep.subr.mxu0 0.0
        %2688 = vmatpush2.xpose.msra.mxu0 0.0
        %2689 = vmatprep.subr.mxu0 0.0
        %2690 = vmatpush2.xpose.msra.mxu0 0.0
        %2691 = vmatprep.subr.mxu0 0.0
        %2692 = vmatpush2.xpose.msra.mxu0 0.0
        %2693 = vmatprep.subr.mxu0 0.0
        %2694 = vmatpush2.xpose.msra.mxu0 0.0
        %2695 = vmatprep.subr.mxu0 0.0
        %2696 = vmatpush2.xpose.msra.mxu0 0.0
        %2697 = vmatprep.subr.mxu0 0.0
        %2698 = vmatpush2.xpose.msra.mxu0 0.0
        %2699 = vmatprep.subr.mxu0 0.0
        %2700 = vmatpush2.xpose.msra.mxu0 0.0
        %2701 = vmatprep.subr.mxu0 0.0
        %2702 = vmatpush2.xpose.msra.mxu0 0.0
        %2703 = vmatprep.subr.mxu0 0.0
        %2704 = vmatpush2.xpose.msra.mxu0 0.0
        %2705 = vmatprep.subr.mxu0 0.0
        %2706 = vmatpush2.xpose.msra.mxu0 0.0
        %2707 = vmatprep.subr.mxu0 0.0
        %2708 = vmatpush2.xpose.msra.mxu0 0.0
        %2709 = vmatprep.subr.mxu0 0.0
        %2710 = vmatpush2.xpose.msra.mxu0 0.0
        %2711 = vmatprep.subr.mxu0 0.0
        %2712 = vmatpush2.xpose.msra.mxu0 0.0
        %2713 = vmatprep.subr.mxu0 0.0
        %2714 = vmatpush2.xpose.msra.mxu0 0.0
        %2715 = vmatprep.subr.mxu0 0.0
        %2716 = vmatpush2.xpose.msra.mxu0 0.0
        %2717 = vmatprep.subr.mxu0 0.0
        %2718 = vmatpush2.xpose.msra.mxu0 0.0
        %v2719 = vand.u32 %v1099, 4294901760
        %2720 = vmatprep.mubr.f32.mxu0 %v2719
        %v2721 = vand.u32 %v1097, 4294901760
        %2722 = vmatmul.mubr.f32.gmra.mxu0 %v2721
        %v2723 = vpop.f32.mrf.mxu0
        %v2724 = vadd.f32 %v2556, %v2723
        %v2725 = vpop.f32.mrf.mxu0
        %2726 = vdwg.mxu0
        %v2727 = vand.u32 %v244, 4294901760
        %2728 = vmatprep.subr.mxu0 %v2727
        %v2729 = vand.u32 %v243, 4294901760
        %2730 = vmatpush1.xpose.msra.mxu0 %v2729
        %v2731 = vand.u32 %v242, 4294901760
        %2732 = vmatprep.subr.mxu0 %v2731
        %v2733 = vand.u32 %v241, 4294901760
        %2734 = vmatpush1.xpose.msra.mxu0 %v2733
        %v2735 = vand.u32 %v240, 4294901760
        %2736 = vmatprep.subr.mxu0 %v2735
        %v2737 = vand.u32 %v239, 4294901760
        %2738 = vmatpush1.xpose.msra.mxu0 %v2737
        %v2739 = vand.u32 %v238, 4294901760
        %2740 = vmatprep.subr.mxu0 %v2739
        %v2741 = vand.u32 %v237, 4294901760
        %2742 = vmatpush1.xpose.msra.mxu0 %v2741
        %v2743 = vand.u32 %v236, 4294901760
        %2744 = vmatprep.subr.mxu0 %v2743
        %v2745 = vand.u32 %v235, 4294901760
        %2746 = vmatpush1.xpose.msra.mxu0 %v2745
        %v2747 = vand.u32 %v234, 4294901760
        %2748 = vmatprep.subr.mxu0 %v2747
        %v2749 = vand.u32 %v233, 4294901760
        %2750 = vmatpush1.xpose.msra.mxu0 %v2749
        %v2751 = vand.u32 %v232, 4294901760
        %2752 = vmatprep.subr.mxu0 %v2751
        %v2753 = vand.u32 %v231, 4294901760
        %2754 = vmatpush1.xpose.msra.mxu0 %v2753
        %v2755 = vand.u32 %v230, 4294901760
        %2756 = vmatprep.subr.mxu0 %v2755
        %v2757 = vand.u32 %v229, 4294901760
        %2758 = vmatpush1.xpose.msra.mxu0 %v2757
        %v2759 = vand.u32 %v228, 4294901760
        %2760 = vmatprep.subr.mxu0 %v2759
        %v2761 = vand.u32 %v227, 4294901760
        %2762 = vmatpush1.xpose.msra.mxu0 %v2761
        %v2763 = vand.u32 %v226, 4294901760
        %2764 = vmatprep.subr.mxu0 %v2763
        %v2765 = vand.u32 %v225, 4294901760
        %2766 = vmatpush1.xpose.msra.mxu0 %v2765
        %v2767 = vand.u32 %v224, 4294901760
        %2768 = vmatprep.subr.mxu0 %v2767
        %v2769 = vand.u32 %v223, 4294901760
        %2770 = vmatpush1.xpose.msra.mxu0 %v2769
        %v2771 = vand.u32 %v222, 4294901760
        %2772 = vmatprep.subr.mxu0 %v2771
        %v2773 = vand.u32 %v221, 4294901760
        %2774 = vmatpush1.xpose.msra.mxu0 %v2773
        %v2775 = vand.u32 %v220, 4294901760
        %2776 = vmatprep.subr.mxu0 %v2775
        %v2777 = vand.u32 %v219, 4294901760
        %2778 = vmatpush1.xpose.msra.mxu0 %v2777
        %v2779 = vand.u32 %v218, 4294901760
        %2780 = vmatprep.subr.mxu0 %v2779
        %v2781 = vand.u32 %v217, 4294901760
        %2782 = vmatpush1.xpose.msra.mxu0 %v2781
        %v2783 = vand.u32 %v216, 4294901760
        %2784 = vmatprep.subr.mxu0 %v2783
        %v2785 = vand.u32 %v215, 4294901760
        %2786 = vmatpush1.xpose.msra.mxu0 %v2785
        %v2787 = vand.u32 %v214, 4294901760
        %2788 = vmatprep.subr.mxu0 %v2787
        %v2789 = vand.u32 %v213, 4294901760
        %2790 = vmatpush1.xpose.msra.mxu0 %v2789
        %2791 = vmatprep.subr.mxu0 0.0
        %2792 = vmatpush2.xpose.msra.mxu0 0.0
        %2793 = vmatprep.subr.mxu0 0.0
        %2794 = vmatpush2.xpose.msra.mxu0 0.0
        %2795 = vmatprep.subr.mxu0 0.0
        %2796 = vmatpush2.xpose.msra.mxu0 0.0
        %2797 = vmatprep.subr.mxu0 0.0
        %2798 = vmatpush2.xpose.msra.mxu0 0.0
        %2799 = vmatprep.subr.mxu0 0.0
        %2800 = vmatpush2.xpose.msra.mxu0 0.0
        %2801 = vmatprep.subr.mxu0 0.0
        %2802 = vmatpush2.xpose.msra.mxu0 0.0
        %2803 = vmatprep.subr.mxu0 0.0
        %2804 = vmatpush2.xpose.msra.mxu0 0.0
        %2805 = vmatprep.subr.mxu0 0.0
        %2806 = vmatpush2.xpose.msra.mxu0 0.0
        %2807 = vmatprep.subr.mxu0 0.0
        %2808 = vmatpush2.xpose.msra.mxu0 0.0
        %2809 = vmatprep.subr.mxu0 0.0
        %2810 = vmatpush2.xpose.msra.mxu0 0.0
        %2811 = vmatprep.subr.mxu0 0.0
        %2812 = vmatpush2.xpose.msra.mxu0 0.0
        %2813 = vmatprep.subr.mxu0 0.0
        %2814 = vmatpush2.xpose.msra.mxu0 0.0
        %2815 = vmatprep.subr.mxu0 0.0
        %2816 = vmatpush2.xpose.msra.mxu0 0.0
        %2817 = vmatprep.subr.mxu0 0.0
        %2818 = vmatpush2.xpose.msra.mxu0 0.0
        %2819 = vmatprep.subr.mxu0 0.0
        %2820 = vmatpush2.xpose.msra.mxu0 0.0
        %2821 = vmatprep.subr.mxu0 0.0
        %2822 = vmatpush2.xpose.msra.mxu0 0.0
        %v2823 = vand.u32 %v1099, 4294901760
        %2824 = vmatprep.mubr.f32.mxu0 %v2823
        %v2825 = vand.u32 %v1097, 4294901760
        %2826 = vmatmul.mubr.f32.gmra.mxu0 %v2825
        %v2827 = vpop.f32.mrf.mxu0
        %v2828 = vadd.f32 %v2724, %v2827
        %v2829 = vpop.f32.mrf.mxu0
        %2830 = vdwg.mxu0
        %v2831 = vmul.f32 %v1097, %v1097
        %v2832 = vmul.f32 %v1099, %v1099
        %v2833 = vadd.f32 %v2831, %v2832
        %2834 = vadd.xlane.f32.xlu0 %v2833
        %v2835 = vpop.xlane.xlu0 %2834
        %v2836 = vmul.f32 %v2828, 2.0
        %v2837 = vlaneseq
        %v2838 = vshrl.u32 %v2837, 7
        %v2839 = vsub.s32 0, %v2838
        %v2840 = vrot.slane %v1966, %v2839
        %v2841 = vsub.f32 %v2840, %v2836
        %v2842 = vadd.f32 %v2841, %v2835
        %v2843 = vmax.f32 %v2842, 0.0
        %v2844 = vadd.f32 %v2843, 1e-16
        %v2845 = vrcp.pop %v2844
        %v2846 = vmul.f32 1.0, %v2845
        %v2847 = vadd.f32 %v2846, 1e-16
        %v2848 = vrot.slane %v2846, 4
        %v2849 = vadd.f32 %v2846, %v2848
        %v2850 = vrot.slane %v2849, 2
        %v2851 = vadd.f32 %v2849, %v2850
        %v2852 = vrot.slane %v2851, 1
        %v2853 = vadd.f32 %v2851, %v2852
        %v2854 = vadd.f32 %v2853, 1e-16
        %v2855 = vrcp.pop %v2854
        %v2856 = vmul.f32 %v2847, %v2855
        %v2857 = vmul.f32 %v2856, %v2856
        %v2858 = vadd.f32 %v2857, 1e-16
        %2859 = vadd.xlane.f32.xlu0 %v2857
        %v2860 = vpop.xlane.xlu0 %2859
        %v2861 = vadd.f32 %v2860, 1e-16
        %v2862 = vrcp.pop %v2861
        %v2863 = vmul.f32 %v2858, %v2862
        %v2864 = vand.u32 %v244, 4294901760
        %2865 = vmatprep.subr.mxu0 %v2864
        %v2866 = vand.u32 %v243, 4294901760
        %2867 = vmatpush1.msra.mxu0 %v2866
        %v2868 = vand.u32 %v242, 4294901760
        %2869 = vmatprep.subr.mxu0 %v2868
        %v2870 = vand.u32 %v241, 4294901760
        %2871 = vmatpush1.msra.mxu0 %v2870
        %v2872 = vand.u32 %v240, 4294901760
        %2873 = vmatprep.subr.mxu0 %v2872
        %v2874 = vand.u32 %v239, 4294901760
        %2875 = vmatpush1.msra.mxu0 %v2874
        %v2876 = vand.u32 %v238, 4294901760
        %2877 = vmatprep.subr.mxu0 %v2876
        %v2878 = vand.u32 %v237, 4294901760
        %2879 = vmatpush1.msra.mxu0 %v2878
        %v2880 = vand.u32 %v236, 4294901760
        %2881 = vmatprep.subr.mxu0 %v2880
        %v2882 = vand.u32 %v235, 4294901760
        %2883 = vmatpush1.msra.mxu0 %v2882
        %v2884 = vand.u32 %v234, 4294901760
        %2885 = vmatprep.subr.mxu0 %v2884
        %v2886 = vand.u32 %v233, 4294901760
        %2887 = vmatpush1.msra.mxu0 %v2886
        %v2888 = vand.u32 %v232, 4294901760
        %2889 = vmatprep.subr.mxu0 %v2888
        %v2890 = vand.u32 %v231, 4294901760
        %2891 = vmatpush1.msra.mxu0 %v2890
        %v2892 = vand.u32 %v230, 4294901760
        %2893 = vmatprep.subr.mxu0 %v2892
        %v2894 = vand.u32 %v229, 4294901760
        %2895 = vmatpush1.msra.mxu0 %v2894
        %v2896 = vand.u32 %v228, 4294901760
        %2897 = vmatprep.subr.mxu0 %v2896
        %v2898 = vand.u32 %v227, 4294901760
        %2899 = vmatpush1.msra.mxu0 %v2898
        %v2900 = vand.u32 %v226, 4294901760
        %2901 = vmatprep.subr.mxu0 %v2900
        %v2902 = vand.u32 %v225, 4294901760
        %2903 = vmatpush1.msra.mxu0 %v2902
        %v2904 = vand.u32 %v224, 4294901760
        %2905 = vmatprep.subr.mxu0 %v2904
        %v2906 = vand.u32 %v223, 4294901760
        %2907 = vmatpush1.msra.mxu0 %v2906
        %v2908 = vand.u32 %v222, 4294901760
        %2909 = vmatprep.subr.mxu0 %v2908
        %v2910 = vand.u32 %v221, 4294901760
        %2911 = vmatpush1.msra.mxu0 %v2910
        %v2912 = vand.u32 %v220, 4294901760
        %2913 = vmatprep.subr.mxu0 %v2912
        %v2914 = vand.u32 %v219, 4294901760
        %2915 = vmatpush1.msra.mxu0 %v2914
        %v2916 = vand.u32 %v218, 4294901760
        %2917 = vmatprep.subr.mxu0 %v2916
        %v2918 = vand.u32 %v217, 4294901760
        %2919 = vmatpush1.msra.mxu0 %v2918
        %v2920 = vand.u32 %v216, 4294901760
        %2921 = vmatprep.subr.mxu0 %v2920
        %v2922 = vand.u32 %v215, 4294901760
        %2923 = vmatpush1.msra.mxu0 %v2922
        %v2924 = vand.u32 %v214, 4294901760
        %2925 = vmatprep.subr.mxu0 %v2924
        %v2926 = vand.u32 %v213, 4294901760
        %2927 = vmatpush1.msra.mxu0 %v2926
        %2928 = vmatprep.subr.mxu0 0.0
        %2929 = vmatpush2.msra.mxu0 0.0
        %2930 = vmatprep.subr.mxu0 0.0
        %2931 = vmatpush2.msra.mxu0 0.0
        %2932 = vmatprep.subr.mxu0 0.0
        %2933 = vmatpush2.msra.mxu0 0.0
        %2934 = vmatprep.subr.mxu0 0.0
        %2935 = vmatpush2.msra.mxu0 0.0
        %2936 = vmatprep.subr.mxu0 0.0
        %2937 = vmatpush2.msra.mxu0 0.0
        %2938 = vmatprep.subr.mxu0 0.0
        %2939 = vmatpush2.msra.mxu0 0.0
        %2940 = vmatprep.subr.mxu0 0.0
        %2941 = vmatpush2.msra.mxu0 0.0
        %2942 = vmatprep.subr.mxu0 0.0
        %2943 = vmatpush2.msra.mxu0 0.0
        %2944 = vmatprep.subr.mxu0 0.0
        %2945 = vmatpush2.msra.mxu0 0.0
        %2946 = vmatprep.subr.mxu0 0.0
        %2947 = vmatpush2.msra.mxu0 0.0
        %2948 = vmatprep.subr.mxu0 0.0
        %2949 = vmatpush2.msra.mxu0 0.0
        %2950 = vmatprep.subr.mxu0 0.0
        %2951 = vmatpush2.msra.mxu0 0.0
        %2952 = vmatprep.subr.mxu0 0.0
        %2953 = vmatpush2.msra.mxu0 0.0
        %2954 = vmatprep.subr.mxu0 0.0
        %2955 = vmatpush2.msra.mxu0 0.0
        %2956 = vmatprep.subr.mxu0 0.0
        %2957 = vmatpush2.msra.mxu0 0.0
        %2958 = vmatprep.subr.mxu0 0.0
        %2959 = vmatpush2.msra.mxu0 0.0
        %2960 = vmatprep.mubr.f32.mxu0 0.0
        %v2961 = vand.u32 %v2863, 4294901760
        %v2962 = vsub.f32 %v2863, %v2961
        %v2963 = vand.u32 %v2962, 4294901760
        %v2964 = vsub.f32 %v2962, %v2963
        %v2965 = vand.u32 %v2964, 4294901760
        %2966 = vmatmul.mubr.f32.gmra.mxu0 %v2965
        %v2967 = vpop.f32.mrf.mxu0
        %v2968 = vadd.f32 0.0, %v2967
        %v2969 = vpop.f32.mrf.mxu0
        %v2970 = vadd.f32 0.0, %v2969
        %2971 = vdwg.mxu0
        %v2972 = vand.u32 %v244, 4294901760
        %v2973 = vsub.f32 %v244, %v2972
        %v2974 = vand.u32 %v2973, 4294901760
        %v2975 = vsub.f32 %v2973, %v2974
        %v2976 = vand.u32 %v2975, 4294901760
        %2977 = vmatprep.subr.mxu0 %v2976
        %v2978 = vand.u32 %v243, 4294901760
        %v2979 = vsub.f32 %v243, %v2978
        %v2980 = vand.u32 %v2979, 4294901760
        %v2981 = vsub.f32 %v2979, %v2980
        %v2982 = vand.u32 %v2981, 4294901760
        %2983 = vmatpush1.msra.mxu0 %v2982
        %v2984 = vand.u32 %v242, 4294901760
        %v2985 = vsub.f32 %v242, %v2984
        %v2986 = vand.u32 %v2985, 4294901760
        %v2987 = vsub.f32 %v2985, %v2986
        %v2988 = vand.u32 %v2987, 4294901760
        %2989 = vmatprep.subr.mxu0 %v2988
        %v2990 = vand.u32 %v241, 4294901760
        %v2991 = vsub.f32 %v241, %v2990
        %v2992 = vand.u32 %v2991, 4294901760
        %v2993 = vsub.f32 %v2991, %v2992
        %v2994 = vand.u32 %v2993, 4294901760
        %2995 = vmatpush1.msra.mxu0 %v2994
        %v2996 = vand.u32 %v240, 4294901760
        %v2997 = vsub.f32 %v240, %v2996
        %v2998 = vand.u32 %v2997, 4294901760
        %v2999 = vsub.f32 %v2997, %v2998
        %v3000 = vand.u32 %v2999, 4294901760
        %3001 = vmatprep.subr.mxu0 %v3000
        %v3002 = vand.u32 %v239, 4294901760
        %v3003 = vsub.f32 %v239, %v3002
        %v3004 = vand.u32 %v3003, 4294901760
        %v3005 = vsub.f32 %v3003, %v3004
        %v3006 = vand.u32 %v3005, 4294901760
        %3007 = vmatpush1.msra.mxu0 %v3006
        %v3008 = vand.u32 %v238, 4294901760
        %v3009 = vsub.f32 %v238, %v3008
        %v3010 = vand.u32 %v3009, 4294901760
        %v3011 = vsub.f32 %v3009, %v3010
        %v3012 = vand.u32 %v3011, 4294901760
        %3013 = vmatprep.subr.mxu0 %v3012
        %v3014 = vand.u32 %v237, 4294901760
        %v3015 = vsub.f32 %v237, %v3014
        %v3016 = vand.u32 %v3015, 4294901760
        %v3017 = vsub.f32 %v3015, %v3016
        %v3018 = vand.u32 %v3017, 4294901760
        %3019 = vmatpush1.msra.mxu0 %v3018
        %v3020 = vand.u32 %v236, 4294901760
        %v3021 = vsub.f32 %v236, %v3020
        %v3022 = vand.u32 %v3021, 4294901760
        %v3023 = vsub.f32 %v3021, %v3022
        %v3024 = vand.u32 %v3023, 4294901760
        %3025 = vmatprep.subr.mxu0 %v3024
        %v3026 = vand.u32 %v235, 4294901760
        %v3027 = vsub.f32 %v235, %v3026
        %v3028 = vand.u32 %v3027, 4294901760
        %v3029 = vsub.f32 %v3027, %v3028
        %v3030 = vand.u32 %v3029, 4294901760
        %3031 = vmatpush1.msra.mxu0 %v3030
        %v3032 = vand.u32 %v234, 4294901760
        %v3033 = vsub.f32 %v234, %v3032
        %v3034 = vand.u32 %v3033, 4294901760
        %v3035 = vsub.f32 %v3033, %v3034
        %v3036 = vand.u32 %v3035, 4294901760
        %3037 = vmatprep.subr.mxu0 %v3036
        %v3038 = vand.u32 %v233, 4294901760
        %v3039 = vsub.f32 %v233, %v3038
        %v3040 = vand.u32 %v3039, 4294901760
        %v3041 = vsub.f32 %v3039, %v3040
        %v3042 = vand.u32 %v3041, 4294901760
        %3043 = vmatpush1.msra.mxu0 %v3042
        %v3044 = vand.u32 %v232, 4294901760
        %v3045 = vsub.f32 %v232, %v3044
        %v3046 = vand.u32 %v3045, 4294901760
        %v3047 = vsub.f32 %v3045, %v3046
        %v3048 = vand.u32 %v3047, 4294901760
        %3049 = vmatprep.subr.mxu0 %v3048
        %v3050 = vand.u32 %v231, 4294901760
        %v3051 = vsub.f32 %v231, %v3050
        %v3052 = vand.u32 %v3051, 4294901760
        %v3053 = vsub.f32 %v3051, %v3052
        %v3054 = vand.u32 %v3053, 4294901760
        %3055 = vmatpush1.msra.mxu0 %v3054
        %v3056 = vand.u32 %v230, 4294901760
        %v3057 = vsub.f32 %v230, %v3056
        %v3058 = vand.u32 %v3057, 4294901760
        %v3059 = vsub.f32 %v3057, %v3058
        %v3060 = vand.u32 %v3059, 4294901760
        %3061 = vmatprep.subr.mxu0 %v3060
        %v3062 = vand.u32 %v229, 4294901760
        %v3063 = vsub.f32 %v229, %v3062
        %v3064 = vand.u32 %v3063, 4294901760
        %v3065 = vsub.f32 %v3063, %v3064
        %v3066 = vand.u32 %v3065, 4294901760
        %3067 = vmatpush1.msra.mxu0 %v3066
        %v3068 = vand.u32 %v228, 4294901760
        %v3069 = vsub.f32 %v228, %v3068
        %v3070 = vand.u32 %v3069, 4294901760
        %v3071 = vsub.f32 %v3069, %v3070
        %v3072 = vand.u32 %v3071, 4294901760
        %3073 = vmatprep.subr.mxu0 %v3072
        %v3074 = vand.u32 %v227, 4294901760
        %v3075 = vsub.f32 %v227, %v3074
        %v3076 = vand.u32 %v3075, 4294901760
        %v3077 = vsub.f32 %v3075, %v3076
        %v3078 = vand.u32 %v3077, 4294901760
        %3079 = vmatpush1.msra.mxu0 %v3078
        %v3080 = vand.u32 %v226, 4294901760
        %v3081 = vsub.f32 %v226, %v3080
        %v3082 = vand.u32 %v3081, 4294901760
        %v3083 = vsub.f32 %v3081, %v3082
        %v3084 = vand.u32 %v3083, 4294901760
        %3085 = vmatprep.subr.mxu0 %v3084
        %v3086 = vand.u32 %v225, 4294901760
        %v3087 = vsub.f32 %v225, %v3086
        %v3088 = vand.u32 %v3087, 4294901760
        %v3089 = vsub.f32 %v3087, %v3088
        %v3090 = vand.u32 %v3089, 4294901760
        %3091 = vmatpush1.msra.mxu0 %v3090
        %v3092 = vand.u32 %v224, 4294901760
        %v3093 = vsub.f32 %v224, %v3092
        %v3094 = vand.u32 %v3093, 4294901760
        %v3095 = vsub.f32 %v3093, %v3094
        %v3096 = vand.u32 %v3095, 4294901760
        %3097 = vmatprep.subr.mxu0 %v3096
        %v3098 = vand.u32 %v223, 4294901760
        %v3099 = vsub.f32 %v223, %v3098
        %v3100 = vand.u32 %v3099, 4294901760
        %v3101 = vsub.f32 %v3099, %v3100
        %v3102 = vand.u32 %v3101, 4294901760
        %3103 = vmatpush1.msra.mxu0 %v3102
        %v3104 = vand.u32 %v222, 4294901760
        %v3105 = vsub.f32 %v222, %v3104
        %v3106 = vand.u32 %v3105, 4294901760
        %v3107 = vsub.f32 %v3105, %v3106
        %v3108 = vand.u32 %v3107, 4294901760
        %3109 = vmatprep.subr.mxu0 %v3108
        %v3110 = vand.u32 %v221, 4294901760
        %v3111 = vsub.f32 %v221, %v3110
        %v3112 = vand.u32 %v3111, 4294901760
        %v3113 = vsub.f32 %v3111, %v3112
        %v3114 = vand.u32 %v3113, 4294901760
        %3115 = vmatpush1.msra.mxu0 %v3114
        %v3116 = vand.u32 %v220, 4294901760
        %v3117 = vsub.f32 %v220, %v3116
        %v3118 = vand.u32 %v3117, 4294901760
        %v3119 = vsub.f32 %v3117, %v3118
        %v3120 = vand.u32 %v3119, 4294901760
        %3121 = vmatprep.subr.mxu0 %v3120
        %v3122 = vand.u32 %v219, 4294901760
        %v3123 = vsub.f32 %v219, %v3122
        %v3124 = vand.u32 %v3123, 4294901760
        %v3125 = vsub.f32 %v3123, %v3124
        %v3126 = vand.u32 %v3125, 4294901760
        %3127 = vmatpush1.msra.mxu0 %v3126
        %v3128 = vand.u32 %v218, 4294901760
        %v3129 = vsub.f32 %v218, %v3128
        %v3130 = vand.u32 %v3129, 4294901760
        %v3131 = vsub.f32 %v3129, %v3130
        %v3132 = vand.u32 %v3131, 4294901760
        %3133 = vmatprep.subr.mxu0 %v3132
        %v3134 = vand.u32 %v217, 4294901760
        %v3135 = vsub.f32 %v217, %v3134
        %v3136 = vand.u32 %v3135, 4294901760
        %v3137 = vsub.f32 %v3135, %v3136
        %v3138 = vand.u32 %v3137, 4294901760
        %3139 = vmatpush1.msra.mxu0 %v3138
        %v3140 = vand.u32 %v216, 4294901760
        %v3141 = vsub.f32 %v216, %v3140
        %v3142 = vand.u32 %v3141, 4294901760
        %v3143 = vsub.f32 %v3141, %v3142
        %v3144 = vand.u32 %v3143, 4294901760
        %3145 = vmatprep.subr.mxu0 %v3144
        %v3146 = vand.u32 %v215, 4294901760
        %v3147 = vsub.f32 %v215, %v3146
        %v3148 = vand.u32 %v3147, 4294901760
        %v3149 = vsub.f32 %v3147, %v3148
        %v3150 = vand.u32 %v3149, 4294901760
        %3151 = vmatpush1.msra.mxu0 %v3150
        %v3152 = vand.u32 %v214, 4294901760
        %v3153 = vsub.f32 %v214, %v3152
        %v3154 = vand.u32 %v3153, 4294901760
        %v3155 = vsub.f32 %v3153, %v3154
        %v3156 = vand.u32 %v3155, 4294901760
        %3157 = vmatprep.subr.mxu0 %v3156
        %v3158 = vand.u32 %v213, 4294901760
        %v3159 = vsub.f32 %v213, %v3158
        %v3160 = vand.u32 %v3159, 4294901760
        %v3161 = vsub.f32 %v3159, %v3160
        %v3162 = vand.u32 %v3161, 4294901760
        %3163 = vmatpush1.msra.mxu0 %v3162
        %3164 = vmatprep.subr.mxu0 0.0
        %3165 = vmatpush2.msra.mxu0 0.0
        %3166 = vmatprep.subr.mxu0 0.0
        %3167 = vmatpush2.msra.mxu0 0.0
        %3168 = vmatprep.subr.mxu0 0.0
        %3169 = vmatpush2.msra.mxu0 0.0
        %3170 = vmatprep.subr.mxu0 0.0
        %3171 = vmatpush2.msra.mxu0 0.0
        %3172 = vmatprep.subr.mxu0 0.0
        %3173 = vmatpush2.msra.mxu0 0.0
        %3174 = vmatprep.subr.mxu0 0.0
        %3175 = vmatpush2.msra.mxu0 0.0
        %3176 = vmatprep.subr.mxu0 0.0
        %3177 = vmatpush2.msra.mxu0 0.0
        %3178 = vmatprep.subr.mxu0 0.0
        %3179 = vmatpush2.msra.mxu0 0.0
        %3180 = vmatprep.subr.mxu0 0.0
        %3181 = vmatpush2.msra.mxu0 0.0
        %3182 = vmatprep.subr.mxu0 0.0
        %3183 = vmatpush2.msra.mxu0 0.0
        %3184 = vmatprep.subr.mxu0 0.0
        %3185 = vmatpush2.msra.mxu0 0.0
        %3186 = vmatprep.subr.mxu0 0.0
        %3187 = vmatpush2.msra.mxu0 0.0
        %3188 = vmatprep.subr.mxu0 0.0
        %3189 = vmatpush2.msra.mxu0 0.0
        %3190 = vmatprep.subr.mxu0 0.0
        %3191 = vmatpush2.msra.mxu0 0.0
        %3192 = vmatprep.subr.mxu0 0.0
        %3193 = vmatpush2.msra.mxu0 0.0
        %3194 = vmatprep.subr.mxu0 0.0
        %3195 = vmatpush2.msra.mxu0 0.0
        %3196 = vmatprep.mubr.f32.mxu0 0.0
        %v3197 = vand.u32 %v2863, 4294901760
        %3198 = vmatmul.mubr.f32.gmra.mxu0 %v3197
        %v3199 = vpop.f32.mrf.mxu0
        %v3200 = vadd.f32 %v2968, %v3199
        %v3201 = vpop.f32.mrf.mxu0
        %v3202 = vadd.f32 %v2970, %v3201
        %3203 = vdwg.mxu0
        %v3204 = vand.u32 %v244, 4294901760
        %v3205 = vsub.f32 %v244, %v3204
        %3206 = vmatprep.subr.mxu0 %v3205
        %v3207 = vand.u32 %v243, 4294901760
        %v3208 = vsub.f32 %v243, %v3207
        %3209 = vmatpush1.msra.mxu0 %v3208
        %v3210 = vand.u32 %v242, 4294901760
        %v3211 = vsub.f32 %v242, %v3210
        %3212 = vmatprep.subr.mxu0 %v3211
        %v3213 = vand.u32 %v241, 4294901760
        %v3214 = vsub.f32 %v241, %v3213
        %3215 = vmatpush1.msra.mxu0 %v3214
        %v3216 = vand.u32 %v240, 4294901760
        %v3217 = vsub.f32 %v240, %v3216
        %3218 = vmatprep.subr.mxu0 %v3217
        %v3219 = vand.u32 %v239, 4294901760
        %v3220 = vsub.f32 %v239, %v3219
        %3221 = vmatpush1.msra.mxu0 %v3220
        %v3222 = vand.u32 %v238, 4294901760
        %v3223 = vsub.f32 %v238, %v3222
        %3224 = vmatprep.subr.mxu0 %v3223
        %v3225 = vand.u32 %v237, 4294901760
        %v3226 = vsub.f32 %v237, %v3225
        %3227 = vmatpush1.msra.mxu0 %v3226
        %v3228 = vand.u32 %v236, 4294901760
        %v3229 = vsub.f32 %v236, %v3228
        %3230 = vmatprep.subr.mxu0 %v3229
        %v3231 = vand.u32 %v235, 4294901760
        %v3232 = vsub.f32 %v235, %v3231
        %3233 = vmatpush1.msra.mxu0 %v3232
        %v3234 = vand.u32 %v234, 4294901760
        %v3235 = vsub.f32 %v234, %v3234
        %3236 = vmatprep.subr.mxu0 %v3235
        %v3237 = vand.u32 %v233, 4294901760
        %v3238 = vsub.f32 %v233, %v3237
        %3239 = vmatpush1.msra.mxu0 %v3238
        %v3240 = vand.u32 %v232, 4294901760
        %v3241 = vsub.f32 %v232, %v3240
        %3242 = vmatprep.subr.mxu0 %v3241
        %v3243 = vand.u32 %v231, 4294901760
        %v3244 = vsub.f32 %v231, %v3243
        %3245 = vmatpush1.msra.mxu0 %v3244
        %v3246 = vand.u32 %v230, 4294901760
        %v3247 = vsub.f32 %v230, %v3246
        %3248 = vmatprep.subr.mxu0 %v3247
        %v3249 = vand.u32 %v229, 4294901760
        %v3250 = vsub.f32 %v229, %v3249
        %3251 = vmatpush1.msra.mxu0 %v3250
        %v3252 = vand.u32 %v228, 4294901760
        %v3253 = vsub.f32 %v228, %v3252
        %3254 = vmatprep.subr.mxu0 %v3253
        %v3255 = vand.u32 %v227, 4294901760
        %v3256 = vsub.f32 %v227, %v3255
        %3257 = vmatpush1.msra.mxu0 %v3256
        %v3258 = vand.u32 %v226, 4294901760
        %v3259 = vsub.f32 %v226, %v3258
        %3260 = vmatprep.subr.mxu0 %v3259
        %v3261 = vand.u32 %v225, 4294901760
        %v3262 = vsub.f32 %v225, %v3261
        %3263 = vmatpush1.msra.mxu0 %v3262
        %v3264 = vand.u32 %v224, 4294901760
        %v3265 = vsub.f32 %v224, %v3264
        %3266 = vmatprep.subr.mxu0 %v3265
        %v3267 = vand.u32 %v223, 4294901760
        %v3268 = vsub.f32 %v223, %v3267
        %3269 = vmatpush1.msra.mxu0 %v3268
        %v3270 = vand.u32 %v222, 4294901760
        %v3271 = vsub.f32 %v222, %v3270
        %3272 = vmatprep.subr.mxu0 %v3271
        %v3273 = vand.u32 %v221, 4294901760
        %v3274 = vsub.f32 %v221, %v3273
        %3275 = vmatpush1.msra.mxu0 %v3274
        %v3276 = vand.u32 %v220, 4294901760
        %v3277 = vsub.f32 %v220, %v3276
        %3278 = vmatprep.subr.mxu0 %v3277
        %v3279 = vand.u32 %v219, 4294901760
        %v3280 = vsub.f32 %v219, %v3279
        %3281 = vmatpush1.msra.mxu0 %v3280
        %v3282 = vand.u32 %v218, 4294901760
        %v3283 = vsub.f32 %v218, %v3282
        %3284 = vmatprep.subr.mxu0 %v3283
        %v3285 = vand.u32 %v217, 4294901760
        %v3286 = vsub.f32 %v217, %v3285
        %3287 = vmatpush1.msra.mxu0 %v3286
        %v3288 = vand.u32 %v216, 4294901760
        %v3289 = vsub.f32 %v216, %v3288
        %3290 = vmatprep.subr.mxu0 %v3289
        %v3291 = vand.u32 %v215, 4294901760
        %v3292 = vsub.f32 %v215, %v3291
        %3293 = vmatpush1.msra.mxu0 %v3292
        %v3294 = vand.u32 %v214, 4294901760
        %v3295 = vsub.f32 %v214, %v3294
        %3296 = vmatprep.subr.mxu0 %v3295
        %v3297 = vand.u32 %v213, 4294901760
        %v3298 = vsub.f32 %v213, %v3297
        %3299 = vmatpush1.msra.mxu0 %v3298
        %3300 = vmatprep.subr.mxu0 0.0
        %3301 = vmatpush2.msra.mxu0 0.0
        %3302 = vmatprep.subr.mxu0 0.0
        %3303 = vmatpush2.msra.mxu0 0.0
        %3304 = vmatprep.subr.mxu0 0.0
        %3305 = vmatpush2.msra.mxu0 0.0
        %3306 = vmatprep.subr.mxu0 0.0
        %3307 = vmatpush2.msra.mxu0 0.0
        %3308 = vmatprep.subr.mxu0 0.0
        %3309 = vmatpush2.msra.mxu0 0.0
        %3310 = vmatprep.subr.mxu0 0.0
        %3311 = vmatpush2.msra.mxu0 0.0
        %3312 = vmatprep.subr.mxu0 0.0
        %3313 = vmatpush2.msra.mxu0 0.0
        %3314 = vmatprep.subr.mxu0 0.0
        %3315 = vmatpush2.msra.mxu0 0.0
        %3316 = vmatprep.subr.mxu0 0.0
        %3317 = vmatpush2.msra.mxu0 0.0
        %3318 = vmatprep.subr.mxu0 0.0
        %3319 = vmatpush2.msra.mxu0 0.0
        %3320 = vmatprep.subr.mxu0 0.0
        %3321 = vmatpush2.msra.mxu0 0.0
        %3322 = vmatprep.subr.mxu0 0.0
        %3323 = vmatpush2.msra.mxu0 0.0
        %3324 = vmatprep.subr.mxu0 0.0
        %3325 = vmatpush2.msra.mxu0 0.0
        %3326 = vmatprep.subr.mxu0 0.0
        %3327 = vmatpush2.msra.mxu0 0.0
        %3328 = vmatprep.subr.mxu0 0.0
        %3329 = vmatpush2.msra.mxu0 0.0
        %3330 = vmatprep.subr.mxu0 0.0
        %3331 = vmatpush2.msra.mxu0 0.0
        %3332 = vmatprep.mubr.f32.mxu0 0.0
        %v3333 = vand.u32 %v2863, 4294901760
        %v3334 = vsub.f32 %v2863, %v3333
        %3335 = vmatmul.mubr.f32.gmra.mxu0 %v3334
        %v3336 = vpop.f32.mrf.mxu0
        %v3337 = vadd.f32 %v3200, %v3336
        %v3338 = vpop.f32.mrf.mxu0
        %v3339 = vadd.f32 %v3202, %v3338
        %3340 = vdwg.mxu0
        %v3341 = vand.u32 %v244, 4294901760
        %3342 = vmatprep.subr.mxu0 %v3341
        %v3343 = vand.u32 %v243, 4294901760
        %3344 = vmatpush1.msra.mxu0 %v3343
        %v3345 = vand.u32 %v242, 4294901760
        %3346 = vmatprep.subr.mxu0 %v3345
        %v3347 = vand.u32 %v241, 4294901760
        %3348 = vmatpush1.msra.mxu0 %v3347
        %v3349 = vand.u32 %v240, 4294901760
        %3350 = vmatprep.subr.mxu0 %v3349
        %v3351 = vand.u32 %v239, 4294901760
        %3352 = vmatpush1.msra.mxu0 %v3351
        %v3353 = vand.u32 %v238, 4294901760
        %3354 = vmatprep.subr.mxu0 %v3353
        %v3355 = vand.u32 %v237, 4294901760
        %3356 = vmatpush1.msra.mxu0 %v3355
        %v3357 = vand.u32 %v236, 4294901760
        %3358 = vmatprep.subr.mxu0 %v3357
        %v3359 = vand.u32 %v235, 4294901760
        %3360 = vmatpush1.msra.mxu0 %v3359
        %v3361 = vand.u32 %v234, 4294901760
        %3362 = vmatprep.subr.mxu0 %v3361
        %v3363 = vand.u32 %v233, 4294901760
        %3364 = vmatpush1.msra.mxu0 %v3363
        %v3365 = vand.u32 %v232, 4294901760
        %3366 = vmatprep.subr.mxu0 %v3365
        %v3367 = vand.u32 %v231, 4294901760
        %3368 = vmatpush1.msra.mxu0 %v3367
        %v3369 = vand.u32 %v230, 4294901760
        %3370 = vmatprep.subr.mxu0 %v3369
        %v3371 = vand.u32 %v229, 4294901760
        %3372 = vmatpush1.msra.mxu0 %v3371
        %v3373 = vand.u32 %v228, 4294901760
        %3374 = vmatprep.subr.mxu0 %v3373
        %v3375 = vand.u32 %v227, 4294901760
        %3376 = vmatpush1.msra.mxu0 %v3375
        %v3377 = vand.u32 %v226, 4294901760
        %3378 = vmatprep.subr.mxu0 %v3377
        %v3379 = vand.u32 %v225, 4294901760
        %3380 = vmatpush1.msra.mxu0 %v3379
        %v3381 = vand.u32 %v224, 4294901760
        %3382 = vmatprep.subr.mxu0 %v3381
        %v3383 = vand.u32 %v223, 4294901760
        %3384 = vmatpush1.msra.mxu0 %v3383
        %v3385 = vand.u32 %v222, 4294901760
        %3386 = vmatprep.subr.mxu0 %v3385
        %v3387 = vand.u32 %v221, 4294901760
        %3388 = vmatpush1.msra.mxu0 %v3387
        %v3389 = vand.u32 %v220, 4294901760
        %3390 = vmatprep.subr.mxu0 %v3389
        %v3391 = vand.u32 %v219, 4294901760
        %3392 = vmatpush1.msra.mxu0 %v3391
        %v3393 = vand.u32 %v218, 4294901760
        %3394 = vmatprep.subr.mxu0 %v3393
        %v3395 = vand.u32 %v217, 4294901760
        %3396 = vmatpush1.msra.mxu0 %v3395
        %v3397 = vand.u32 %v216, 4294901760
        %3398 = vmatprep.subr.mxu0 %v3397
        %v3399 = vand.u32 %v215, 4294901760
        %3400 = vmatpush1.msra.mxu0 %v3399
        %v3401 = vand.u32 %v214, 4294901760
        %3402 = vmatprep.subr.mxu0 %v3401
        %v3403 = vand.u32 %v213, 4294901760
        %3404 = vmatpush1.msra.mxu0 %v3403
        %3405 = vmatprep.subr.mxu0 0.0
        %3406 = vmatpush2.msra.mxu0 0.0
        %3407 = vmatprep.subr.mxu0 0.0
        %3408 = vmatpush2.msra.mxu0 0.0
        %3409 = vmatprep.subr.mxu0 0.0
        %3410 = vmatpush2.msra.mxu0 0.0
        %3411 = vmatprep.subr.mxu0 0.0
        %3412 = vmatpush2.msra.mxu0 0.0
        %3413 = vmatprep.subr.mxu0 0.0
        %3414 = vmatpush2.msra.mxu0 0.0
        %3415 = vmatprep.subr.mxu0 0.0
        %3416 = vmatpush2.msra.mxu0 0.0
        %3417 = vmatprep.subr.mxu0 0.0
        %3418 = vmatpush2.msra.mxu0 0.0
        %3419 = vmatprep.subr.mxu0 0.0
        %3420 = vmatpush2.msra.mxu0 0.0
        %3421 = vmatprep.subr.mxu0 0.0
        %3422 = vmatpush2.msra.mxu0 0.0
        %3423 = vmatprep.subr.mxu0 0.0
        %3424 = vmatpush2.msra.mxu0 0.0
        %3425 = vmatprep.subr.mxu0 0.0
        %3426 = vmatpush2.msra.mxu0 0.0
        %3427 = vmatprep.subr.mxu0 0.0
        %3428 = vmatpush2.msra.mxu0 0.0
        %3429 = vmatprep.subr.mxu0 0.0
        %3430 = vmatpush2.msra.mxu0 0.0
        %3431 = vmatprep.subr.mxu0 0.0
        %3432 = vmatpush2.msra.mxu0 0.0
        %3433 = vmatprep.subr.mxu0 0.0
        %3434 = vmatpush2.msra.mxu0 0.0
        %3435 = vmatprep.subr.mxu0 0.0
        %3436 = vmatpush2.msra.mxu0 0.0
        %3437 = vmatprep.mubr.f32.mxu0 0.0
        %v3438 = vand.u32 %v2863, 4294901760
        %v3439 = vsub.f32 %v2863, %v3438
        %v3440 = vand.u32 %v3439, 4294901760
        %3441 = vmatmul.mubr.f32.gmra.mxu0 %v3440
        %v3442 = vpop.f32.mrf.mxu0
        %v3443 = vadd.f32 %v3337, %v3442
        %v3444 = vpop.f32.mrf.mxu0
        %v3445 = vadd.f32 %v3339, %v3444
        %3446 = vdwg.mxu0
        %v3447 = vand.u32 %v244, 4294901760
        %v3448 = vsub.f32 %v244, %v3447
        %v3449 = vand.u32 %v3448, 4294901760
        %3450 = vmatprep.subr.mxu0 %v3449
        %v3451 = vand.u32 %v243, 4294901760
        %v3452 = vsub.f32 %v243, %v3451
        %v3453 = vand.u32 %v3452, 4294901760
        %3454 = vmatpush1.msra.mxu0 %v3453
        %v3455 = vand.u32 %v242, 4294901760
        %v3456 = vsub.f32 %v242, %v3455
        %v3457 = vand.u32 %v3456, 4294901760
        %3458 = vmatprep.subr.mxu0 %v3457
        %v3459 = vand.u32 %v241, 4294901760
        %v3460 = vsub.f32 %v241, %v3459
        %v3461 = vand.u32 %v3460, 4294901760
        %3462 = vmatpush1.msra.mxu0 %v3461
        %v3463 = vand.u32 %v240, 4294901760
        %v3464 = vsub.f32 %v240, %v3463
        %v3465 = vand.u32 %v3464, 4294901760
        %3466 = vmatprep.subr.mxu0 %v3465
        %v3467 = vand.u32 %v239, 4294901760
        %v3468 = vsub.f32 %v239, %v3467
        %v3469 = vand.u32 %v3468, 4294901760
        %3470 = vmatpush1.msra.mxu0 %v3469
        %v3471 = vand.u32 %v238, 4294901760
        %v3472 = vsub.f32 %v238, %v3471
        %v3473 = vand.u32 %v3472, 4294901760
        %3474 = vmatprep.subr.mxu0 %v3473
        %v3475 = vand.u32 %v237, 4294901760
        %v3476 = vsub.f32 %v237, %v3475
        %v3477 = vand.u32 %v3476, 4294901760
        %3478 = vmatpush1.msra.mxu0 %v3477
        %v3479 = vand.u32 %v236, 4294901760
        %v3480 = vsub.f32 %v236, %v3479
        %v3481 = vand.u32 %v3480, 4294901760
        %3482 = vmatprep.subr.mxu0 %v3481
        %v3483 = vand.u32 %v235, 4294901760
        %v3484 = vsub.f32 %v235, %v3483
        %v3485 = vand.u32 %v3484, 4294901760
        %3486 = vmatpush1.msra.mxu0 %v3485
        %v3487 = vand.u32 %v234, 4294901760
        %v3488 = vsub.f32 %v234, %v3487
        %v3489 = vand.u32 %v3488, 4294901760
        %3490 = vmatprep.subr.mxu0 %v3489
        %v3491 = vand.u32 %v233, 4294901760
        %v3492 = vsub.f32 %v233, %v3491
        %v3493 = vand.u32 %v3492, 4294901760
        %3494 = vmatpush1.msra.mxu0 %v3493
        %v3495 = vand.u32 %v232, 4294901760
        %v3496 = vsub.f32 %v232, %v3495
        %v3497 = vand.u32 %v3496, 4294901760
        %3498 = vmatprep.subr.mxu0 %v3497
        %v3499 = vand.u32 %v231, 4294901760
        %v3500 = vsub.f32 %v231, %v3499
        %v3501 = vand.u32 %v3500, 4294901760
        %3502 = vmatpush1.msra.mxu0 %v3501
        %v3503 = vand.u32 %v230, 4294901760
        %v3504 = vsub.f32 %v230, %v3503
        %v3505 = vand.u32 %v3504, 4294901760
        %3506 = vmatprep.subr.mxu0 %v3505
        %v3507 = vand.u32 %v229, 4294901760
        %v3508 = vsub.f32 %v229, %v3507
        %v3509 = vand.u32 %v3508, 4294901760
        %3510 = vmatpush1.msra.mxu0 %v3509
        %v3511 = vand.u32 %v228, 4294901760
        %v3512 = vsub.f32 %v228, %v3511
        %v3513 = vand.u32 %v3512, 4294901760
        %3514 = vmatprep.subr.mxu0 %v3513
        %v3515 = vand.u32 %v227, 4294901760
        %v3516 = vsub.f32 %v227, %v3515
        %v3517 = vand.u32 %v3516, 4294901760
        %3518 = vmatpush1.msra.mxu0 %v3517
        %v3519 = vand.u32 %v226, 4294901760
        %v3520 = vsub.f32 %v226, %v3519
        %v3521 = vand.u32 %v3520, 4294901760
        %3522 = vmatprep.subr.mxu0 %v3521
        %v3523 = vand.u32 %v225, 4294901760
        %v3524 = vsub.f32 %v225, %v3523
        %v3525 = vand.u32 %v3524, 4294901760
        %3526 = vmatpush1.msra.mxu0 %v3525
        %v3527 = vand.u32 %v224, 4294901760
        %v3528 = vsub.f32 %v224, %v3527
        %v3529 = vand.u32 %v3528, 4294901760
        %3530 = vmatprep.subr.mxu0 %v3529
        %v3531 = vand.u32 %v223, 4294901760
        %v3532 = vsub.f32 %v223, %v3531
        %v3533 = vand.u32 %v3532, 4294901760
        %3534 = vmatpush1.msra.mxu0 %v3533
        %v3535 = vand.u32 %v222, 4294901760
        %v3536 = vsub.f32 %v222, %v3535
        %v3537 = vand.u32 %v3536, 4294901760
        %3538 = vmatprep.subr.mxu0 %v3537
        %v3539 = vand.u32 %v221, 4294901760
        %v3540 = vsub.f32 %v221, %v3539
        %v3541 = vand.u32 %v3540, 4294901760
        %3542 = vmatpush1.msra.mxu0 %v3541
        %v3543 = vand.u32 %v220, 4294901760
        %v3544 = vsub.f32 %v220, %v3543
        %v3545 = vand.u32 %v3544, 4294901760
        %3546 = vmatprep.subr.mxu0 %v3545
        %v3547 = vand.u32 %v219, 4294901760
        %v3548 = vsub.f32 %v219, %v3547
        %v3549 = vand.u32 %v3548, 4294901760
        %3550 = vmatpush1.msra.mxu0 %v3549
        %v3551 = vand.u32 %v218, 4294901760
        %v3552 = vsub.f32 %v218, %v3551
        %v3553 = vand.u32 %v3552, 4294901760
        %3554 = vmatprep.subr.mxu0 %v3553
        %v3555 = vand.u32 %v217, 4294901760
        %v3556 = vsub.f32 %v217, %v3555
        %v3557 = vand.u32 %v3556, 4294901760
        %3558 = vmatpush1.msra.mxu0 %v3557
        %v3559 = vand.u32 %v216, 4294901760
        %v3560 = vsub.f32 %v216, %v3559
        %v3561 = vand.u32 %v3560, 4294901760
        %3562 = vmatprep.subr.mxu0 %v3561
        %v3563 = vand.u32 %v215, 4294901760
        %v3564 = vsub.f32 %v215, %v3563
        %v3565 = vand.u32 %v3564, 4294901760
        %3566 = vmatpush1.msra.mxu0 %v3565
        %v3567 = vand.u32 %v214, 4294901760
        %v3568 = vsub.f32 %v214, %v3567
        %v3569 = vand.u32 %v3568, 4294901760
        %3570 = vmatprep.subr.mxu0 %v3569
        %v3571 = vand.u32 %v213, 4294901760
        %v3572 = vsub.f32 %v213, %v3571
        %v3573 = vand.u32 %v3572, 4294901760
        %3574 = vmatpush1.msra.mxu0 %v3573
        %3575 = vmatprep.subr.mxu0 0.0
        %3576 = vmatpush2.msra.mxu0 0.0
        %3577 = vmatprep.subr.mxu0 0.0
        %3578 = vmatpush2.msra.mxu0 0.0
        %3579 = vmatprep.subr.mxu0 0.0
        %3580 = vmatpush2.msra.mxu0 0.0
        %3581 = vmatprep.subr.mxu0 0.0
        %3582 = vmatpush2.msra.mxu0 0.0
        %3583 = vmatprep.subr.mxu0 0.0
        %3584 = vmatpush2.msra.mxu0 0.0
        %3585 = vmatprep.subr.mxu0 0.0
        %3586 = vmatpush2.msra.mxu0 0.0
        %3587 = vmatprep.subr.mxu0 0.0
        %3588 = vmatpush2.msra.mxu0 0.0
        %3589 = vmatprep.subr.mxu0 0.0
        %3590 = vmatpush2.msra.mxu0 0.0
        %3591 = vmatprep.subr.mxu0 0.0
        %3592 = vmatpush2.msra.mxu0 0.0
        %3593 = vmatprep.subr.mxu0 0.0
        %3594 = vmatpush2.msra.mxu0 0.0
        %3595 = vmatprep.subr.mxu0 0.0
        %3596 = vmatpush2.msra.mxu0 0.0
        %3597 = vmatprep.subr.mxu0 0.0
        %3598 = vmatpush2.msra.mxu0 0.0
        %3599 = vmatprep.subr.mxu0 0.0
        %3600 = vmatpush2.msra.mxu0 0.0
        %3601 = vmatprep.subr.mxu0 0.0
        %3602 = vmatpush2.msra.mxu0 0.0
        %3603 = vmatprep.subr.mxu0 0.0
        %3604 = vmatpush2.msra.mxu0 0.0
        %3605 = vmatprep.subr.mxu0 0.0
        %3606 = vmatpush2.msra.mxu0 0.0
        %3607 = vmatprep.mubr.f32.mxu0 0.0
        %v3608 = vand.u32 %v2863, 4294901760
        %3609 = vmatmul.mubr.f32.gmra.mxu0 %v3608
        %v3610 = vpop.f32.mrf.mxu0
        %v3611 = vadd.f32 %v3443, %v3610
        %v3612 = vpop.f32.mrf.mxu0
        %v3613 = vadd.f32 %v3445, %v3612
        %3614 = vdwg.mxu0
        %v3615 = vand.u32 %v244, 4294901760
        %3616 = vmatprep.subr.mxu0 %v3615
        %v3617 = vand.u32 %v243, 4294901760
        %3618 = vmatpush1.msra.mxu0 %v3617
        %v3619 = vand.u32 %v242, 4294901760
        %3620 = vmatprep.subr.mxu0 %v3619
        %v3621 = vand.u32 %v241, 4294901760
        %3622 = vmatpush1.msra.mxu0 %v3621
        %v3623 = vand.u32 %v240, 4294901760
        %3624 = vmatprep.subr.mxu0 %v3623
        %v3625 = vand.u32 %v239, 4294901760
        %3626 = vmatpush1.msra.mxu0 %v3625
        %v3627 = vand.u32 %v238, 4294901760
        %3628 = vmatprep.subr.mxu0 %v3627
        %v3629 = vand.u32 %v237, 4294901760
        %3630 = vmatpush1.msra.mxu0 %v3629
        %v3631 = vand.u32 %v236, 4294901760
        %3632 = vmatprep.subr.mxu0 %v3631
        %v3633 = vand.u32 %v235, 4294901760
        %3634 = vmatpush1.msra.mxu0 %v3633
        %v3635 = vand.u32 %v234, 4294901760
        %3636 = vmatprep.subr.mxu0 %v3635
        %v3637 = vand.u32 %v233, 4294901760
        %3638 = vmatpush1.msra.mxu0 %v3637
        %v3639 = vand.u32 %v232, 4294901760
        %3640 = vmatprep.subr.mxu0 %v3639
        %v3641 = vand.u32 %v231, 4294901760
        %3642 = vmatpush1.msra.mxu0 %v3641
        %v3643 = vand.u32 %v230, 4294901760
        %3644 = vmatprep.subr.mxu0 %v3643
        %v3645 = vand.u32 %v229, 4294901760
        %3646 = vmatpush1.msra.mxu0 %v3645
        %v3647 = vand.u32 %v228, 4294901760
        %3648 = vmatprep.subr.mxu0 %v3647
        %v3649 = vand.u32 %v227, 4294901760
        %3650 = vmatpush1.msra.mxu0 %v3649
        %v3651 = vand.u32 %v226, 4294901760
        %3652 = vmatprep.subr.mxu0 %v3651
        %v3653 = vand.u32 %v225, 4294901760
        %3654 = vmatpush1.msra.mxu0 %v3653
        %v3655 = vand.u32 %v224, 4294901760
        %3656 = vmatprep.subr.mxu0 %v3655
        %v3657 = vand.u32 %v223, 4294901760
        %3658 = vmatpush1.msra.mxu0 %v3657
        %v3659 = vand.u32 %v222, 4294901760
        %3660 = vmatprep.subr.mxu0 %v3659
        %v3661 = vand.u32 %v221, 4294901760
        %3662 = vmatpush1.msra.mxu0 %v3661
        %v3663 = vand.u32 %v220, 4294901760
        %3664 = vmatprep.subr.mxu0 %v3663
        %v3665 = vand.u32 %v219, 4294901760
        %3666 = vmatpush1.msra.mxu0 %v3665
        %v3667 = vand.u32 %v218, 4294901760
        %3668 = vmatprep.subr.mxu0 %v3667
        %v3669 = vand.u32 %v217, 4294901760
        %3670 = vmatpush1.msra.mxu0 %v3669
        %v3671 = vand.u32 %v216, 4294901760
        %3672 = vmatprep.subr.mxu0 %v3671
        %v3673 = vand.u32 %v215, 4294901760
        %3674 = vmatpush1.msra.mxu0 %v3673
        %v3675 = vand.u32 %v214, 4294901760
        %3676 = vmatprep.subr.mxu0 %v3675
        %v3677 = vand.u32 %v213, 4294901760
        %3678 = vmatpush1.msra.mxu0 %v3677
        %3679 = vmatprep.subr.mxu0 0.0
        %3680 = vmatpush2.msra.mxu0 0.0
        %3681 = vmatprep.subr.mxu0 0.0
        %3682 = vmatpush2.msra.mxu0 0.0
        %3683 = vmatprep.subr.mxu0 0.0
        %3684 = vmatpush2.msra.mxu0 0.0
        %3685 = vmatprep.subr.mxu0 0.0
        %3686 = vmatpush2.msra.mxu0 0.0
        %3687 = vmatprep.subr.mxu0 0.0
        %3688 = vmatpush2.msra.mxu0 0.0
        %3689 = vmatprep.subr.mxu0 0.0
        %3690 = vmatpush2.msra.mxu0 0.0
        %3691 = vmatprep.subr.mxu0 0.0
        %3692 = vmatpush2.msra.mxu0 0.0
        %3693 = vmatprep.subr.mxu0 0.0
        %3694 = vmatpush2.msra.mxu0 0.0
        %3695 = vmatprep.subr.mxu0 0.0
        %3696 = vmatpush2.msra.mxu0 0.0
        %3697 = vmatprep.subr.mxu0 0.0
        %3698 = vmatpush2.msra.mxu0 0.0
        %3699 = vmatprep.subr.mxu0 0.0
        %3700 = vmatpush2.msra.mxu0 0.0
        %3701 = vmatprep.subr.mxu0 0.0
        %3702 = vmatpush2.msra.mxu0 0.0
        %3703 = vmatprep.subr.mxu0 0.0
        %3704 = vmatpush2.msra.mxu0 0.0
        %3705 = vmatprep.subr.mxu0 0.0
        %3706 = vmatpush2.msra.mxu0 0.0
        %3707 = vmatprep.subr.mxu0 0.0
        %3708 = vmatpush2.msra.mxu0 0.0
        %3709 = vmatprep.subr.mxu0 0.0
        %3710 = vmatpush2.msra.mxu0 0.0
        %3711 = vmatprep.mubr.f32.mxu0 0.0
        %v3712 = vand.u32 %v2863, 4294901760
        %3713 = vmatmul.mubr.f32.gmra.mxu0 %v3712
        %v3714 = vpop.f32.mrf.mxu0
        %v3715 = vadd.f32 %v3611, %v3714
        %v3716 = vpop.f32.mrf.mxu0
        %v3717 = vadd.f32 %v3613, %v3716
        %3718 = vdwg.mxu0
        %3719 = vst [vmem:[%s205] sm:$0xff] %v2856
        %3720 = vst [vmem:[%s212] sm:$0xff] %v3715
        %3721 = vst [vmem:[%s212 + $0x8] sm:$0xff] %v3717
        %s3722 = sand.u32 %s80, 1
        %s3723 = scalar_lea.sflag [#allocation4], %s3722
        %s3724 = sand.u32 %s80, 1
        %s3725 = smul.addr %s3724, 8
        %s3726 = scalar_lea.vmem [#allocation7], %s3725
        %s3727 = sand.u32 %s106, 1
        %s3728 = scalar_lea.sflag [#allocation9], %s3727
        %s3729 = sand.u32 %s106, 1
        %s3730 = smul.addr %s3729, 16
        %s3731 = scalar_lea.vmem [#allocation8], %s3730
        // Predicated region
        $region37: #{fcm_init_forward.1} parent=27 // pred_check
          %p3732 = pneg %p90
        $region38: #{fcm_init_forward.1} parent=27 // pred_check_branch
          %3734 = sbr.rel (%p3732) target = $region40
        $region39: #{fcm_init_forward.1} parent=27 // pred_region
          %s3736 = ssub.s32 128, 128
          %3737 = vsyncadd %s3723, %s3736
          %s3738 = smul.addr %s25, 128
          %s3739 = scalar_lea.hbm %s2, %s3738
          %s3741 = sshll.u32 %s3726, 4
          %s3742 = int_to_ptr.vmem [resolvable:$true] %s3741
          %3744 = dma.vmem_to_hbm [thread:$0]  %s3742, 128, %s3739, %s3723
        $region40: #{fcm_init_forward.1} parent=27 // pred_fallthru
          _
        // Predicated region
        $region41: #{fcm_init_forward.1} parent=27 // pred_check
          %p3745 = pneg %p116
        $region42: #{fcm_init_forward.1} parent=27 // pred_check_branch
          %3747 = sbr.rel (%p3745) target = $region44
        $region43: #{fcm_init_forward.1} parent=27 // pred_region
          %s3749 = ssub.s32 256, 256
          %3750 = vsyncadd %s3728, %s3749
          %s3751 = smul.addr %s25, 2
          %s3752 = smul.addr %s3751, 128
          %s3753 = scalar_lea.hbm %s3, %s3752
          %s3755 = sshll.u32 %s3731, 4
          %s3756 = int_to_ptr.vmem [resolvable:$true] %s3755
          %3758 = dma.vmem_to_hbm [thread:$0]  %s3756, 256, %s3753, %s3728
        $region44: #{fcm_init_forward.1} parent=27 // pred_fallthru
          _
      $region28: #{fcm_init_forward.1} parent=5 // pred_fallthru
        _
      %p3759 = scmp.le.s32.totalorder 2, %s20
      // Predicated region
      $region45: #{fcm_init_forward.1} parent=5 // pred_check
        %p3760 = pneg %p3759
      $region46: #{fcm_init_forward.1} parent=5 // pred_check_branch
        %3762 = sbr.rel (%p3760) target = $region48
      $region47: #{fcm_init_forward.1} parent=5 // pred_region
        %s3763 = ssub.s32 %s20, 2
        // Predicated region
        $region49: #{fcm_init_forward.1} parent=47 // pred_check
          %p3764 = pneg %p96
        $region50: #{fcm_init_forward.1} parent=47 // pred_check_branch
          %3766 = sbr.rel (%p3764) target = $region52
        $region51: #{fcm_init_forward.1} parent=47 // pred_region
          %s3767 = sand.u32 %s81, 1
          %s3768 = scalar_lea.sflag [#allocation4], %s3767
          %s3769 = sand.u32 %s81, 1
          %s3770 = smul.addr %s3769, 8
          %s3771 = scalar_lea.vmem [#allocation7], %s3770
          %3772 = dma.done %s3768, 128
        $region52: #{fcm_init_forward.1} parent=47 // pred_fallthru
          _
        // Predicated region
        $region53: #{fcm_init_forward.1} parent=47 // pred_check
          %p3773 = pneg %p122
        $region54: #{fcm_init_forward.1} parent=47 // pred_check_branch
          %3775 = sbr.rel (%p3773) target = $region56
        $region55: #{fcm_init_forward.1} parent=47 // pred_region
          %s3776 = sand.u32 %s107, 1
          %s3777 = scalar_lea.sflag [#allocation9], %s3776
          %s3778 = sand.u32 %s107, 1
          %s3779 = smul.addr %s3778, 16
          %s3780 = scalar_lea.vmem [#allocation8], %s3779
          %3781 = dma.done %s3777, 256
        $region56: #{fcm_init_forward.1} parent=47 // pred_fallthru
          _
      $region48: #{fcm_init_forward.1} parent=5 // pred_fallthru
        _
    $region6: #{fcm_init_forward.1} parent=1 // loop_footer
      %s24 = sadd.s32 1, %s20
    $region7: #{fcm_init_forward.1} parent=1 // loop_footer_branch
      %19 = sbr.rel target = $region3
    $region8: #{fcm_init_forward.1} parent=1 // loop_exit
      _
    %3782 = vsyncpa [#allocation3], 1
    %s3783 = scalar_lea.sflag [#allocation3], 1
    %3784 = vsyncpa %s3783, 1
    %3785 = vsyncpa [#allocation6], 1
    %3786 = vsyncpa [#allocation4], 1
    %s3787 = scalar_lea.sflag [#allocation4], 1
    %3788 = vsyncpa %s3787, 1
    %3789 = vsyncpa [#allocation9], 1
    %s3790 = scalar_lea.sflag [#allocation9], 1
    %3791 = vsyncpa %s3790, 1

</llo_original>
